<compile_context>
chip_gen: v7x
topology: tpu7x:2x2x1
jax: 0.10.0
libtpu: 0.0.40
codegen_flags: <defaults>
</compile_context>

<pallas_src>
import jax
import jax.numpy as jnp
from jax.experimental import pallas as pl
from jax.experimental.pallas import tpu as pltpu


# ----------------------------- Pallas kernel --------------------------------

def make_cell_lstm_kernel(num_layers, hidden_size, seq_len, unroll):
    L, H, T = num_layers, hidden_size, seq_len
    G = 4 * H  # per-layer gate width; columns pre-permuted to [i, f, o, g]

    def _sigmoid(x):
        # One EUP tanh per gate group instead of exp + full-precision divide.
        return 0.5 * jnp.tanh(0.5 * x) + 0.5

    def kernel(x_ref, wih0_ref, wbig_ref, bbig_ref,
               out_ref, hN_ref, cN_ref, xg_buf, out_buf):
        b_blk = x_ref.shape[0]

        # ---- layer-0 input projection for the WHOLE sequence: one matmul ----
        # Build time-major rows with static slices only (no 3-D transpose).
        x_tm = jnp.concatenate([x_ref[:, t, :] for t in range(T)], axis=0)
        xg_buf[...] = jnp.dot(x_tm.astype(jnp.bfloat16), wih0_ref[...],
                              preferred_element_type=jnp.float32)

        # ---- layer wavefront over s = 0 .. T+L-2 ----
        def wstep(s, carry):
            h_cat, c_cat = carry                       # (b_blk, L*H) f32 each
            # One fused block-bidiagonal matmul: every layer's h @ W_hh plus
            # the next layer's h_{l} @ W_ih_{l+1}, in a single MXU push.
            g_all = jnp.dot(h_cat.astype(jnp.bfloat16), wbig_ref[...],
                            preferred_element_type=jnp.float32) + bbig_ref[...]

            # Layer-0 x-gates for timestep t = s (clamped; masked when idle).
            r0 = jnp.minimum(s, T - 1) * b_blk
            if b_blk % 8 == 0:
                r0 = pl.multiple_of(r0, 8)
            xg0 = xg_buf[pl.ds(r0, b_blk), :]

            h_next, c_next = [], []
            for l in range(L):
                g_l = g_all[:, l * G:(l + 1) * G]
                if l == 0:
                    g_l = g_l + xg0
                sg = _sigmoid(g_l[:, :3 * H])          # [i | f | o], f32
                gg = jnp.tanh(g_l[:, 3 * H:])          # g
                h_old = h_cat[:, l * H:(l + 1) * H]
                c_old = c_cat[:, l * H:(l + 1) * H]
                c_new = sg[:, H:2 * H] * c_old + sg[:, :H] * gg
                h_new = sg[:, 2 * H:3 * H] * jnp.tanh(c_new)

                active = jnp.logical_and(s >= l, s < l + T)
                h_next.append(jnp.where(active, h_new, h_old))
                c_next.append(jnp.where(active, c_new, c_old))

                if l == L - 1:
                    @pl.when(active)
                    def _store():
                        r = jnp.maximum(s - (L - 1), 0) * b_blk
                        if b_blk % 8 == 0:
                            r = pl.multiple_of(r, 8)
                        out_buf[pl.ds(r, b_blk), :] = h_new

            h_cat = jnp.concatenate(h_next, axis=1) if L > 1 else h_next[0]
            c_cat = jnp.concatenate(c_next, axis=1) if L > 1 else c_next[0]
            return h_cat, c_cat

        init = (jnp.zeros((b_blk, L * H), jnp.float32),
                jnp.zeros((b_blk, L * H), jnp.float32))
        h_cat, c_cat = jax.lax.fori_loop(0, T + L - 1, wstep, init,
                                         unroll=unroll)

        # Final per-layer states (frozen by the wavefront masking).
        for l in range(L):
            hN_ref[l] = h_cat[:, l * H:(l + 1) * H]
            cN_ref[l] = c_cat[:, l * H:(l + 1) * H]

        # Time-major (T*b_blk, H) scratch -> lane-dense (b_blk, T*H) output.
        # Static slices only; the HBM writeback is one dense slab per tile.
        for t in range(T):
            out_ref[:, t * H:(t + 1) * H] = out_buf[t * b_blk:(t + 1) * b_blk, :]

    return kernel


# ------------------------------- wrapper -------------------------------------

def _vmem_per_batch_row_bytes(T, C, H, L):
    # x block (x2 double buffer) + lane-dense out block (x2) + layer-0 gate
    # scratch + time-major out scratch + carries / final-state blocks, f32.
    return 4 * (2 * T * C + 2 * T * H + T * 4 * H + T * H + 8 * L * H)


def _pick_batch_tile(B, T, C, H, L):
    """Largest multiple-of-8 batch tile fitting a conservative VMEM budget
    (sized for v7x's 64 MiB physical VMEM) while keeping grid >= 2 when B
    allows, so both v7x TensorCores do work."""
    if B <= 8:
        return B
    budget = 24 << 20
    by_vmem = max(8, (budget // _vmem_per_batch_row_bytes(T, C, H, L)) // 8 * 8)
    by_cores = max(8, (B // 2) // 8 * 8)          # keep grid >= 2
    b_cap = ((B + 7) // 8) * 8
    return int(min(256, by_vmem, by_cores, b_cap))


def cell_lstm_forward(x, params, *, unroll=None):
    """x: (B, T, input_size) f32.  params from prepare_params.

    Returns (outputs (B, T, H), (h_n (L, B, H), c_n (L, B, H)))."""
    B, T, C = x.shape
    H = params["hidden_size"]
    L = params["num_layers"]

    b_blk = _pick_batch_tile(B, T, C, H, L)
    grid = (pl.cdiv(B, b_blk),)
    if unroll is None:
        # Full unroll at small tiles; cap at 4 for large tiles so the unrolled
        # body's live ranges stay inside 64 vregs (no spill regime).
        unroll = (T + L - 1) if b_blk <= 32 else 4

    in_specs = [
        pl.BlockSpec((b_blk, T, C), lambda i: (i, 0, 0)),     # x, native layout
        pl.BlockSpec((C, 4 * H), lambda i: (0, 0)),           # W_ih layer 0 (bf16)
        pl.BlockSpec((L * H, L * 4 * H), lambda i: (0, 0)),   # block-bidiag W (bf16)
        pl.BlockSpec((1, L * 4 * H), lambda i: (0, 0)),       # folded biases (f32)
    ]
    out_shape = (
        jax.ShapeDtypeStruct((B, T * H), jnp.float32),   # lane-dense output slab
        jax.ShapeDtypeStruct((L, B, H), jnp.float32),    # final h per layer
        jax.ShapeDtypeStruct((L, B, H), jnp.float32),    # final c per layer
    )
    out_specs = (
        pl.BlockSpec((b_blk, T * H), lambda i: (i, 0)),
        pl.BlockSpec((L, b_blk, H), lambda i: (0, i, 0)),
        pl.BlockSpec((L, b_blk, H), lambda i: (0, i, 0)),
    )
    scratch_shapes = [
        pltpu.VMEM((T * b_blk, 4 * H), jnp.float32),  # layer-0 gates, time-major
        pltpu.VMEM((T * b_blk, H), jnp.float32),      # last-layer outs, time-major
    ]

    cp_kwargs = dict(dimension_semantics=("parallel",))
    if b_blk * _vmem_per_batch_row_bytes(T, C, H, L) > (12 << 20):
        # v5e's default scoped-VMEM limit is only 16 MiB (of 128 physical);
        # 48 MiB stays safely under v7x's 64 MiB physical VMEM.
        cp_kwargs["vmem_limit_bytes"] = 48 << 20

    out_flat, h_n, c_n = pl.pallas_call(
        make_cell_lstm_kernel(L, H, T, unroll),
        grid=grid,
        in_specs=in_specs,
        out_specs=out_specs,
        out_shape=out_shape,
        scratch_shapes=scratch_shapes,
        compiler_params=pltpu.CompilerParams(**cp_kwargs),
    )(x, params["wih0"], params["w_big"], params["b_big"])

    # Pure reshape (no transpose / extra HBM pass): slab row b is
    # [h_{b,0} | h_{b,1} | ... | h_{b,T-1}].
    return out_flat.reshape(B, T, H), (h_n, c_n)


# --------------------------- parameter handling -------------------------------

def make_raw_params(key, input_size, hidden_size, num_layers):
    """PyTorch-layout LSTMCell params: W_ih (4H, Cin), W_hh (4H, H), b_* (4H,)."""
    H = hidden_size
    k = 1.0 / jnp.sqrt(jnp.float32(H))
    layers = []
    keys = iter(jax.random.split(key, 4 * num_layers))
    for i in range(num_layers):
        c_in = input_size if i == 0 else H
        layers.append(dict(
            w_ih=jax.random.uniform(next(keys), (4 * H, c_in), jnp.float32, -k, k),
            w_hh=jax.random.uniform(next(keys), (4 * H, H), jnp.float32, -k, k),
            b_ih=jax.random.uniform(next(keys), (4 * H,), jnp.float32, -k, k),
            b_hh=jax.random.uniform(next(keys), (4 * H,), jnp.float32, -k, k),
        ))
    return layers


def prepare_params(raw_layers):
    """Hoisted, done once: transpose weights, permute gate order from PyTorch
    [i, f, g, o] to kernel order [i, f, o, g], fold biases, build the
    block-bidiagonal wavefront weight, and cast matmul weights to bf16."""
    L = len(raw_layers)
    H = raw_layers[0]["w_hh"].shape[1]
    C0 = raw_layers[0]["w_ih"].shape[1]
    perm = jnp.concatenate([jnp.arange(0, 2 * H),
                            jnp.arange(3 * H, 4 * H),
                            jnp.arange(2 * H, 3 * H)])

    def perm_t(w):  # (4H, in) torch layout -> (in, 4H), columns [i, f, o, g]
        return jnp.transpose(w[perm], (1, 0))

    wih0 = perm_t(raw_layers[0]["w_ih"]).astype(jnp.bfloat16)      # (C0, 4H)

    # Block-bidiagonal recurrent weight: row-block l -> {W_hh_l in col-block l,
    # W_ih_{l+1} in col-block l+1} so one dot covers all layers per step.
    w_big = jnp.zeros((L * H, L * 4 * H), jnp.float32)
    b_big = jnp.zeros((L * 4 * H,), jnp.float32)
    for l, lyr in enumerate(raw_layers):
        w_big = w_big.at[l * H:(l + 1) * H,
                         l * 4 * H:(l + 1) * 4 * H].set(perm_t(lyr["w_hh"]))
        if l + 1 < L:
            w_big = w_big.at[l * H:(l + 1) * H,
                             (l + 1) * 4 * H:(l + 2) * 4 * H].set(
                                 perm_t(raw_layers[l + 1]["w_ih"]))
        b_big = b_big.at[l * 4 * H:(l + 1) * 4 * H].set(
            (lyr["b_ih"] + lyr["b_hh"])[perm])

    return dict(wih0=wih0,
                w_big=w_big.astype(jnp.bfloat16),
                b_big=b_big[None, :],                 # (1, L*4H), f32
                hidden_size=H, num_layers=L, input_size=C0)


# --------------------------- pure-JAX reference -------------------------------

def ref_forward(x, raw_layers):
    """Faithful f32 reference of CellLSTM.forward (per-op highest precision)."""
    B, T, _ = x.shape
    L = len(raw_layers)
    H = raw_layers[0]["w_hh"].shape[1]
    hp = jax.lax.Precision.HIGHEST
    h = [jnp.zeros((B, H), jnp.float32) for _ in range(L)]
    c = [jnp.zeros((B, H), jnp.float32) for _ in range(L)]
    outs = []
    for t in range(T):
        inp = x[:, t, :]
        for i in range(L):
            p = raw_layers[i]
            gates = (jnp.dot(inp, p["w_ih"].T, precision=hp) + p["b_ih"]
                     + jnp.dot(h[i], p["w_hh"].T, precision=hp) + p["b_hh"])
            ig = jax.nn.sigmoid(gates[:, 0:H])
            fg = jax.nn.sigmoid(gates[:, H:2 * H])
            gg = jnp.tanh(gates[:, 2 * H:3 * H])
            og = jax.nn.sigmoid(gates[:, 3 * H:4 * H])
            c[i] = fg * c[i] + ig * gg
            h[i] = og * jnp.tanh(c[i])
            inp = h[i]
        outs.append(h[-1][:, None, :])
    return jnp.concatenate(outs, axis=1), (jnp.stack(h), jnp.stack(c))


# ---------------------------------- main --------------------------------------

if __name__ == "__main__":
    B, T = 2, 16
    input_size, hidden_size, num_layers = 8, 32, 2

    root = jax.random.PRNGKey(0)
    k_x, k_p = jax.random.split(root)
    x = jax.random.normal(k_x, (B, T, input_size), jnp.float32)

    raw = make_raw_params(k_p, input_size, hidden_size, num_layers)
    params = prepare_params(raw)

    out, (h_n, c_n) = cell_lstm_forward(x, params)
    out = jax.block_until_ready(out)

    ref_out, (ref_h, ref_c) = ref_forward(x, raw)

    assert out.shape == (B, T, hidden_size), out.shape
    assert h_n.shape == (num_layers, B, hidden_size), h_n.shape
    assert c_n.shape == (num_layers, B, hidden_size), c_n.shape

    # Kernel runs bf16 MXU operands (per the perf review) against an f32
    # highest-precision reference; tolerance reflects bf16 weight/activation
    # rounding carried through the T-step recurrence, not a logic difference.
    tol = dict(atol=3e-2, rtol=3e-2)
    assert jnp.allclose(out, ref_out, **tol), \
        f"outputs max abs err {jnp.max(jnp.abs(out - ref_out))}"
    assert jnp.allclose(h_n, ref_h, **tol), \
        f"h_n max abs err {jnp.max(jnp.abs(h_n - ref_h))}"
    assert jnp.allclose(c_n, ref_c, **tol), \
        f"c_n max abs err {jnp.max(jnp.abs(c_n - ref_c))}"
    print("KERNEL_OK")
</pallas_src>

<mosaic_0001>
module attributes {stable_mosaic.version = 11 : i64} {
  func.func @kernel(%arg0: i32, %arg1: memref<2x16x8xf32, #tpu.memory_space<vmem>>, %arg2: memref<8x128xbf16, #tpu.memory_space<vmem>>, %arg3: memref<64x256xbf16, #tpu.memory_space<vmem>>, %arg4: memref<1x256xf32, #tpu.memory_space<vmem>>, %arg5: memref<2x512xf32, #tpu.memory_space<vmem>>, %arg6: memref<2x2x32xf32, #tpu.memory_space<vmem>>, %arg7: memref<2x2x32xf32, #tpu.memory_space<vmem>>, %arg8: memref<32x128xf32, #tpu.memory_space<vmem>>, %arg9: memref<32x32xf32, #tpu.memory_space<vmem>>) attributes {dimension_semantics = [#tpu.dimension_semantics<parallel>], iteration_bounds = array<i64: 1>, scalar_prefetch = 0 : i64, scratch_operands = 2 : i64, tpu.core_type = #tpu.core_type<tc>, window_params = [{transform_indices = @transform_0, window_bounds = array<i64: 2, 16, 8>}, {pipeline_mode = #tpu.pipeline_mode<synchronous>, transform_indices = @transform_1, window_bounds = array<i64: 8, 128>}, {pipeline_mode = #tpu.pipeline_mode<synchronous>, transform_indices = @transform_2, window_bounds = array<i64: 64, 256>}, {pipeline_mode = #tpu.pipeline_mode<synchronous>, transform_indices = @transform_3, window_bounds = array<i64: 1, 256>}, {transform_indices = @transform_4, window_bounds = array<i64: 2, 512>}, {transform_indices = @transform_5, window_bounds = array<i64: 2, 2, 32>}, {transform_indices = @transform_6, window_bounds = array<i64: 2, 2, 32>}]} {
    %c0 = arith.constant 0 : index
    %c0_0 = arith.constant 0 : index
    %c0_1 = arith.constant 0 : index
    %0 = vector.load %arg1[%c0, %c0_0, %c0_1] : memref<2x16x8xf32, #tpu.memory_space<vmem>>, vector<2x1x8xf32>
    %1 = vector.shape_cast %0 : vector<2x1x8xf32> to vector<2x8xf32>
    %c0_2 = arith.constant 0 : index
    %c1 = arith.constant 1 : index
    %c0_3 = arith.constant 0 : index
    %2 = vector.load %arg1[%c0_2, %c1, %c0_3] : memref<2x16x8xf32, #tpu.memory_space<vmem>>, vector<2x1x8xf32>
    %3 = vector.shape_cast %2 : vector<2x1x8xf32> to vector<2x8xf32>
    %c0_4 = arith.constant 0 : index
    %c2 = arith.constant 2 : index
    %c0_5 = arith.constant 0 : index
    %4 = vector.load %arg1[%c0_4, %c2, %c0_5] : memref<2x16x8xf32, #tpu.memory_space<vmem>>, vector<2x1x8xf32>
    %5 = vector.shape_cast %4 : vector<2x1x8xf32> to vector<2x8xf32>
    %c0_6 = arith.constant 0 : index
    %c3 = arith.constant 3 : index
    %c0_7 = arith.constant 0 : index
    %6 = vector.load %arg1[%c0_6, %c3, %c0_7] : memref<2x16x8xf32, #tpu.memory_space<vmem>>, vector<2x1x8xf32>
    %7 = vector.shape_cast %6 : vector<2x1x8xf32> to vector<2x8xf32>
    %c0_8 = arith.constant 0 : index
    %c4 = arith.constant 4 : index
    %c0_9 = arith.constant 0 : index
    %8 = vector.load %arg1[%c0_8, %c4, %c0_9] : memref<2x16x8xf32, #tpu.memory_space<vmem>>, vector<2x1x8xf32>
    %9 = vector.shape_cast %8 : vector<2x1x8xf32> to vector<2x8xf32>
    %c0_10 = arith.constant 0 : index
    %c5 = arith.constant 5 : index
    %c0_11 = arith.constant 0 : index
    %10 = vector.load %arg1[%c0_10, %c5, %c0_11] : memref<2x16x8xf32, #tpu.memory_space<vmem>>, vector<2x1x8xf32>
    %11 = vector.shape_cast %10 : vector<2x1x8xf32> to vector<2x8xf32>
    %c0_12 = arith.constant 0 : index
    %c6 = arith.constant 6 : index
    %c0_13 = arith.constant 0 : index
    %12 = vector.load %arg1[%c0_12, %c6, %c0_13] : memref<2x16x8xf32, #tpu.memory_space<vmem>>, vector<2x1x8xf32>
    %13 = vector.shape_cast %12 : vector<2x1x8xf32> to vector<2x8xf32>
    %c0_14 = arith.constant 0 : index
    %c7 = arith.constant 7 : index
    %c0_15 = arith.constant 0 : index
    %14 = vector.load %arg1[%c0_14, %c7, %c0_15] : memref<2x16x8xf32, #tpu.memory_space<vmem>>, vector<2x1x8xf32>
    %15 = vector.shape_cast %14 : vector<2x1x8xf32> to vector<2x8xf32>
    %c0_16 = arith.constant 0 : index
    %c8 = arith.constant 8 : index
    %c0_17 = arith.constant 0 : index
    %16 = vector.load %arg1[%c0_16, %c8, %c0_17] : memref<2x16x8xf32, #tpu.memory_space<vmem>>, vector<2x1x8xf32>
    %17 = vector.shape_cast %16 : vector<2x1x8xf32> to vector<2x8xf32>
    %c0_18 = arith.constant 0 : index
    %c9 = arith.constant 9 : index
    %c0_19 = arith.constant 0 : index
    %18 = vector.load %arg1[%c0_18, %c9, %c0_19] : memref<2x16x8xf32, #tpu.memory_space<vmem>>, vector<2x1x8xf32>
    %19 = vector.shape_cast %18 : vector<2x1x8xf32> to vector<2x8xf32>
    %c0_20 = arith.constant 0 : index
    %c10 = arith.constant 10 : index
    %c0_21 = arith.constant 0 : index
    %20 = vector.load %arg1[%c0_20, %c10, %c0_21] : memref<2x16x8xf32, #tpu.memory_space<vmem>>, vector<2x1x8xf32>
    %21 = vector.shape_cast %20 : vector<2x1x8xf32> to vector<2x8xf32>
    %c0_22 = arith.constant 0 : index
    %c11 = arith.constant 11 : index
    %c0_23 = arith.constant 0 : index
    %22 = vector.load %arg1[%c0_22, %c11, %c0_23] : memref<2x16x8xf32, #tpu.memory_space<vmem>>, vector<2x1x8xf32>
    %23 = vector.shape_cast %22 : vector<2x1x8xf32> to vector<2x8xf32>
    %c0_24 = arith.constant 0 : index
    %c12 = arith.constant 12 : index
    %c0_25 = arith.constant 0 : index
    %24 = vector.load %arg1[%c0_24, %c12, %c0_25] : memref<2x16x8xf32, #tpu.memory_space<vmem>>, vector<2x1x8xf32>
    %25 = vector.shape_cast %24 : vector<2x1x8xf32> to vector<2x8xf32>
    %c0_26 = arith.constant 0 : index
    %c13 = arith.constant 13 : index
    %c0_27 = arith.constant 0 : index
    %26 = vector.load %arg1[%c0_26, %c13, %c0_27] : memref<2x16x8xf32, #tpu.memory_space<vmem>>, vector<2x1x8xf32>
    %27 = vector.shape_cast %26 : vector<2x1x8xf32> to vector<2x8xf32>
    %c0_28 = arith.constant 0 : index
    %c14 = arith.constant 14 : index
    %c0_29 = arith.constant 0 : index
    %28 = vector.load %arg1[%c0_28, %c14, %c0_29] : memref<2x16x8xf32, #tpu.memory_space<vmem>>, vector<2x1x8xf32>
    %29 = vector.shape_cast %28 : vector<2x1x8xf32> to vector<2x8xf32>
    %c0_30 = arith.constant 0 : index
    %c15 = arith.constant 15 : index
    %c0_31 = arith.constant 0 : index
    %30 = vector.load %arg1[%c0_30, %c15, %c0_31] : memref<2x16x8xf32, #tpu.memory_space<vmem>>, vector<2x1x8xf32>
    %31 = vector.shape_cast %30 : vector<2x1x8xf32> to vector<2x8xf32>
    %32 = tpu.concatenate %1, %3, %5, %7, %9, %11, %13, %15, %17, %19, %21, %23, %25, %27, %29, %31 in 0 : vector<2x8xf32>, vector<2x8xf32>, vector<2x8xf32>, vector<2x8xf32>, vector<2x8xf32>, vector<2x8xf32>, vector<2x8xf32>, vector<2x8xf32>, vector<2x8xf32>, vector<2x8xf32>, vector<2x8xf32>, vector<2x8xf32>, vector<2x8xf32>, vector<2x8xf32>, vector<2x8xf32>, vector<2x8xf32> -> vector<32x8xf32>
    %33 = arith.truncf %32 : vector<32x8xf32> to vector<32x8xbf16>
    %c0_32 = arith.constant 0 : index
    %c0_33 = arith.constant 0 : index
    %34 = vector.load %arg2[%c0_32, %c0_33] : memref<8x128xbf16, #tpu.memory_space<vmem>>, vector<8x128xbf16>
    %cst = arith.constant dense<0.000000e+00> : vector<32x128xf32>
    %35 = tpu.matmul %33, %34, %cst {dimension_numbers = #tpu.dot_dimension_numbers<[1], [0], [0], [1], [0, 0, 1, 1], [], []>} : vector<32x8xbf16>, vector<8x128xbf16>, vector<32x128xf32> -> vector<32x128xf32>
    %c0_34 = arith.constant 0 : index
    %c0_35 = arith.constant 0 : index
    %36 = vector.load %arg8[%c0_34, %c0_35] : memref<32x128xf32, #tpu.memory_space<vmem>>, vector<32x128xf32>
    tpu.vector_store %arg8[%c0_34, %c0_35], %35 {strides = array<i32>} : memref<32x128xf32, #tpu.memory_space<vmem>>, vector<32x128xf32>,
    %cst_36 = arith.constant 0.000000e+00 : f32
    %37 = vector.broadcast %cst_36 : f32 to vector<2x64xf32>
    %cst_37 = arith.constant 0.000000e+00 : f32
    %38 = vector.broadcast %cst_37 : f32 to vector<2x64xf32>
    %c0_i32 = arith.constant 0 : i32
    %39 = arith.truncf %37 : vector<2x64xf32> to vector<2x64xbf16>
    %c0_38 = arith.constant 0 : index
    %c0_39 = arith.constant 0 : index
    %40 = vector.load %arg3[%c0_38, %c0_39] : memref<64x256xbf16, #tpu.memory_space<vmem>>, vector<64x256xbf16>
    %cst_40 = arith.constant dense<0.000000e+00> : vector<2x256xf32>
    %41 = tpu.matmul %39, %40, %cst_40 {dimension_numbers = #tpu.dot_dimension_numbers<[1], [0], [0], [1], [0, 0, 1, 1], [], []>} : vector<2x64xbf16>, vector<64x256xbf16>, vector<2x256xf32> -> vector<2x256xf32>
    %c0_41 = arith.constant 0 : index
    %c0_42 = arith.constant 0 : index
    %42 = vector.load %arg4[%c0_41, %c0_42] : memref<1x256xf32, #tpu.memory_space<vmem>>, vector<1x256xf32>
    %43 = vector.broadcast %42 : vector<1x256xf32> to vector<2x256xf32>
    %44 = arith.addf %41, %43 : vector<2x256xf32>
    %c15_i32 = arith.constant 15 : i32
    %45 = arith.minsi %c0_i32, %c15_i32 : i32
    %c2_i32 = arith.constant 2 : i32
    %46 = arith.muli %45, %c2_i32 : i32
    %47 = arith.index_cast %46 : i32 to index
    %c0_43 = arith.constant 0 : index
    %48 = vector.load %arg8[%47, %c0_43] : memref<32x128xf32, #tpu.memory_space<vmem>>, vector<2x128xf32>
    %49 = vector.extract_strided_slice %44 {offsets = [0, 0], sizes = [2, 128], strides = [1, 1]} : vector<2x256xf32> to vector<2x128xf32>
    %50 = arith.addf %49, %48 : vector<2x128xf32>
    %51 = vector.extract_strided_slice %50 {offsets = [0, 0], sizes = [2, 96], strides = [1, 1]} : vector<2x128xf32> to vector<2x96xf32>
    %cst_44 = arith.constant 5.000000e-01 : f32
    %52 = vector.broadcast %cst_44 : f32 to vector<2x96xf32>
    %53 = arith.mulf %52, %51 : vector<2x96xf32>
    %54 = math.tanh %53 : vector<2x96xf32>
    %cst_45 = arith.constant 5.000000e-01 : f32
    %55 = vector.broadcast %cst_45 : f32 to vector<2x96xf32>
    %56 = arith.mulf %55, %54 : vector<2x96xf32>
    %cst_46 = arith.constant 5.000000e-01 : f32
    %57 = vector.broadcast %cst_46 : f32 to vector<2x96xf32>
    %58 = arith.addf %56, %57 : vector<2x96xf32>
    %59 = vector.extract_strided_slice %50 {offsets = [0, 96], sizes = [2, 32], strides = [1, 1]} : vector<2x128xf32> to vector<2x32xf32>
    %60 = math.tanh %59 : vector<2x32xf32>
    %61 = vector.extract_strided_slice %37 {offsets = [0, 0], sizes = [2, 32], strides = [1, 1]} : vector<2x64xf32> to vector<2x32xf32>
    %62 = vector.extract_strided_slice %38 {offsets = [0, 0], sizes = [2, 32], strides = [1, 1]} : vector<2x64xf32> to vector<2x32xf32>
    %63 = vector.extract_strided_slice %58 {offsets = [0, 32], sizes = [2, 32], strides = [1, 1]} : vector<2x96xf32> to vector<2x32xf32>
    %64 = arith.mulf %63, %62 : vector<2x32xf32>
    %65 = vector.extract_strided_slice %58 {offsets = [0, 0], sizes = [2, 32], strides = [1, 1]} : vector<2x96xf32> to vector<2x32xf32>
    %66 = arith.mulf %65, %60 : vector<2x32xf32>
    %67 = arith.addf %64, %66 : vector<2x32xf32>
    %68 = vector.extract_strided_slice %58 {offsets = [0, 64], sizes = [2, 32], strides = [1, 1]} : vector<2x96xf32> to vector<2x32xf32>
    %69 = math.tanh %67 : vector<2x32xf32>
    %70 = arith.mulf %68, %69 : vector<2x32xf32>
    %c0_i32_47 = arith.constant 0 : i32
    %71 = arith.cmpi sge, %c0_i32, %c0_i32_47 : i32
    %c16_i32 = arith.constant 16 : i32
    %72 = arith.cmpi slt, %c0_i32, %c16_i32 : i32
    %73 = arith.andi %71, %72 : i1
    %74 = arith.select %73, %70, %61 : vector<2x32xf32>
    %75 = arith.select %73, %67, %62 : vector<2x32xf32>
    %76 = vector.extract_strided_slice %44 {offsets = [0, 128], sizes = [2, 128], strides = [1, 1]} : vector<2x256xf32> to vector<2x128xf32>
    %77 = vector.extract_strided_slice %76 {offsets = [0, 0], sizes = [2, 96], strides = [1, 1]} : vector<2x128xf32> to vector<2x96xf32>
    %cst_48 = arith.constant 5.000000e-01 : f32
    %78 = vector.broadcast %cst_48 : f32 to vector<2x96xf32>
    %79 = arith.mulf %78, %77 : vector<2x96xf32>
    %80 = math.tanh %79 : vector<2x96xf32>
    %cst_49 = arith.constant 5.000000e-01 : f32
    %81 = vector.broadcast %cst_49 : f32 to vector<2x96xf32>
    %82 = arith.mulf %81, %80 : vector<2x96xf32>
    %cst_50 = arith.constant 5.000000e-01 : f32
    %83 = vector.broadcast %cst_50 : f32 to vector<2x96xf32>
    %84 = arith.addf %82, %83 : vector<2x96xf32>
    %85 = vector.extract_strided_slice %76 {offsets = [0, 96], sizes = [2, 32], strides = [1, 1]} : vector<2x128xf32> to vector<2x32xf32>
    %86 = math.tanh %85 : vector<2x32xf32>
    %87 = vector.extract_strided_slice %37 {offsets = [0, 32], sizes = [2, 32], strides = [1, 1]} : vector<2x64xf32> to vector<2x32xf32>
    %88 = vector.extract_strided_slice %38 {offsets = [0, 32], sizes = [2, 32], strides = [1, 1]} : vector<2x64xf32> to vector<2x32xf32>
    %89 = vector.extract_strided_slice %84 {offsets = [0, 32], sizes = [2, 32], strides = [1, 1]} : vector<2x96xf32> to vector<2x32xf32>
    %90 = arith.mulf %89, %88 : vector<2x32xf32>
    %91 = vector.extract_strided_slice %84 {offsets = [0, 0], sizes = [2, 32], strides = [1, 1]} : vector<2x96xf32> to vector<2x32xf32>
    %92 = arith.mulf %91, %86 : vector<2x32xf32>
    %93 = arith.addf %90, %92 : vector<2x32xf32>
    %94 = vector.extract_strided_slice %84 {offsets = [0, 64], sizes = [2, 32], strides = [1, 1]} : vector<2x96xf32> to vector<2x32xf32>
    %95 = math.tanh %93 : vector<2x32xf32>
    %96 = arith.mulf %94, %95 : vector<2x32xf32>
    %c1_i32 = arith.constant 1 : i32
    %97 = arith.cmpi sge, %c0_i32, %c1_i32 : i32
    %c17_i32 = arith.constant 17 : i32
    %98 = arith.cmpi slt, %c0_i32, %c17_i32 : i32
    %99 = arith.andi %97, %98 : i1
    %100 = arith.select %99, %96, %87 : vector<2x32xf32>
    %101 = arith.select %99, %93, %88 : vector<2x32xf32>
    %102 = arith.extui %99 : i1 to i32
    %c0_i32_51 = arith.constant 0 : i32
    %103 = arith.cmpi ne, %102, %c0_i32_51 : i32
    scf.if %103 {
      %c1_i32_414 = arith.constant 1 : i32
      %1226 = arith.subi %c0_i32, %c1_i32_414 : i32
      %c0_i32_415 = arith.constant 0 : i32
      %1227 = arith.maxsi %1226, %c0_i32_415 : i32
      %c2_i32_416 = arith.constant 2 : i32
      %1228 = arith.muli %1227, %c2_i32_416 : i32
      %1229 = arith.index_cast %1228 : i32 to index
      %c0_417 = arith.constant 0 : index
      %1230 = vector.load %arg9[%1229, %c0_417] : memref<32x32xf32, #tpu.memory_space<vmem>>, vector<2x32xf32>
      tpu.vector_store %arg9[%1229, %c0_417], %96 {strides = array<i32>} : memref<32x32xf32, #tpu.memory_space<vmem>>, vector<2x32xf32>,
    } else {
    }
    %104 = tpu.concatenate %74, %100 in 1 : vector<2x32xf32>, vector<2x32xf32> -> vector<2x64xf32>
    %105 = tpu.concatenate %75, %101 in 1 : vector<2x32xf32>, vector<2x32xf32> -> vector<2x64xf32>
    %c1_i32_52 = arith.constant 1 : i32
    %106 = arith.truncf %104 : vector<2x64xf32> to vector<2x64xbf16>
    %c0_53 = arith.constant 0 : index
    %c0_54 = arith.constant 0 : index
    %107 = vector.load %arg3[%c0_53, %c0_54] : memref<64x256xbf16, #tpu.memory_space<vmem>>, vector<64x256xbf16>
    %cst_55 = arith.constant dense<0.000000e+00> : vector<2x256xf32>
    %108 = tpu.matmul %106, %107, %cst_55 {dimension_numbers = #tpu.dot_dimension_numbers<[1], [0], [0], [1], [0, 0, 1, 1], [], []>} : vector<2x64xbf16>, vector<64x256xbf16>, vector<2x256xf32> -> vector<2x256xf32>
    %c0_56 = arith.constant 0 : index
    %c0_57 = arith.constant 0 : index
    %109 = vector.load %arg4[%c0_56, %c0_57] : memref<1x256xf32, #tpu.memory_space<vmem>>, vector<1x256xf32>
    %110 = vector.broadcast %109 : vector<1x256xf32> to vector<2x256xf32>
    %111 = arith.addf %108, %110 : vector<2x256xf32>
    %c15_i32_58 = arith.constant 15 : i32
    %112 = arith.minsi %c1_i32_52, %c15_i32_58 : i32
    %c2_i32_59 = arith.constant 2 : i32
    %113 = arith.muli %112, %c2_i32_59 : i32
    %114 = arith.index_cast %113 : i32 to index
    %c0_60 = arith.constant 0 : index
    %115 = vector.load %arg8[%114, %c0_60] : memref<32x128xf32, #tpu.memory_space<vmem>>, vector<2x128xf32>
    %116 = vector.extract_strided_slice %111 {offsets = [0, 0], sizes = [2, 128], strides = [1, 1]} : vector<2x256xf32> to vector<2x128xf32>
    %117 = arith.addf %116, %115 : vector<2x128xf32>
    %118 = vector.extract_strided_slice %117 {offsets = [0, 0], sizes = [2, 96], strides = [1, 1]} : vector<2x128xf32> to vector<2x96xf32>
    %cst_61 = arith.constant 5.000000e-01 : f32
    %119 = vector.broadcast %cst_61 : f32 to vector<2x96xf32>
    %120 = arith.mulf %119, %118 : vector<2x96xf32>
    %121 = math.tanh %120 : vector<2x96xf32>
    %cst_62 = arith.constant 5.000000e-01 : f32
    %122 = vector.broadcast %cst_62 : f32 to vector<2x96xf32>
    %123 = arith.mulf %122, %121 : vector<2x96xf32>
    %cst_63 = arith.constant 5.000000e-01 : f32
    %124 = vector.broadcast %cst_63 : f32 to vector<2x96xf32>
    %125 = arith.addf %123, %124 : vector<2x96xf32>
    %126 = vector.extract_strided_slice %117 {offsets = [0, 96], sizes = [2, 32], strides = [1, 1]} : vector<2x128xf32> to vector<2x32xf32>
    %127 = math.tanh %126 : vector<2x32xf32>
    %128 = vector.extract_strided_slice %104 {offsets = [0, 0], sizes = [2, 32], strides = [1, 1]} : vector<2x64xf32> to vector<2x32xf32>
    %129 = vector.extract_strided_slice %105 {offsets = [0, 0], sizes = [2, 32], strides = [1, 1]} : vector<2x64xf32> to vector<2x32xf32>
    %130 = vector.extract_strided_slice %125 {offsets = [0, 32], sizes = [2, 32], strides = [1, 1]} : vector<2x96xf32> to vector<2x32xf32>
    %131 = arith.mulf %130, %129 : vector<2x32xf32>
    %132 = vector.extract_strided_slice %125 {offsets = [0, 0], sizes = [2, 32], strides = [1, 1]} : vector<2x96xf32> to vector<2x32xf32>
    %133 = arith.mulf %132, %127 : vector<2x32xf32>
    %134 = arith.addf %131, %133 : vector<2x32xf32>
    %135 = vector.extract_strided_slice %125 {offsets = [0, 64], sizes = [2, 32], strides = [1, 1]} : vector<2x96xf32> to vector<2x32xf32>
    %136 = math.tanh %134 : vector<2x32xf32>
    %137 = arith.mulf %135, %136 : vector<2x32xf32>
    %c0_i32_64 = arith.constant 0 : i32
    %138 = arith.cmpi sge, %c1_i32_52, %c0_i32_64 : i32
    %c16_i32_65 = arith.constant 16 : i32
    %139 = arith.cmpi slt, %c1_i32_52, %c16_i32_65 : i32
    %140 = arith.andi %138, %139 : i1
    %141 = arith.select %140, %137, %128 : vector<2x32xf32>
    %142 = arith.select %140, %134, %129 : vector<2x32xf32>
    %143 = vector.extract_strided_slice %111 {offsets = [0, 128], sizes = [2, 128], strides = [1, 1]} : vector<2x256xf32> to vector<2x128xf32>
    %144 = vector.extract_strided_slice %143 {offsets = [0, 0], sizes = [2, 96], strides = [1, 1]} : vector<2x128xf32> to vector<2x96xf32>
    %cst_66 = arith.constant 5.000000e-01 : f32
    %145 = vector.broadcast %cst_66 : f32 to vector<2x96xf32>
    %146 = arith.mulf %145, %144 : vector<2x96xf32>
    %147 = math.tanh %146 : vector<2x96xf32>
    %cst_67 = arith.constant 5.000000e-01 : f32
    %148 = vector.broadcast %cst_67 : f32 to vector<2x96xf32>
    %149 = arith.mulf %148, %147 : vector<2x96xf32>
    %cst_68 = arith.constant 5.000000e-01 : f32
    %150 = vector.broadcast %cst_68 : f32 to vector<2x96xf32>
    %151 = arith.addf %149, %150 : vector<2x96xf32>
    %152 = vector.extract_strided_slice %143 {offsets = [0, 96], sizes = [2, 32], strides = [1, 1]} : vector<2x128xf32> to vector<2x32xf32>
    %153 = math.tanh %152 : vector<2x32xf32>
    %154 = vector.extract_strided_slice %104 {offsets = [0, 32], sizes = [2, 32], strides = [1, 1]} : vector<2x64xf32> to vector<2x32xf32>
    %155 = vector.extract_strided_slice %105 {offsets = [0, 32], sizes = [2, 32], strides = [1, 1]} : vector<2x64xf32> to vector<2x32xf32>
    %156 = vector.extract_strided_slice %151 {offsets = [0, 32], sizes = [2, 32], strides = [1, 1]} : vector<2x96xf32> to vector<2x32xf32>
    %157 = arith.mulf %156, %155 : vector<2x32xf32>
    %158 = vector.extract_strided_slice %151 {offsets = [0, 0], sizes = [2, 32], strides = [1, 1]} : vector<2x96xf32> to vector<2x32xf32>
    %159 = arith.mulf %158, %153 : vector<2x32xf32>
    %160 = arith.addf %157, %159 : vector<2x32xf32>
    %161 = vector.extract_strided_slice %151 {offsets = [0, 64], sizes = [2, 32], strides = [1, 1]} : vector<2x96xf32> to vector<2x32xf32>
    %162 = math.tanh %160 : vector<2x32xf32>
    %163 = arith.mulf %161, %162 : vector<2x32xf32>
    %c1_i32_69 = arith.constant 1 : i32
    %164 = arith.cmpi sge, %c1_i32_52, %c1_i32_69 : i32
    %c17_i32_70 = arith.constant 17 : i32
    %165 = arith.cmpi slt, %c1_i32_52, %c17_i32_70 : i32
    %166 = arith.andi %164, %165 : i1
    %167 = arith.select %166, %163, %154 : vector<2x32xf32>
    %168 = arith.select %166, %160, %155 : vector<2x32xf32>
    %169 = arith.extui %166 : i1 to i32
    %c0_i32_71 = arith.constant 0 : i32
    %170 = arith.cmpi ne, %169, %c0_i32_71 : i32
    scf.if %170 {
      %c1_i32_414 = arith.constant 1 : i32
      %1226 = arith.subi %c1_i32_52, %c1_i32_414 : i32
      %c0_i32_415 = arith.constant 0 : i32
      %1227 = arith.maxsi %1226, %c0_i32_415 : i32
      %c2_i32_416 = arith.constant 2 : i32
      %1228 = arith.muli %1227, %c2_i32_416 : i32
      %1229 = arith.index_cast %1228 : i32 to index
      %c0_417 = arith.constant 0 : index
      %1230 = vector.load %arg9[%1229, %c0_417] : memref<32x32xf32, #tpu.memory_space<vmem>>, vector<2x32xf32>
      tpu.vector_store %arg9[%1229, %c0_417], %163 {strides = array<i32>} : memref<32x32xf32, #tpu.memory_space<vmem>>, vector<2x32xf32>,
    } else {
    }
    %171 = tpu.concatenate %141, %167 in 1 : vector<2x32xf32>, vector<2x32xf32> -> vector<2x64xf32>
    %172 = tpu.concatenate %142, %168 in 1 : vector<2x32xf32>, vector<2x32xf32> -> vector<2x64xf32>
    %c2_i32_72 = arith.constant 2 : i32
    %173 = arith.truncf %171 : vector<2x64xf32> to vector<2x64xbf16>
    %c0_73 = arith.constant 0 : index
    %c0_74 = arith.constant 0 : index
    %174 = vector.load %arg3[%c0_73, %c0_74] : memref<64x256xbf16, #tpu.memory_space<vmem>>, vector<64x256xbf16>
    %cst_75 = arith.constant dense<0.000000e+00> : vector<2x256xf32>
    %175 = tpu.matmul %173, %174, %cst_75 {dimension_numbers = #tpu.dot_dimension_numbers<[1], [0], [0], [1], [0, 0, 1, 1], [], []>} : vector<2x64xbf16>, vector<64x256xbf16>, vector<2x256xf32> -> vector<2x256xf32>
    %c0_76 = arith.constant 0 : index
    %c0_77 = arith.constant 0 : index
    %176 = vector.load %arg4[%c0_76, %c0_77] : memref<1x256xf32, #tpu.memory_space<vmem>>, vector<1x256xf32>
    %177 = vector.broadcast %176 : vector<1x256xf32> to vector<2x256xf32>
    %178 = arith.addf %175, %177 : vector<2x256xf32>
    %c15_i32_78 = arith.constant 15 : i32
    %179 = arith.minsi %c2_i32_72, %c15_i32_78 : i32
    %c2_i32_79 = arith.constant 2 : i32
    %180 = arith.muli %179, %c2_i32_79 : i32
    %181 = arith.index_cast %180 : i32 to index
    %c0_80 = arith.constant 0 : index
    %182 = vector.load %arg8[%181, %c0_80] : memref<32x128xf32, #tpu.memory_space<vmem>>, vector<2x128xf32>
    %183 = vector.extract_strided_slice %178 {offsets = [0, 0], sizes = [2, 128], strides = [1, 1]} : vector<2x256xf32> to vector<2x128xf32>
    %184 = arith.addf %183, %182 : vector<2x128xf32>
    %185 = vector.extract_strided_slice %184 {offsets = [0, 0], sizes = [2, 96], strides = [1, 1]} : vector<2x128xf32> to vector<2x96xf32>
    %cst_81 = arith.constant 5.000000e-01 : f32
    %186 = vector.broadcast %cst_81 : f32 to vector<2x96xf32>
    %187 = arith.mulf %186, %185 : vector<2x96xf32>
    %188 = math.tanh %187 : vector<2x96xf32>
    %cst_82 = arith.constant 5.000000e-01 : f32
    %189 = vector.broadcast %cst_82 : f32 to vector<2x96xf32>
    %190 = arith.mulf %189, %188 : vector<2x96xf32>
    %cst_83 = arith.constant 5.000000e-01 : f32
    %191 = vector.broadcast %cst_83 : f32 to vector<2x96xf32>
    %192 = arith.addf %190, %191 : vector<2x96xf32>
    %193 = vector.extract_strided_slice %184 {offsets = [0, 96], sizes = [2, 32], strides = [1, 1]} : vector<2x128xf32> to vector<2x32xf32>
    %194 = math.tanh %193 : vector<2x32xf32>
    %195 = vector.extract_strided_slice %171 {offsets = [0, 0], sizes = [2, 32], strides = [1, 1]} : vector<2x64xf32> to vector<2x32xf32>
    %196 = vector.extract_strided_slice %172 {offsets = [0, 0], sizes = [2, 32], strides = [1, 1]} : vector<2x64xf32> to vector<2x32xf32>
    %197 = vector.extract_strided_slice %192 {offsets = [0, 32], sizes = [2, 32], strides = [1, 1]} : vector<2x96xf32> to vector<2x32xf32>
    %198 = arith.mulf %197, %196 : vector<2x32xf32>
    %199 = vector.extract_strided_slice %192 {offsets = [0, 0], sizes = [2, 32], strides = [1, 1]} : vector<2x96xf32> to vector<2x32xf32>
    %200 = arith.mulf %199, %194 : vector<2x32xf32>
    %201 = arith.addf %198, %200 : vector<2x32xf32>
    %202 = vector.extract_strided_slice %192 {offsets = [0, 64], sizes = [2, 32], strides = [1, 1]} : vector<2x96xf32> to vector<2x32xf32>
    %203 = math.tanh %201 : vector<2x32xf32>
    %204 = arith.mulf %202, %203 : vector<2x32xf32>
    %c0_i32_84 = arith.constant 0 : i32
    %205 = arith.cmpi sge, %c2_i32_72, %c0_i32_84 : i32
    %c16_i32_85 = arith.constant 16 : i32
    %206 = arith.cmpi slt, %c2_i32_72, %c16_i32_85 : i32
    %207 = arith.andi %205, %206 : i1
    %208 = arith.select %207, %204, %195 : vector<2x32xf32>
    %209 = arith.select %207, %201, %196 : vector<2x32xf32>
    %210 = vector.extract_strided_slice %178 {offsets = [0, 128], sizes = [2, 128], strides = [1, 1]} : vector<2x256xf32> to vector<2x128xf32>
    %211 = vector.extract_strided_slice %210 {offsets = [0, 0], sizes = [2, 96], strides = [1, 1]} : vector<2x128xf32> to vector<2x96xf32>
    %cst_86 = arith.constant 5.000000e-01 : f32
    %212 = vector.broadcast %cst_86 : f32 to vector<2x96xf32>
    %213 = arith.mulf %212, %211 : vector<2x96xf32>
    %214 = math.tanh %213 : vector<2x96xf32>
    %cst_87 = arith.constant 5.000000e-01 : f32
    %215 = vector.broadcast %cst_87 : f32 to vector<2x96xf32>
    %216 = arith.mulf %215, %214 : vector<2x96xf32>
    %cst_88 = arith.constant 5.000000e-01 : f32
    %217 = vector.broadcast %cst_88 : f32 to vector<2x96xf32>
    %218 = arith.addf %216, %217 : vector<2x96xf32>
    %219 = vector.extract_strided_slice %210 {offsets = [0, 96], sizes = [2, 32], strides = [1, 1]} : vector<2x128xf32> to vector<2x32xf32>
    %220 = math.tanh %219 : vector<2x32xf32>
    %221 = vector.extract_strided_slice %171 {offsets = [0, 32], sizes = [2, 32], strides = [1, 1]} : vector<2x64xf32> to vector<2x32xf32>
    %222 = vector.extract_strided_slice %172 {offsets = [0, 32], sizes = [2, 32], strides = [1, 1]} : vector<2x64xf32> to vector<2x32xf32>
    %223 = vector.extract_strided_slice %218 {offsets = [0, 32], sizes = [2, 32], strides = [1, 1]} : vector<2x96xf32> to vector<2x32xf32>
    %224 = arith.mulf %223, %222 : vector<2x32xf32>
    %225 = vector.extract_strided_slice %218 {offsets = [0, 0], sizes = [2, 32], strides = [1, 1]} : vector<2x96xf32> to vector<2x32xf32>
    %226 = arith.mulf %225, %220 : vector<2x32xf32>
    %227 = arith.addf %224, %226 : vector<2x32xf32>
    %228 = vector.extract_strided_slice %218 {offsets = [0, 64], sizes = [2, 32], strides = [1, 1]} : vector<2x96xf32> to vector<2x32xf32>
    %229 = math.tanh %227 : vector<2x32xf32>
    %230 = arith.mulf %228, %229 : vector<2x32xf32>
    %c1_i32_89 = arith.constant 1 : i32
    %231 = arith.cmpi sge, %c2_i32_72, %c1_i32_89 : i32
    %c17_i32_90 = arith.constant 17 : i32
    %232 = arith.cmpi slt, %c2_i32_72, %c17_i32_90 : i32
    %233 = arith.andi %231, %232 : i1
    %234 = arith.select %233, %230, %221 : vector<2x32xf32>
    %235 = arith.select %233, %227, %222 : vector<2x32xf32>
    %236 = arith.extui %233 : i1 to i32
    %c0_i32_91 = arith.constant 0 : i32
    %237 = arith.cmpi ne, %236, %c0_i32_91 : i32
    scf.if %237 {
      %c1_i32_414 = arith.constant 1 : i32
      %1226 = arith.subi %c2_i32_72, %c1_i32_414 : i32
      %c0_i32_415 = arith.constant 0 : i32
      %1227 = arith.maxsi %1226, %c0_i32_415 : i32
      %c2_i32_416 = arith.constant 2 : i32
      %1228 = arith.muli %1227, %c2_i32_416 : i32
      %1229 = arith.index_cast %1228 : i32 to index
      %c0_417 = arith.constant 0 : index
      %1230 = vector.load %arg9[%1229, %c0_417] : memref<32x32xf32, #tpu.memory_space<vmem>>, vector<2x32xf32>
      tpu.vector_store %arg9[%1229, %c0_417], %230 {strides = array<i32>} : memref<32x32xf32, #tpu.memory_space<vmem>>, vector<2x32xf32>,
    } else {
    }
    %238 = tpu.concatenate %208, %234 in 1 : vector<2x32xf32>, vector<2x32xf32> -> vector<2x64xf32>
    %239 = tpu.concatenate %209, %235 in 1 : vector<2x32xf32>, vector<2x32xf32> -> vector<2x64xf32>
    %c3_i32 = arith.constant 3 : i32
    %240 = arith.truncf %238 : vector<2x64xf32> to vector<2x64xbf16>
    %c0_92 = arith.constant 0 : index
    %c0_93 = arith.constant 0 : index
    %241 = vector.load %arg3[%c0_92, %c0_93] : memref<64x256xbf16, #tpu.memory_space<vmem>>, vector<64x256xbf16>
    %cst_94 = arith.constant dense<0.000000e+00> : vector<2x256xf32>
    %242 = tpu.matmul %240, %241, %cst_94 {dimension_numbers = #tpu.dot_dimension_numbers<[1], [0], [0], [1], [0, 0, 1, 1], [], []>} : vector<2x64xbf16>, vector<64x256xbf16>, vector<2x256xf32> -> vector<2x256xf32>
    %c0_95 = arith.constant 0 : index
    %c0_96 = arith.constant 0 : index
    %243 = vector.load %arg4[%c0_95, %c0_96] : memref<1x256xf32, #tpu.memory_space<vmem>>, vector<1x256xf32>
    %244 = vector.broadcast %243 : vector<1x256xf32> to vector<2x256xf32>
    %245 = arith.addf %242, %244 : vector<2x256xf32>
    %c15_i32_97 = arith.constant 15 : i32
    %246 = arith.minsi %c3_i32, %c15_i32_97 : i32
    %c2_i32_98 = arith.constant 2 : i32
    %247 = arith.muli %246, %c2_i32_98 : i32
    %248 = arith.index_cast %247 : i32 to index
    %c0_99 = arith.constant 0 : index
    %249 = vector.load %arg8[%248, %c0_99] : memref<32x128xf32, #tpu.memory_space<vmem>>, vector<2x128xf32>
    %250 = vector.extract_strided_slice %245 {offsets = [0, 0], sizes = [2, 128], strides = [1, 1]} : vector<2x256xf32> to vector<2x128xf32>
    %251 = arith.addf %250, %249 : vector<2x128xf32>
    %252 = vector.extract_strided_slice %251 {offsets = [0, 0], sizes = [2, 96], strides = [1, 1]} : vector<2x128xf32> to vector<2x96xf32>
    %cst_100 = arith.constant 5.000000e-01 : f32
    %253 = vector.broadcast %cst_100 : f32 to vector<2x96xf32>
    %254 = arith.mulf %253, %252 : vector<2x96xf32>
    %255 = math.tanh %254 : vector<2x96xf32>
    %cst_101 = arith.constant 5.000000e-01 : f32
    %256 = vector.broadcast %cst_101 : f32 to vector<2x96xf32>
    %257 = arith.mulf %256, %255 : vector<2x96xf32>
    %cst_102 = arith.constant 5.000000e-01 : f32
    %258 = vector.broadcast %cst_102 : f32 to vector<2x96xf32>
    %259 = arith.addf %257, %258 : vector<2x96xf32>
    %260 = vector.extract_strided_slice %251 {offsets = [0, 96], sizes = [2, 32], strides = [1, 1]} : vector<2x128xf32> to vector<2x32xf32>
    %261 = math.tanh %260 : vector<2x32xf32>
    %262 = vector.extract_strided_slice %238 {offsets = [0, 0], sizes = [2, 32], strides = [1, 1]} : vector<2x64xf32> to vector<2x32xf32>
    %263 = vector.extract_strided_slice %239 {offsets = [0, 0], sizes = [2, 32], strides = [1, 1]} : vector<2x64xf32> to vector<2x32xf32>
    %264 = vector.extract_strided_slice %259 {offsets = [0, 32], sizes = [2, 32], strides = [1, 1]} : vector<2x96xf32> to vector<2x32xf32>
    %265 = arith.mulf %264, %263 : vector<2x32xf32>
    %266 = vector.extract_strided_slice %259 {offsets = [0, 0], sizes = [2, 32], strides = [1, 1]} : vector<2x96xf32> to vector<2x32xf32>
    %267 = arith.mulf %266, %261 : vector<2x32xf32>
    %268 = arith.addf %265, %267 : vector<2x32xf32>
    %269 = vector.extract_strided_slice %259 {offsets = [0, 64], sizes = [2, 32], strides = [1, 1]} : vector<2x96xf32> to vector<2x32xf32>
    %270 = math.tanh %268 : vector<2x32xf32>
    %271 = arith.mulf %269, %270 : vector<2x32xf32>
    %c0_i32_103 = arith.constant 0 : i32
    %272 = arith.cmpi sge, %c3_i32, %c0_i32_103 : i32
    %c16_i32_104 = arith.constant 16 : i32
    %273 = arith.cmpi slt, %c3_i32, %c16_i32_104 : i32
    %274 = arith.andi %272, %273 : i1
    %275 = arith.select %274, %271, %262 : vector<2x32xf32>
    %276 = arith.select %274, %268, %263 : vector<2x32xf32>
    %277 = vector.extract_strided_slice %245 {offsets = [0, 128], sizes = [2, 128], strides = [1, 1]} : vector<2x256xf32> to vector<2x128xf32>
    %278 = vector.extract_strided_slice %277 {offsets = [0, 0], sizes = [2, 96], strides = [1, 1]} : vector<2x128xf32> to vector<2x96xf32>
    %cst_105 = arith.constant 5.000000e-01 : f32
    %279 = vector.broadcast %cst_105 : f32 to vector<2x96xf32>
    %280 = arith.mulf %279, %278 : vector<2x96xf32>
    %281 = math.tanh %280 : vector<2x96xf32>
    %cst_106 = arith.constant 5.000000e-01 : f32
    %282 = vector.broadcast %cst_106 : f32 to vector<2x96xf32>
    %283 = arith.mulf %282, %281 : vector<2x96xf32>
    %cst_107 = arith.constant 5.000000e-01 : f32
    %284 = vector.broadcast %cst_107 : f32 to vector<2x96xf32>
    %285 = arith.addf %283, %284 : vector<2x96xf32>
    %286 = vector.extract_strided_slice %277 {offsets = [0, 96], sizes = [2, 32], strides = [1, 1]} : vector<2x128xf32> to vector<2x32xf32>
    %287 = math.tanh %286 : vector<2x32xf32>
    %288 = vector.extract_strided_slice %238 {offsets = [0, 32], sizes = [2, 32], strides = [1, 1]} : vector<2x64xf32> to vector<2x32xf32>
    %289 = vector.extract_strided_slice %239 {offsets = [0, 32], sizes = [2, 32], strides = [1, 1]} : vector<2x64xf32> to vector<2x32xf32>
    %290 = vector.extract_strided_slice %285 {offsets = [0, 32], sizes = [2, 32], strides = [1, 1]} : vector<2x96xf32> to vector<2x32xf32>
    %291 = arith.mulf %290, %289 : vector<2x32xf32>
    %292 = vector.extract_strided_slice %285 {offsets = [0, 0], sizes = [2, 32], strides = [1, 1]} : vector<2x96xf32> to vector<2x32xf32>
    %293 = arith.mulf %292, %287 : vector<2x32xf32>
    %294 = arith.addf %291, %293 : vector<2x32xf32>
    %295 = vector.extract_strided_slice %285 {offsets = [0, 64], sizes = [2, 32], strides = [1, 1]} : vector<2x96xf32> to vector<2x32xf32>
    %296 = math.tanh %294 : vector<2x32xf32>
    %297 = arith.mulf %295, %296 : vector<2x32xf32>
    %c1_i32_108 = arith.constant 1 : i32
    %298 = arith.cmpi sge, %c3_i32, %c1_i32_108 : i32
    %c17_i32_109 = arith.constant 17 : i32
    %299 = arith.cmpi slt, %c3_i32, %c17_i32_109 : i32
    %300 = arith.andi %298, %299 : i1
    %301 = arith.select %300, %297, %288 : vector<2x32xf32>
    %302 = arith.select %300, %294, %289 : vector<2x32xf32>
    %303 = arith.extui %300 : i1 to i32
    %c0_i32_110 = arith.constant 0 : i32
    %304 = arith.cmpi ne, %303, %c0_i32_110 : i32
    scf.if %304 {
      %c1_i32_414 = arith.constant 1 : i32
      %1226 = arith.subi %c3_i32, %c1_i32_414 : i32
      %c0_i32_415 = arith.constant 0 : i32
      %1227 = arith.maxsi %1226, %c0_i32_415 : i32
      %c2_i32_416 = arith.constant 2 : i32
      %1228 = arith.muli %1227, %c2_i32_416 : i32
      %1229 = arith.index_cast %1228 : i32 to index
      %c0_417 = arith.constant 0 : index
      %1230 = vector.load %arg9[%1229, %c0_417] : memref<32x32xf32, #tpu.memory_space<vmem>>, vector<2x32xf32>
      tpu.vector_store %arg9[%1229, %c0_417], %297 {strides = array<i32>} : memref<32x32xf32, #tpu.memory_space<vmem>>, vector<2x32xf32>,
    } else {
    }
    %305 = tpu.concatenate %275, %301 in 1 : vector<2x32xf32>, vector<2x32xf32> -> vector<2x64xf32>
    %306 = tpu.concatenate %276, %302 in 1 : vector<2x32xf32>, vector<2x32xf32> -> vector<2x64xf32>
    %c4_i32 = arith.constant 4 : i32
    %307 = arith.truncf %305 : vector<2x64xf32> to vector<2x64xbf16>
    %c0_111 = arith.constant 0 : index
    %c0_112 = arith.constant 0 : index
    %308 = vector.load %arg3[%c0_111, %c0_112] : memref<64x256xbf16, #tpu.memory_space<vmem>>, vector<64x256xbf16>
    %cst_113 = arith.constant dense<0.000000e+00> : vector<2x256xf32>
    %309 = tpu.matmul %307, %308, %cst_113 {dimension_numbers = #tpu.dot_dimension_numbers<[1], [0], [0], [1], [0, 0, 1, 1], [], []>} : vector<2x64xbf16>, vector<64x256xbf16>, vector<2x256xf32> -> vector<2x256xf32>
    %c0_114 = arith.constant 0 : index
    %c0_115 = arith.constant 0 : index
    %310 = vector.load %arg4[%c0_114, %c0_115] : memref<1x256xf32, #tpu.memory_space<vmem>>, vector<1x256xf32>
    %311 = vector.broadcast %310 : vector<1x256xf32> to vector<2x256xf32>
    %312 = arith.addf %309, %311 : vector<2x256xf32>
    %c15_i32_116 = arith.constant 15 : i32
    %313 = arith.minsi %c4_i32, %c15_i32_116 : i32
    %c2_i32_117 = arith.constant 2 : i32
    %314 = arith.muli %313, %c2_i32_117 : i32
    %315 = arith.index_cast %314 : i32 to index
    %c0_118 = arith.constant 0 : index
    %316 = vector.load %arg8[%315, %c0_118] : memref<32x128xf32, #tpu.memory_space<vmem>>, vector<2x128xf32>
    %317 = vector.extract_strided_slice %312 {offsets = [0, 0], sizes = [2, 128], strides = [1, 1]} : vector<2x256xf32> to vector<2x128xf32>
    %318 = arith.addf %317, %316 : vector<2x128xf32>
    %319 = vector.extract_strided_slice %318 {offsets = [0, 0], sizes = [2, 96], strides = [1, 1]} : vector<2x128xf32> to vector<2x96xf32>
    %cst_119 = arith.constant 5.000000e-01 : f32
    %320 = vector.broadcast %cst_119 : f32 to vector<2x96xf32>
    %321 = arith.mulf %320, %319 : vector<2x96xf32>
    %322 = math.tanh %321 : vector<2x96xf32>
    %cst_120 = arith.constant 5.000000e-01 : f32
    %323 = vector.broadcast %cst_120 : f32 to vector<2x96xf32>
    %324 = arith.mulf %323, %322 : vector<2x96xf32>
    %cst_121 = arith.constant 5.000000e-01 : f32
    %325 = vector.broadcast %cst_121 : f32 to vector<2x96xf32>
    %326 = arith.addf %324, %325 : vector<2x96xf32>
    %327 = vector.extract_strided_slice %318 {offsets = [0, 96], sizes = [2, 32], strides = [1, 1]} : vector<2x128xf32> to vector<2x32xf32>
    %328 = math.tanh %327 : vector<2x32xf32>
    %329 = vector.extract_strided_slice %305 {offsets = [0, 0], sizes = [2, 32], strides = [1, 1]} : vector<2x64xf32> to vector<2x32xf32>
    %330 = vector.extract_strided_slice %306 {offsets = [0, 0], sizes = [2, 32], strides = [1, 1]} : vector<2x64xf32> to vector<2x32xf32>
    %331 = vector.extract_strided_slice %326 {offsets = [0, 32], sizes = [2, 32], strides = [1, 1]} : vector<2x96xf32> to vector<2x32xf32>
    %332 = arith.mulf %331, %330 : vector<2x32xf32>
    %333 = vector.extract_strided_slice %326 {offsets = [0, 0], sizes = [2, 32], strides = [1, 1]} : vector<2x96xf32> to vector<2x32xf32>
    %334 = arith.mulf %333, %328 : vector<2x32xf32>
    %335 = arith.addf %332, %334 : vector<2x32xf32>
    %336 = vector.extract_strided_slice %326 {offsets = [0, 64], sizes = [2, 32], strides = [1, 1]} : vector<2x96xf32> to vector<2x32xf32>
    %337 = math.tanh %335 : vector<2x32xf32>
    %338 = arith.mulf %336, %337 : vector<2x32xf32>
    %c0_i32_122 = arith.constant 0 : i32
    %339 = arith.cmpi sge, %c4_i32, %c0_i32_122 : i32
    %c16_i32_123 = arith.constant 16 : i32
    %340 = arith.cmpi slt, %c4_i32, %c16_i32_123 : i32
    %341 = arith.andi %339, %340 : i1
    %342 = arith.select %341, %338, %329 : vector<2x32xf32>
    %343 = arith.select %341, %335, %330 : vector<2x32xf32>
    %344 = vector.extract_strided_slice %312 {offsets = [0, 128], sizes = [2, 128], strides = [1, 1]} : vector<2x256xf32> to vector<2x128xf32>
    %345 = vector.extract_strided_slice %344 {offsets = [0, 0], sizes = [2, 96], strides = [1, 1]} : vector<2x128xf32> to vector<2x96xf32>
    %cst_124 = arith.constant 5.000000e-01 : f32
    %346 = vector.broadcast %cst_124 : f32 to vector<2x96xf32>
    %347 = arith.mulf %346, %345 : vector<2x96xf32>
    %348 = math.tanh %347 : vector<2x96xf32>
    %cst_125 = arith.constant 5.000000e-01 : f32
    %349 = vector.broadcast %cst_125 : f32 to vector<2x96xf32>
    %350 = arith.mulf %349, %348 : vector<2x96xf32>
    %cst_126 = arith.constant 5.000000e-01 : f32
    %351 = vector.broadcast %cst_126 : f32 to vector<2x96xf32>
    %352 = arith.addf %350, %351 : vector<2x96xf32>
    %353 = vector.extract_strided_slice %344 {offsets = [0, 96], sizes = [2, 32], strides = [1, 1]} : vector<2x128xf32> to vector<2x32xf32>
    %354 = math.tanh %353 : vector<2x32xf32>
    %355 = vector.extract_strided_slice %305 {offsets = [0, 32], sizes = [2, 32], strides = [1, 1]} : vector<2x64xf32> to vector<2x32xf32>
    %356 = vector.extract_strided_slice %306 {offsets = [0, 32], sizes = [2, 32], strides = [1, 1]} : vector<2x64xf32> to vector<2x32xf32>
    %357 = vector.extract_strided_slice %352 {offsets = [0, 32], sizes = [2, 32], strides = [1, 1]} : vector<2x96xf32> to vector<2x32xf32>
    %358 = arith.mulf %357, %356 : vector<2x32xf32>
    %359 = vector.extract_strided_slice %352 {offsets = [0, 0], sizes = [2, 32], strides = [1, 1]} : vector<2x96xf32> to vector<2x32xf32>
    %360 = arith.mulf %359, %354 : vector<2x32xf32>
    %361 = arith.addf %358, %360 : vector<2x32xf32>
    %362 = vector.extract_strided_slice %352 {offsets = [0, 64], sizes = [2, 32], strides = [1, 1]} : vector<2x96xf32> to vector<2x32xf32>
    %363 = math.tanh %361 : vector<2x32xf32>
    %364 = arith.mulf %362, %363 : vector<2x32xf32>
    %c1_i32_127 = arith.constant 1 : i32
    %365 = arith.cmpi sge, %c4_i32, %c1_i32_127 : i32
    %c17_i32_128 = arith.constant 17 : i32
    %366 = arith.cmpi slt, %c4_i32, %c17_i32_128 : i32
    %367 = arith.andi %365, %366 : i1
    %368 = arith.select %367, %364, %355 : vector<2x32xf32>
    %369 = arith.select %367, %361, %356 : vector<2x32xf32>
    %370 = arith.extui %367 : i1 to i32
    %c0_i32_129 = arith.constant 0 : i32
    %371 = arith.cmpi ne, %370, %c0_i32_129 : i32
    scf.if %371 {
      %c1_i32_414 = arith.constant 1 : i32
      %1226 = arith.subi %c4_i32, %c1_i32_414 : i32
      %c0_i32_415 = arith.constant 0 : i32
      %1227 = arith.maxsi %1226, %c0_i32_415 : i32
      %c2_i32_416 = arith.constant 2 : i32
      %1228 = arith.muli %1227, %c2_i32_416 : i32
      %1229 = arith.index_cast %1228 : i32 to index
      %c0_417 = arith.constant 0 : index
      %1230 = vector.load %arg9[%1229, %c0_417] : memref<32x32xf32, #tpu.memory_space<vmem>>, vector<2x32xf32>
      tpu.vector_store %arg9[%1229, %c0_417], %364 {strides = array<i32>} : memref<32x32xf32, #tpu.memory_space<vmem>>, vector<2x32xf32>,
    } else {
    }
    %372 = tpu.concatenate %342, %368 in 1 : vector<2x32xf32>, vector<2x32xf32> -> vector<2x64xf32>
    %373 = tpu.concatenate %343, %369 in 1 : vector<2x32xf32>, vector<2x32xf32> -> vector<2x64xf32>
    %c5_i32 = arith.constant 5 : i32
    %374 = arith.truncf %372 : vector<2x64xf32> to vector<2x64xbf16>
    %c0_130 = arith.constant 0 : index
    %c0_131 = arith.constant 0 : index
    %375 = vector.load %arg3[%c0_130, %c0_131] : memref<64x256xbf16, #tpu.memory_space<vmem>>, vector<64x256xbf16>
    %cst_132 = arith.constant dense<0.000000e+00> : vector<2x256xf32>
    %376 = tpu.matmul %374, %375, %cst_132 {dimension_numbers = #tpu.dot_dimension_numbers<[1], [0], [0], [1], [0, 0, 1, 1], [], []>} : vector<2x64xbf16>, vector<64x256xbf16>, vector<2x256xf32> -> vector<2x256xf32>
    %c0_133 = arith.constant 0 : index
    %c0_134 = arith.constant 0 : index
    %377 = vector.load %arg4[%c0_133, %c0_134] : memref<1x256xf32, #tpu.memory_space<vmem>>, vector<1x256xf32>
    %378 = vector.broadcast %377 : vector<1x256xf32> to vector<2x256xf32>
    %379 = arith.addf %376, %378 : vector<2x256xf32>
    %c15_i32_135 = arith.constant 15 : i32
    %380 = arith.minsi %c5_i32, %c15_i32_135 : i32
    %c2_i32_136 = arith.constant 2 : i32
    %381 = arith.muli %380, %c2_i32_136 : i32
    %382 = arith.index_cast %381 : i32 to index
    %c0_137 = arith.constant 0 : index
    %383 = vector.load %arg8[%382, %c0_137] : memref<32x128xf32, #tpu.memory_space<vmem>>, vector<2x128xf32>
    %384 = vector.extract_strided_slice %379 {offsets = [0, 0], sizes = [2, 128], strides = [1, 1]} : vector<2x256xf32> to vector<2x128xf32>
    %385 = arith.addf %384, %383 : vector<2x128xf32>
    %386 = vector.extract_strided_slice %385 {offsets = [0, 0], sizes = [2, 96], strides = [1, 1]} : vector<2x128xf32> to vector<2x96xf32>
    %cst_138 = arith.constant 5.000000e-01 : f32
    %387 = vector.broadcast %cst_138 : f32 to vector<2x96xf32>
    %388 = arith.mulf %387, %386 : vector<2x96xf32>
    %389 = math.tanh %388 : vector<2x96xf32>
    %cst_139 = arith.constant 5.000000e-01 : f32
    %390 = vector.broadcast %cst_139 : f32 to vector<2x96xf32>
    %391 = arith.mulf %390, %389 : vector<2x96xf32>
    %cst_140 = arith.constant 5.000000e-01 : f32
    %392 = vector.broadcast %cst_140 : f32 to vector<2x96xf32>
    %393 = arith.addf %391, %392 : vector<2x96xf32>
    %394 = vector.extract_strided_slice %385 {offsets = [0, 96], sizes = [2, 32], strides = [1, 1]} : vector<2x128xf32> to vector<2x32xf32>
    %395 = math.tanh %394 : vector<2x32xf32>
    %396 = vector.extract_strided_slice %372 {offsets = [0, 0], sizes = [2, 32], strides = [1, 1]} : vector<2x64xf32> to vector<2x32xf32>
    %397 = vector.extract_strided_slice %373 {offsets = [0, 0], sizes = [2, 32], strides = [1, 1]} : vector<2x64xf32> to vector<2x32xf32>
    %398 = vector.extract_strided_slice %393 {offsets = [0, 32], sizes = [2, 32], strides = [1, 1]} : vector<2x96xf32> to vector<2x32xf32>
    %399 = arith.mulf %398, %397 : vector<2x32xf32>
    %400 = vector.extract_strided_slice %393 {offsets = [0, 0], sizes = [2, 32], strides = [1, 1]} : vector<2x96xf32> to vector<2x32xf32>
    %401 = arith.mulf %400, %395 : vector<2x32xf32>
    %402 = arith.addf %399, %401 : vector<2x32xf32>
    %403 = vector.extract_strided_slice %393 {offsets = [0, 64], sizes = [2, 32], strides = [1, 1]} : vector<2x96xf32> to vector<2x32xf32>
    %404 = math.tanh %402 : vector<2x32xf32>
    %405 = arith.mulf %403, %404 : vector<2x32xf32>
    %c0_i32_141 = arith.constant 0 : i32
    %406 = arith.cmpi sge, %c5_i32, %c0_i32_141 : i32
    %c16_i32_142 = arith.constant 16 : i32
    %407 = arith.cmpi slt, %c5_i32, %c16_i32_142 : i32
    %408 = arith.andi %406, %407 : i1
    %409 = arith.select %408, %405, %396 : vector<2x32xf32>
    %410 = arith.select %408, %402, %397 : vector<2x32xf32>
    %411 = vector.extract_strided_slice %379 {offsets = [0, 128], sizes = [2, 128], strides = [1, 1]} : vector<2x256xf32> to vector<2x128xf32>
    %412 = vector.extract_strided_slice %411 {offsets = [0, 0], sizes = [2, 96], strides = [1, 1]} : vector<2x128xf32> to vector<2x96xf32>
    %cst_143 = arith.constant 5.000000e-01 : f32
    %413 = vector.broadcast %cst_143 : f32 to vector<2x96xf32>
    %414 = arith.mulf %413, %412 : vector<2x96xf32>
    %415 = math.tanh %414 : vector<2x96xf32>
    %cst_144 = arith.constant 5.000000e-01 : f32
    %416 = vector.broadcast %cst_144 : f32 to vector<2x96xf32>
    %417 = arith.mulf %416, %415 : vector<2x96xf32>
    %cst_145 = arith.constant 5.000000e-01 : f32
    %418 = vector.broadcast %cst_145 : f32 to vector<2x96xf32>
    %419 = arith.addf %417, %418 : vector<2x96xf32>
    %420 = vector.extract_strided_slice %411 {offsets = [0, 96], sizes = [2, 32], strides = [1, 1]} : vector<2x128xf32> to vector<2x32xf32>
    %421 = math.tanh %420 : vector<2x32xf32>
    %422 = vector.extract_strided_slice %372 {offsets = [0, 32], sizes = [2, 32], strides = [1, 1]} : vector<2x64xf32> to vector<2x32xf32>
    %423 = vector.extract_strided_slice %373 {offsets = [0, 32], sizes = [2, 32], strides = [1, 1]} : vector<2x64xf32> to vector<2x32xf32>
    %424 = vector.extract_strided_slice %419 {offsets = [0, 32], sizes = [2, 32], strides = [1, 1]} : vector<2x96xf32> to vector<2x32xf32>
    %425 = arith.mulf %424, %423 : vector<2x32xf32>
    %426 = vector.extract_strided_slice %419 {offsets = [0, 0], sizes = [2, 32], strides = [1, 1]} : vector<2x96xf32> to vector<2x32xf32>
    %427 = arith.mulf %426, %421 : vector<2x32xf32>
    %428 = arith.addf %425, %427 : vector<2x32xf32>
    %429 = vector.extract_strided_slice %419 {offsets = [0, 64], sizes = [2, 32], strides = [1, 1]} : vector<2x96xf32> to vector<2x32xf32>
    %430 = math.tanh %428 : vector<2x32xf32>
    %431 = arith.mulf %429, %430 : vector<2x32xf32>
    %c1_i32_146 = arith.constant 1 : i32
    %432 = arith.cmpi sge, %c5_i32, %c1_i32_146 : i32
    %c17_i32_147 = arith.constant 17 : i32
    %433 = arith.cmpi slt, %c5_i32, %c17_i32_147 : i32
    %434 = arith.andi %432, %433 : i1
    %435 = arith.select %434, %431, %422 : vector<2x32xf32>
    %436 = arith.select %434, %428, %423 : vector<2x32xf32>
    %437 = arith.extui %434 : i1 to i32
    %c0_i32_148 = arith.constant 0 : i32
    %438 = arith.cmpi ne, %437, %c0_i32_148 : i32
    scf.if %438 {
      %c1_i32_414 = arith.constant 1 : i32
      %1226 = arith.subi %c5_i32, %c1_i32_414 : i32
      %c0_i32_415 = arith.constant 0 : i32
      %1227 = arith.maxsi %1226, %c0_i32_415 : i32
      %c2_i32_416 = arith.constant 2 : i32
      %1228 = arith.muli %1227, %c2_i32_416 : i32
      %1229 = arith.index_cast %1228 : i32 to index
      %c0_417 = arith.constant 0 : index
      %1230 = vector.load %arg9[%1229, %c0_417] : memref<32x32xf32, #tpu.memory_space<vmem>>, vector<2x32xf32>
      tpu.vector_store %arg9[%1229, %c0_417], %431 {strides = array<i32>} : memref<32x32xf32, #tpu.memory_space<vmem>>, vector<2x32xf32>,
    } else {
    }
    %439 = tpu.concatenate %409, %435 in 1 : vector<2x32xf32>, vector<2x32xf32> -> vector<2x64xf32>
    %440 = tpu.concatenate %410, %436 in 1 : vector<2x32xf32>, vector<2x32xf32> -> vector<2x64xf32>
    %c6_i32 = arith.constant 6 : i32
    %441 = arith.truncf %439 : vector<2x64xf32> to vector<2x64xbf16>
    %c0_149 = arith.constant 0 : index
    %c0_150 = arith.constant 0 : index
    %442 = vector.load %arg3[%c0_149, %c0_150] : memref<64x256xbf16, #tpu.memory_space<vmem>>, vector<64x256xbf16>
    %cst_151 = arith.constant dense<0.000000e+00> : vector<2x256xf32>
    %443 = tpu.matmul %441, %442, %cst_151 {dimension_numbers = #tpu.dot_dimension_numbers<[1], [0], [0], [1], [0, 0, 1, 1], [], []>} : vector<2x64xbf16>, vector<64x256xbf16>, vector<2x256xf32> -> vector<2x256xf32>
    %c0_152 = arith.constant 0 : index
    %c0_153 = arith.constant 0 : index
    %444 = vector.load %arg4[%c0_152, %c0_153] : memref<1x256xf32, #tpu.memory_space<vmem>>, vector<1x256xf32>
    %445 = vector.broadcast %444 : vector<1x256xf32> to vector<2x256xf32>
    %446 = arith.addf %443, %445 : vector<2x256xf32>
    %c15_i32_154 = arith.constant 15 : i32
    %447 = arith.minsi %c6_i32, %c15_i32_154 : i32
    %c2_i32_155 = arith.constant 2 : i32
    %448 = arith.muli %447, %c2_i32_155 : i32
    %449 = arith.index_cast %448 : i32 to index
    %c0_156 = arith.constant 0 : index
    %450 = vector.load %arg8[%449, %c0_156] : memref<32x128xf32, #tpu.memory_space<vmem>>, vector<2x128xf32>
    %451 = vector.extract_strided_slice %446 {offsets = [0, 0], sizes = [2, 128], strides = [1, 1]} : vector<2x256xf32> to vector<2x128xf32>
    %452 = arith.addf %451, %450 : vector<2x128xf32>
    %453 = vector.extract_strided_slice %452 {offsets = [0, 0], sizes = [2, 96], strides = [1, 1]} : vector<2x128xf32> to vector<2x96xf32>
    %cst_157 = arith.constant 5.000000e-01 : f32
    %454 = vector.broadcast %cst_157 : f32 to vector<2x96xf32>
    %455 = arith.mulf %454, %453 : vector<2x96xf32>
    %456 = math.tanh %455 : vector<2x96xf32>
    %cst_158 = arith.constant 5.000000e-01 : f32
    %457 = vector.broadcast %cst_158 : f32 to vector<2x96xf32>
    %458 = arith.mulf %457, %456 : vector<2x96xf32>
    %cst_159 = arith.constant 5.000000e-01 : f32
    %459 = vector.broadcast %cst_159 : f32 to vector<2x96xf32>
    %460 = arith.addf %458, %459 : vector<2x96xf32>
    %461 = vector.extract_strided_slice %452 {offsets = [0, 96], sizes = [2, 32], strides = [1, 1]} : vector<2x128xf32> to vector<2x32xf32>
    %462 = math.tanh %461 : vector<2x32xf32>
    %463 = vector.extract_strided_slice %439 {offsets = [0, 0], sizes = [2, 32], strides = [1, 1]} : vector<2x64xf32> to vector<2x32xf32>
    %464 = vector.extract_strided_slice %440 {offsets = [0, 0], sizes = [2, 32], strides = [1, 1]} : vector<2x64xf32> to vector<2x32xf32>
    %465 = vector.extract_strided_slice %460 {offsets = [0, 32], sizes = [2, 32], strides = [1, 1]} : vector<2x96xf32> to vector<2x32xf32>
    %466 = arith.mulf %465, %464 : vector<2x32xf32>
    %467 = vector.extract_strided_slice %460 {offsets = [0, 0], sizes = [2, 32], strides = [1, 1]} : vector<2x96xf32> to vector<2x32xf32>
    %468 = arith.mulf %467, %462 : vector<2x32xf32>
    %469 = arith.addf %466, %468 : vector<2x32xf32>
    %470 = vector.extract_strided_slice %460 {offsets = [0, 64], sizes = [2, 32], strides = [1, 1]} : vector<2x96xf32> to vector<2x32xf32>
    %471 = math.tanh %469 : vector<2x32xf32>
    %472 = arith.mulf %470, %471 : vector<2x32xf32>
    %c0_i32_160 = arith.constant 0 : i32
    %473 = arith.cmpi sge, %c6_i32, %c0_i32_160 : i32
    %c16_i32_161 = arith.constant 16 : i32
    %474 = arith.cmpi slt, %c6_i32, %c16_i32_161 : i32
    %475 = arith.andi %473, %474 : i1
    %476 = arith.select %475, %472, %463 : vector<2x32xf32>
    %477 = arith.select %475, %469, %464 : vector<2x32xf32>
    %478 = vector.extract_strided_slice %446 {offsets = [0, 128], sizes = [2, 128], strides = [1, 1]} : vector<2x256xf32> to vector<2x128xf32>
    %479 = vector.extract_strided_slice %478 {offsets = [0, 0], sizes = [2, 96], strides = [1, 1]} : vector<2x128xf32> to vector<2x96xf32>
    %cst_162 = arith.constant 5.000000e-01 : f32
    %480 = vector.broadcast %cst_162 : f32 to vector<2x96xf32>
    %481 = arith.mulf %480, %479 : vector<2x96xf32>
    %482 = math.tanh %481 : vector<2x96xf32>
    %cst_163 = arith.constant 5.000000e-01 : f32
    %483 = vector.broadcast %cst_163 : f32 to vector<2x96xf32>
    %484 = arith.mulf %483, %482 : vector<2x96xf32>
    %cst_164 = arith.constant 5.000000e-01 : f32
    %485 = vector.broadcast %cst_164 : f32 to vector<2x96xf32>
    %486 = arith.addf %484, %485 : vector<2x96xf32>
    %487 = vector.extract_strided_slice %478 {offsets = [0, 96], sizes = [2, 32], strides = [1, 1]} : vector<2x128xf32> to vector<2x32xf32>
    %488 = math.tanh %487 : vector<2x32xf32>
    %489 = vector.extract_strided_slice %439 {offsets = [0, 32], sizes = [2, 32], strides = [1, 1]} : vector<2x64xf32> to vector<2x32xf32>
    %490 = vector.extract_strided_slice %440 {offsets = [0, 32], sizes = [2, 32], strides = [1, 1]} : vector<2x64xf32> to vector<2x32xf32>
    %491 = vector.extract_strided_slice %486 {offsets = [0, 32], sizes = [2, 32], strides = [1, 1]} : vector<2x96xf32> to vector<2x32xf32>
    %492 = arith.mulf %491, %490 : vector<2x32xf32>
    %493 = vector.extract_strided_slice %486 {offsets = [0, 0], sizes = [2, 32], strides = [1, 1]} : vector<2x96xf32> to vector<2x32xf32>
    %494 = arith.mulf %493, %488 : vector<2x32xf32>
    %495 = arith.addf %492, %494 : vector<2x32xf32>
    %496 = vector.extract_strided_slice %486 {offsets = [0, 64], sizes = [2, 32], strides = [1, 1]} : vector<2x96xf32> to vector<2x32xf32>
    %497 = math.tanh %495 : vector<2x32xf32>
    %498 = arith.mulf %496, %497 : vector<2x32xf32>
    %c1_i32_165 = arith.constant 1 : i32
    %499 = arith.cmpi sge, %c6_i32, %c1_i32_165 : i32
    %c17_i32_166 = arith.constant 17 : i32
    %500 = arith.cmpi slt, %c6_i32, %c17_i32_166 : i32
    %501 = arith.andi %499, %500 : i1
    %502 = arith.select %501, %498, %489 : vector<2x32xf32>
    %503 = arith.select %501, %495, %490 : vector<2x32xf32>
    %504 = arith.extui %501 : i1 to i32
    %c0_i32_167 = arith.constant 0 : i32
    %505 = arith.cmpi ne, %504, %c0_i32_167 : i32
    scf.if %505 {
      %c1_i32_414 = arith.constant 1 : i32
      %1226 = arith.subi %c6_i32, %c1_i32_414 : i32
      %c0_i32_415 = arith.constant 0 : i32
      %1227 = arith.maxsi %1226, %c0_i32_415 : i32
      %c2_i32_416 = arith.constant 2 : i32
      %1228 = arith.muli %1227, %c2_i32_416 : i32
      %1229 = arith.index_cast %1228 : i32 to index
      %c0_417 = arith.constant 0 : index
      %1230 = vector.load %arg9[%1229, %c0_417] : memref<32x32xf32, #tpu.memory_space<vmem>>, vector<2x32xf32>
      tpu.vector_store %arg9[%1229, %c0_417], %498 {strides = array<i32>} : memref<32x32xf32, #tpu.memory_space<vmem>>, vector<2x32xf32>,
    } else {
    }
    %506 = tpu.concatenate %476, %502 in 1 : vector<2x32xf32>, vector<2x32xf32> -> vector<2x64xf32>
    %507 = tpu.concatenate %477, %503 in 1 : vector<2x32xf32>, vector<2x32xf32> -> vector<2x64xf32>
    %c7_i32 = arith.constant 7 : i32
    %508 = arith.truncf %506 : vector<2x64xf32> to vector<2x64xbf16>
    %c0_168 = arith.constant 0 : index
    %c0_169 = arith.constant 0 : index
    %509 = vector.load %arg3[%c0_168, %c0_169] : memref<64x256xbf16, #tpu.memory_space<vmem>>, vector<64x256xbf16>
    %cst_170 = arith.constant dense<0.000000e+00> : vector<2x256xf32>
    %510 = tpu.matmul %508, %509, %cst_170 {dimension_numbers = #tpu.dot_dimension_numbers<[1], [0], [0], [1], [0, 0, 1, 1], [], []>} : vector<2x64xbf16>, vector<64x256xbf16>, vector<2x256xf32> -> vector<2x256xf32>
    %c0_171 = arith.constant 0 : index
    %c0_172 = arith.constant 0 : index
    %511 = vector.load %arg4[%c0_171, %c0_172] : memref<1x256xf32, #tpu.memory_space<vmem>>, vector<1x256xf32>
    %512 = vector.broadcast %511 : vector<1x256xf32> to vector<2x256xf32>
    %513 = arith.addf %510, %512 : vector<2x256xf32>
    %c15_i32_173 = arith.constant 15 : i32
    %514 = arith.minsi %c7_i32, %c15_i32_173 : i32
    %c2_i32_174 = arith.constant 2 : i32
    %515 = arith.muli %514, %c2_i32_174 : i32
    %516 = arith.index_cast %515 : i32 to index
    %c0_175 = arith.constant 0 : index
    %517 = vector.load %arg8[%516, %c0_175] : memref<32x128xf32, #tpu.memory_space<vmem>>, vector<2x128xf32>
    %518 = vector.extract_strided_slice %513 {offsets = [0, 0], sizes = [2, 128], strides = [1, 1]} : vector<2x256xf32> to vector<2x128xf32>
    %519 = arith.addf %518, %517 : vector<2x128xf32>
    %520 = vector.extract_strided_slice %519 {offsets = [0, 0], sizes = [2, 96], strides = [1, 1]} : vector<2x128xf32> to vector<2x96xf32>
    %cst_176 = arith.constant 5.000000e-01 : f32
    %521 = vector.broadcast %cst_176 : f32 to vector<2x96xf32>
    %522 = arith.mulf %521, %520 : vector<2x96xf32>
    %523 = math.tanh %522 : vector<2x96xf32>
    %cst_177 = arith.constant 5.000000e-01 : f32
    %524 = vector.broadcast %cst_177 : f32 to vector<2x96xf32>
    %525 = arith.mulf %524, %523 : vector<2x96xf32>
    %cst_178 = arith.constant 5.000000e-01 : f32
    %526 = vector.broadcast %cst_178 : f32 to vector<2x96xf32>
    %527 = arith.addf %525, %526 : vector<2x96xf32>
    %528 = vector.extract_strided_slice %519 {offsets = [0, 96], sizes = [2, 32], strides = [1, 1]} : vector<2x128xf32> to vector<2x32xf32>
    %529 = math.tanh %528 : vector<2x32xf32>
    %530 = vector.extract_strided_slice %506 {offsets = [0, 0], sizes = [2, 32], strides = [1, 1]} : vector<2x64xf32> to vector<2x32xf32>
    %531 = vector.extract_strided_slice %507 {offsets = [0, 0], sizes = [2, 32], strides = [1, 1]} : vector<2x64xf32> to vector<2x32xf32>
    %532 = vector.extract_strided_slice %527 {offsets = [0, 32], sizes = [2, 32], strides = [1, 1]} : vector<2x96xf32> to vector<2x32xf32>
    %533 = arith.mulf %532, %531 : vector<2x32xf32>
    %534 = vector.extract_strided_slice %527 {offsets = [0, 0], sizes = [2, 32], strides = [1, 1]} : vector<2x96xf32> to vector<2x32xf32>
    %535 = arith.mulf %534, %529 : vector<2x32xf32>
    %536 = arith.addf %533, %535 : vector<2x32xf32>
    %537 = vector.extract_strided_slice %527 {offsets = [0, 64], sizes = [2, 32], strides = [1, 1]} : vector<2x96xf32> to vector<2x32xf32>
    %538 = math.tanh %536 : vector<2x32xf32>
    %539 = arith.mulf %537, %538 : vector<2x32xf32>
    %c0_i32_179 = arith.constant 0 : i32
    %540 = arith.cmpi sge, %c7_i32, %c0_i32_179 : i32
    %c16_i32_180 = arith.constant 16 : i32
    %541 = arith.cmpi slt, %c7_i32, %c16_i32_180 : i32
    %542 = arith.andi %540, %541 : i1
    %543 = arith.select %542, %539, %530 : vector<2x32xf32>
    %544 = arith.select %542, %536, %531 : vector<2x32xf32>
    %545 = vector.extract_strided_slice %513 {offsets = [0, 128], sizes = [2, 128], strides = [1, 1]} : vector<2x256xf32> to vector<2x128xf32>
    %546 = vector.extract_strided_slice %545 {offsets = [0, 0], sizes = [2, 96], strides = [1, 1]} : vector<2x128xf32> to vector<2x96xf32>
    %cst_181 = arith.constant 5.000000e-01 : f32
    %547 = vector.broadcast %cst_181 : f32 to vector<2x96xf32>
    %548 = arith.mulf %547, %546 : vector<2x96xf32>
    %549 = math.tanh %548 : vector<2x96xf32>
    %cst_182 = arith.constant 5.000000e-01 : f32
    %550 = vector.broadcast %cst_182 : f32 to vector<2x96xf32>
    %551 = arith.mulf %550, %549 : vector<2x96xf32>
    %cst_183 = arith.constant 5.000000e-01 : f32
    %552 = vector.broadcast %cst_183 : f32 to vector<2x96xf32>
    %553 = arith.addf %551, %552 : vector<2x96xf32>
    %554 = vector.extract_strided_slice %545 {offsets = [0, 96], sizes = [2, 32], strides = [1, 1]} : vector<2x128xf32> to vector<2x32xf32>
    %555 = math.tanh %554 : vector<2x32xf32>
    %556 = vector.extract_strided_slice %506 {offsets = [0, 32], sizes = [2, 32], strides = [1, 1]} : vector<2x64xf32> to vector<2x32xf32>
    %557 = vector.extract_strided_slice %507 {offsets = [0, 32], sizes = [2, 32], strides = [1, 1]} : vector<2x64xf32> to vector<2x32xf32>
    %558 = vector.extract_strided_slice %553 {offsets = [0, 32], sizes = [2, 32], strides = [1, 1]} : vector<2x96xf32> to vector<2x32xf32>
    %559 = arith.mulf %558, %557 : vector<2x32xf32>
    %560 = vector.extract_strided_slice %553 {offsets = [0, 0], sizes = [2, 32], strides = [1, 1]} : vector<2x96xf32> to vector<2x32xf32>
    %561 = arith.mulf %560, %555 : vector<2x32xf32>
    %562 = arith.addf %559, %561 : vector<2x32xf32>
    %563 = vector.extract_strided_slice %553 {offsets = [0, 64], sizes = [2, 32], strides = [1, 1]} : vector<2x96xf32> to vector<2x32xf32>
    %564 = math.tanh %562 : vector<2x32xf32>
    %565 = arith.mulf %563, %564 : vector<2x32xf32>
    %c1_i32_184 = arith.constant 1 : i32
    %566 = arith.cmpi sge, %c7_i32, %c1_i32_184 : i32
    %c17_i32_185 = arith.constant 17 : i32
    %567 = arith.cmpi slt, %c7_i32, %c17_i32_185 : i32
    %568 = arith.andi %566, %567 : i1
    %569 = arith.select %568, %565, %556 : vector<2x32xf32>
    %570 = arith.select %568, %562, %557 : vector<2x32xf32>
    %571 = arith.extui %568 : i1 to i32
    %c0_i32_186 = arith.constant 0 : i32
    %572 = arith.cmpi ne, %571, %c0_i32_186 : i32
    scf.if %572 {
      %c1_i32_414 = arith.constant 1 : i32
      %1226 = arith.subi %c7_i32, %c1_i32_414 : i32
      %c0_i32_415 = arith.constant 0 : i32
      %1227 = arith.maxsi %1226, %c0_i32_415 : i32
      %c2_i32_416 = arith.constant 2 : i32
      %1228 = arith.muli %1227, %c2_i32_416 : i32
      %1229 = arith.index_cast %1228 : i32 to index
      %c0_417 = arith.constant 0 : index
      %1230 = vector.load %arg9[%1229, %c0_417] : memref<32x32xf32, #tpu.memory_space<vmem>>, vector<2x32xf32>
      tpu.vector_store %arg9[%1229, %c0_417], %565 {strides = array<i32>} : memref<32x32xf32, #tpu.memory_space<vmem>>, vector<2x32xf32>,
    } else {
    }
    %573 = tpu.concatenate %543, %569 in 1 : vector<2x32xf32>, vector<2x32xf32> -> vector<2x64xf32>
    %574 = tpu.concatenate %544, %570 in 1 : vector<2x32xf32>, vector<2x32xf32> -> vector<2x64xf32>
    %c8_i32 = arith.constant 8 : i32
    %575 = arith.truncf %573 : vector<2x64xf32> to vector<2x64xbf16>
    %c0_187 = arith.constant 0 : index
    %c0_188 = arith.constant 0 : index
    %576 = vector.load %arg3[%c0_187, %c0_188] : memref<64x256xbf16, #tpu.memory_space<vmem>>, vector<64x256xbf16>
    %cst_189 = arith.constant dense<0.000000e+00> : vector<2x256xf32>
    %577 = tpu.matmul %575, %576, %cst_189 {dimension_numbers = #tpu.dot_dimension_numbers<[1], [0], [0], [1], [0, 0, 1, 1], [], []>} : vector<2x64xbf16>, vector<64x256xbf16>, vector<2x256xf32> -> vector<2x256xf32>
    %c0_190 = arith.constant 0 : index
    %c0_191 = arith.constant 0 : index
    %578 = vector.load %arg4[%c0_190, %c0_191] : memref<1x256xf32, #tpu.memory_space<vmem>>, vector<1x256xf32>
    %579 = vector.broadcast %578 : vector<1x256xf32> to vector<2x256xf32>
    %580 = arith.addf %577, %579 : vector<2x256xf32>
    %c15_i32_192 = arith.constant 15 : i32
    %581 = arith.minsi %c8_i32, %c15_i32_192 : i32
    %c2_i32_193 = arith.constant 2 : i32
    %582 = arith.muli %581, %c2_i32_193 : i32
    %583 = arith.index_cast %582 : i32 to index
    %c0_194 = arith.constant 0 : index
    %584 = vector.load %arg8[%583, %c0_194] : memref<32x128xf32, #tpu.memory_space<vmem>>, vector<2x128xf32>
    %585 = vector.extract_strided_slice %580 {offsets = [0, 0], sizes = [2, 128], strides = [1, 1]} : vector<2x256xf32> to vector<2x128xf32>
    %586 = arith.addf %585, %584 : vector<2x128xf32>
    %587 = vector.extract_strided_slice %586 {offsets = [0, 0], sizes = [2, 96], strides = [1, 1]} : vector<2x128xf32> to vector<2x96xf32>
    %cst_195 = arith.constant 5.000000e-01 : f32
    %588 = vector.broadcast %cst_195 : f32 to vector<2x96xf32>
    %589 = arith.mulf %588, %587 : vector<2x96xf32>
    %590 = math.tanh %589 : vector<2x96xf32>
    %cst_196 = arith.constant 5.000000e-01 : f32
    %591 = vector.broadcast %cst_196 : f32 to vector<2x96xf32>
    %592 = arith.mulf %591, %590 : vector<2x96xf32>
    %cst_197 = arith.constant 5.000000e-01 : f32
    %593 = vector.broadcast %cst_197 : f32 to vector<2x96xf32>
    %594 = arith.addf %592, %593 : vector<2x96xf32>
    %595 = vector.extract_strided_slice %586 {offsets = [0, 96], sizes = [2, 32], strides = [1, 1]} : vector<2x128xf32> to vector<2x32xf32>
    %596 = math.tanh %595 : vector<2x32xf32>
    %597 = vector.extract_strided_slice %573 {offsets = [0, 0], sizes = [2, 32], strides = [1, 1]} : vector<2x64xf32> to vector<2x32xf32>
    %598 = vector.extract_strided_slice %574 {offsets = [0, 0], sizes = [2, 32], strides = [1, 1]} : vector<2x64xf32> to vector<2x32xf32>
    %599 = vector.extract_strided_slice %594 {offsets = [0, 32], sizes = [2, 32], strides = [1, 1]} : vector<2x96xf32> to vector<2x32xf32>
    %600 = arith.mulf %599, %598 : vector<2x32xf32>
    %601 = vector.extract_strided_slice %594 {offsets = [0, 0], sizes = [2, 32], strides = [1, 1]} : vector<2x96xf32> to vector<2x32xf32>
    %602 = arith.mulf %601, %596 : vector<2x32xf32>
    %603 = arith.addf %600, %602 : vector<2x32xf32>
    %604 = vector.extract_strided_slice %594 {offsets = [0, 64], sizes = [2, 32], strides = [1, 1]} : vector<2x96xf32> to vector<2x32xf32>
    %605 = math.tanh %603 : vector<2x32xf32>
    %606 = arith.mulf %604, %605 : vector<2x32xf32>
    %c0_i32_198 = arith.constant 0 : i32
    %607 = arith.cmpi sge, %c8_i32, %c0_i32_198 : i32
    %c16_i32_199 = arith.constant 16 : i32
    %608 = arith.cmpi slt, %c8_i32, %c16_i32_199 : i32
    %609 = arith.andi %607, %608 : i1
    %610 = arith.select %609, %606, %597 : vector<2x32xf32>
    %611 = arith.select %609, %603, %598 : vector<2x32xf32>
    %612 = vector.extract_strided_slice %580 {offsets = [0, 128], sizes = [2, 128], strides = [1, 1]} : vector<2x256xf32> to vector<2x128xf32>
    %613 = vector.extract_strided_slice %612 {offsets = [0, 0], sizes = [2, 96], strides = [1, 1]} : vector<2x128xf32> to vector<2x96xf32>
    %cst_200 = arith.constant 5.000000e-01 : f32
    %614 = vector.broadcast %cst_200 : f32 to vector<2x96xf32>
    %615 = arith.mulf %614, %613 : vector<2x96xf32>
    %616 = math.tanh %615 : vector<2x96xf32>
    %cst_201 = arith.constant 5.000000e-01 : f32
    %617 = vector.broadcast %cst_201 : f32 to vector<2x96xf32>
    %618 = arith.mulf %617, %616 : vector<2x96xf32>
    %cst_202 = arith.constant 5.000000e-01 : f32
    %619 = vector.broadcast %cst_202 : f32 to vector<2x96xf32>
    %620 = arith.addf %618, %619 : vector<2x96xf32>
    %621 = vector.extract_strided_slice %612 {offsets = [0, 96], sizes = [2, 32], strides = [1, 1]} : vector<2x128xf32> to vector<2x32xf32>
    %622 = math.tanh %621 : vector<2x32xf32>
    %623 = vector.extract_strided_slice %573 {offsets = [0, 32], sizes = [2, 32], strides = [1, 1]} : vector<2x64xf32> to vector<2x32xf32>
    %624 = vector.extract_strided_slice %574 {offsets = [0, 32], sizes = [2, 32], strides = [1, 1]} : vector<2x64xf32> to vector<2x32xf32>
    %625 = vector.extract_strided_slice %620 {offsets = [0, 32], sizes = [2, 32], strides = [1, 1]} : vector<2x96xf32> to vector<2x32xf32>
    %626 = arith.mulf %625, %624 : vector<2x32xf32>
    %627 = vector.extract_strided_slice %620 {offsets = [0, 0], sizes = [2, 32], strides = [1, 1]} : vector<2x96xf32> to vector<2x32xf32>
    %628 = arith.mulf %627, %622 : vector<2x32xf32>
    %629 = arith.addf %626, %628 : vector<2x32xf32>
    %630 = vector.extract_strided_slice %620 {offsets = [0, 64], sizes = [2, 32], strides = [1, 1]} : vector<2x96xf32> to vector<2x32xf32>
    %631 = math.tanh %629 : vector<2x32xf32>
    %632 = arith.mulf %630, %631 : vector<2x32xf32>
    %c1_i32_203 = arith.constant 1 : i32
    %633 = arith.cmpi sge, %c8_i32, %c1_i32_203 : i32
    %c17_i32_204 = arith.constant 17 : i32
    %634 = arith.cmpi slt, %c8_i32, %c17_i32_204 : i32
    %635 = arith.andi %633, %634 : i1
    %636 = arith.select %635, %632, %623 : vector<2x32xf32>
    %637 = arith.select %635, %629, %624 : vector<2x32xf32>
    %638 = arith.extui %635 : i1 to i32
    %c0_i32_205 = arith.constant 0 : i32
    %639 = arith.cmpi ne, %638, %c0_i32_205 : i32
    scf.if %639 {
      %c1_i32_414 = arith.constant 1 : i32
      %1226 = arith.subi %c8_i32, %c1_i32_414 : i32
      %c0_i32_415 = arith.constant 0 : i32
      %1227 = arith.maxsi %1226, %c0_i32_415 : i32
      %c2_i32_416 = arith.constant 2 : i32
      %1228 = arith.muli %1227, %c2_i32_416 : i32
      %1229 = arith.index_cast %1228 : i32 to index
      %c0_417 = arith.constant 0 : index
      %1230 = vector.load %arg9[%1229, %c0_417] : memref<32x32xf32, #tpu.memory_space<vmem>>, vector<2x32xf32>
      tpu.vector_store %arg9[%1229, %c0_417], %632 {strides = array<i32>} : memref<32x32xf32, #tpu.memory_space<vmem>>, vector<2x32xf32>,
    } else {
    }
    %640 = tpu.concatenate %610, %636 in 1 : vector<2x32xf32>, vector<2x32xf32> -> vector<2x64xf32>
    %641 = tpu.concatenate %611, %637 in 1 : vector<2x32xf32>, vector<2x32xf32> -> vector<2x64xf32>
    %c9_i32 = arith.constant 9 : i32
    %642 = arith.truncf %640 : vector<2x64xf32> to vector<2x64xbf16>
    %c0_206 = arith.constant 0 : index
    %c0_207 = arith.constant 0 : index
    %643 = vector.load %arg3[%c0_206, %c0_207] : memref<64x256xbf16, #tpu.memory_space<vmem>>, vector<64x256xbf16>
    %cst_208 = arith.constant dense<0.000000e+00> : vector<2x256xf32>
    %644 = tpu.matmul %642, %643, %cst_208 {dimension_numbers = #tpu.dot_dimension_numbers<[1], [0], [0], [1], [0, 0, 1, 1], [], []>} : vector<2x64xbf16>, vector<64x256xbf16>, vector<2x256xf32> -> vector<2x256xf32>
    %c0_209 = arith.constant 0 : index
    %c0_210 = arith.constant 0 : index
    %645 = vector.load %arg4[%c0_209, %c0_210] : memref<1x256xf32, #tpu.memory_space<vmem>>, vector<1x256xf32>
    %646 = vector.broadcast %645 : vector<1x256xf32> to vector<2x256xf32>
    %647 = arith.addf %644, %646 : vector<2x256xf32>
    %c15_i32_211 = arith.constant 15 : i32
    %648 = arith.minsi %c9_i32, %c15_i32_211 : i32
    %c2_i32_212 = arith.constant 2 : i32
    %649 = arith.muli %648, %c2_i32_212 : i32
    %650 = arith.index_cast %649 : i32 to index
    %c0_213 = arith.constant 0 : index
    %651 = vector.load %arg8[%650, %c0_213] : memref<32x128xf32, #tpu.memory_space<vmem>>, vector<2x128xf32>
    %652 = vector.extract_strided_slice %647 {offsets = [0, 0], sizes = [2, 128], strides = [1, 1]} : vector<2x256xf32> to vector<2x128xf32>
    %653 = arith.addf %652, %651 : vector<2x128xf32>
    %654 = vector.extract_strided_slice %653 {offsets = [0, 0], sizes = [2, 96], strides = [1, 1]} : vector<2x128xf32> to vector<2x96xf32>
    %cst_214 = arith.constant 5.000000e-01 : f32
    %655 = vector.broadcast %cst_214 : f32 to vector<2x96xf32>
    %656 = arith.mulf %655, %654 : vector<2x96xf32>
    %657 = math.tanh %656 : vector<2x96xf32>
    %cst_215 = arith.constant 5.000000e-01 : f32
    %658 = vector.broadcast %cst_215 : f32 to vector<2x96xf32>
    %659 = arith.mulf %658, %657 : vector<2x96xf32>
    %cst_216 = arith.constant 5.000000e-01 : f32
    %660 = vector.broadcast %cst_216 : f32 to vector<2x96xf32>
    %661 = arith.addf %659, %660 : vector<2x96xf32>
    %662 = vector.extract_strided_slice %653 {offsets = [0, 96], sizes = [2, 32], strides = [1, 1]} : vector<2x128xf32> to vector<2x32xf32>
    %663 = math.tanh %662 : vector<2x32xf32>
    %664 = vector.extract_strided_slice %640 {offsets = [0, 0], sizes = [2, 32], strides = [1, 1]} : vector<2x64xf32> to vector<2x32xf32>
    %665 = vector.extract_strided_slice %641 {offsets = [0, 0], sizes = [2, 32], strides = [1, 1]} : vector<2x64xf32> to vector<2x32xf32>
    %666 = vector.extract_strided_slice %661 {offsets = [0, 32], sizes = [2, 32], strides = [1, 1]} : vector<2x96xf32> to vector<2x32xf32>
    %667 = arith.mulf %666, %665 : vector<2x32xf32>
    %668 = vector.extract_strided_slice %661 {offsets = [0, 0], sizes = [2, 32], strides = [1, 1]} : vector<2x96xf32> to vector<2x32xf32>
    %669 = arith.mulf %668, %663 : vector<2x32xf32>
    %670 = arith.addf %667, %669 : vector<2x32xf32>
    %671 = vector.extract_strided_slice %661 {offsets = [0, 64], sizes = [2, 32], strides = [1, 1]} : vector<2x96xf32> to vector<2x32xf32>
    %672 = math.tanh %670 : vector<2x32xf32>
    %673 = arith.mulf %671, %672 : vector<2x32xf32>
    %c0_i32_217 = arith.constant 0 : i32
    %674 = arith.cmpi sge, %c9_i32, %c0_i32_217 : i32
    %c16_i32_218 = arith.constant 16 : i32
    %675 = arith.cmpi slt, %c9_i32, %c16_i32_218 : i32
    %676 = arith.andi %674, %675 : i1
    %677 = arith.select %676, %673, %664 : vector<2x32xf32>
    %678 = arith.select %676, %670, %665 : vector<2x32xf32>
    %679 = vector.extract_strided_slice %647 {offsets = [0, 128], sizes = [2, 128], strides = [1, 1]} : vector<2x256xf32> to vector<2x128xf32>
    %680 = vector.extract_strided_slice %679 {offsets = [0, 0], sizes = [2, 96], strides = [1, 1]} : vector<2x128xf32> to vector<2x96xf32>
    %cst_219 = arith.constant 5.000000e-01 : f32
    %681 = vector.broadcast %cst_219 : f32 to vector<2x96xf32>
    %682 = arith.mulf %681, %680 : vector<2x96xf32>
    %683 = math.tanh %682 : vector<2x96xf32>
    %cst_220 = arith.constant 5.000000e-01 : f32
    %684 = vector.broadcast %cst_220 : f32 to vector<2x96xf32>
    %685 = arith.mulf %684, %683 : vector<2x96xf32>
    %cst_221 = arith.constant 5.000000e-01 : f32
    %686 = vector.broadcast %cst_221 : f32 to vector<2x96xf32>
    %687 = arith.addf %685, %686 : vector<2x96xf32>
    %688 = vector.extract_strided_slice %679 {offsets = [0, 96], sizes = [2, 32], strides = [1, 1]} : vector<2x128xf32> to vector<2x32xf32>
    %689 = math.tanh %688 : vector<2x32xf32>
    %690 = vector.extract_strided_slice %640 {offsets = [0, 32], sizes = [2, 32], strides = [1, 1]} : vector<2x64xf32> to vector<2x32xf32>
    %691 = vector.extract_strided_slice %641 {offsets = [0, 32], sizes = [2, 32], strides = [1, 1]} : vector<2x64xf32> to vector<2x32xf32>
    %692 = vector.extract_strided_slice %687 {offsets = [0, 32], sizes = [2, 32], strides = [1, 1]} : vector<2x96xf32> to vector<2x32xf32>
    %693 = arith.mulf %692, %691 : vector<2x32xf32>
    %694 = vector.extract_strided_slice %687 {offsets = [0, 0], sizes = [2, 32], strides = [1, 1]} : vector<2x96xf32> to vector<2x32xf32>
    %695 = arith.mulf %694, %689 : vector<2x32xf32>
    %696 = arith.addf %693, %695 : vector<2x32xf32>
    %697 = vector.extract_strided_slice %687 {offsets = [0, 64], sizes = [2, 32], strides = [1, 1]} : vector<2x96xf32> to vector<2x32xf32>
    %698 = math.tanh %696 : vector<2x32xf32>
    %699 = arith.mulf %697, %698 : vector<2x32xf32>
    %c1_i32_222 = arith.constant 1 : i32
    %700 = arith.cmpi sge, %c9_i32, %c1_i32_222 : i32
    %c17_i32_223 = arith.constant 17 : i32
    %701 = arith.cmpi slt, %c9_i32, %c17_i32_223 : i32
    %702 = arith.andi %700, %701 : i1
    %703 = arith.select %702, %699, %690 : vector<2x32xf32>
    %704 = arith.select %702, %696, %691 : vector<2x32xf32>
    %705 = arith.extui %702 : i1 to i32
    %c0_i32_224 = arith.constant 0 : i32
    %706 = arith.cmpi ne, %705, %c0_i32_224 : i32
    scf.if %706 {
      %c1_i32_414 = arith.constant 1 : i32
      %1226 = arith.subi %c9_i32, %c1_i32_414 : i32
      %c0_i32_415 = arith.constant 0 : i32
      %1227 = arith.maxsi %1226, %c0_i32_415 : i32
      %c2_i32_416 = arith.constant 2 : i32
      %1228 = arith.muli %1227, %c2_i32_416 : i32
      %1229 = arith.index_cast %1228 : i32 to index
      %c0_417 = arith.constant 0 : index
      %1230 = vector.load %arg9[%1229, %c0_417] : memref<32x32xf32, #tpu.memory_space<vmem>>, vector<2x32xf32>
      tpu.vector_store %arg9[%1229, %c0_417], %699 {strides = array<i32>} : memref<32x32xf32, #tpu.memory_space<vmem>>, vector<2x32xf32>,
    } else {
    }
    %707 = tpu.concatenate %677, %703 in 1 : vector<2x32xf32>, vector<2x32xf32> -> vector<2x64xf32>
    %708 = tpu.concatenate %678, %704 in 1 : vector<2x32xf32>, vector<2x32xf32> -> vector<2x64xf32>
    %c10_i32 = arith.constant 10 : i32
    %709 = arith.truncf %707 : vector<2x64xf32> to vector<2x64xbf16>
    %c0_225 = arith.constant 0 : index
    %c0_226 = arith.constant 0 : index
    %710 = vector.load %arg3[%c0_225, %c0_226] : memref<64x256xbf16, #tpu.memory_space<vmem>>, vector<64x256xbf16>
    %cst_227 = arith.constant dense<0.000000e+00> : vector<2x256xf32>
    %711 = tpu.matmul %709, %710, %cst_227 {dimension_numbers = #tpu.dot_dimension_numbers<[1], [0], [0], [1], [0, 0, 1, 1], [], []>} : vector<2x64xbf16>, vector<64x256xbf16>, vector<2x256xf32> -> vector<2x256xf32>
    %c0_228 = arith.constant 0 : index
    %c0_229 = arith.constant 0 : index
    %712 = vector.load %arg4[%c0_228, %c0_229] : memref<1x256xf32, #tpu.memory_space<vmem>>, vector<1x256xf32>
    %713 = vector.broadcast %712 : vector<1x256xf32> to vector<2x256xf32>
    %714 = arith.addf %711, %713 : vector<2x256xf32>
    %c15_i32_230 = arith.constant 15 : i32
    %715 = arith.minsi %c10_i32, %c15_i32_230 : i32
    %c2_i32_231 = arith.constant 2 : i32
    %716 = arith.muli %715, %c2_i32_231 : i32
    %717 = arith.index_cast %716 : i32 to index
    %c0_232 = arith.constant 0 : index
    %718 = vector.load %arg8[%717, %c0_232] : memref<32x128xf32, #tpu.memory_space<vmem>>, vector<2x128xf32>
    %719 = vector.extract_strided_slice %714 {offsets = [0, 0], sizes = [2, 128], strides = [1, 1]} : vector<2x256xf32> to vector<2x128xf32>
    %720 = arith.addf %719, %718 : vector<2x128xf32>
    %721 = vector.extract_strided_slice %720 {offsets = [0, 0], sizes = [2, 96], strides = [1, 1]} : vector<2x128xf32> to vector<2x96xf32>
    %cst_233 = arith.constant 5.000000e-01 : f32
    %722 = vector.broadcast %cst_233 : f32 to vector<2x96xf32>
    %723 = arith.mulf %722, %721 : vector<2x96xf32>
    %724 = math.tanh %723 : vector<2x96xf32>
    %cst_234 = arith.constant 5.000000e-01 : f32
    %725 = vector.broadcast %cst_234 : f32 to vector<2x96xf32>
    %726 = arith.mulf %725, %724 : vector<2x96xf32>
    %cst_235 = arith.constant 5.000000e-01 : f32
    %727 = vector.broadcast %cst_235 : f32 to vector<2x96xf32>
    %728 = arith.addf %726, %727 : vector<2x96xf32>
    %729 = vector.extract_strided_slice %720 {offsets = [0, 96], sizes = [2, 32], strides = [1, 1]} : vector<2x128xf32> to vector<2x32xf32>
    %730 = math.tanh %729 : vector<2x32xf32>
    %731 = vector.extract_strided_slice %707 {offsets = [0, 0], sizes = [2, 32], strides = [1, 1]} : vector<2x64xf32> to vector<2x32xf32>
    %732 = vector.extract_strided_slice %708 {offsets = [0, 0], sizes = [2, 32], strides = [1, 1]} : vector<2x64xf32> to vector<2x32xf32>
    %733 = vector.extract_strided_slice %728 {offsets = [0, 32], sizes = [2, 32], strides = [1, 1]} : vector<2x96xf32> to vector<2x32xf32>
    %734 = arith.mulf %733, %732 : vector<2x32xf32>
    %735 = vector.extract_strided_slice %728 {offsets = [0, 0], sizes = [2, 32], strides = [1, 1]} : vector<2x96xf32> to vector<2x32xf32>
    %736 = arith.mulf %735, %730 : vector<2x32xf32>
    %737 = arith.addf %734, %736 : vector<2x32xf32>
    %738 = vector.extract_strided_slice %728 {offsets = [0, 64], sizes = [2, 32], strides = [1, 1]} : vector<2x96xf32> to vector<2x32xf32>
    %739 = math.tanh %737 : vector<2x32xf32>
    %740 = arith.mulf %738, %739 : vector<2x32xf32>
    %c0_i32_236 = arith.constant 0 : i32
    %741 = arith.cmpi sge, %c10_i32, %c0_i32_236 : i32
    %c16_i32_237 = arith.constant 16 : i32
    %742 = arith.cmpi slt, %c10_i32, %c16_i32_237 : i32
    %743 = arith.andi %741, %742 : i1
    %744 = arith.select %743, %740, %731 : vector<2x32xf32>
    %745 = arith.select %743, %737, %732 : vector<2x32xf32>
    %746 = vector.extract_strided_slice %714 {offsets = [0, 128], sizes = [2, 128], strides = [1, 1]} : vector<2x256xf32> to vector<2x128xf32>
    %747 = vector.extract_strided_slice %746 {offsets = [0, 0], sizes = [2, 96], strides = [1, 1]} : vector<2x128xf32> to vector<2x96xf32>
    %cst_238 = arith.constant 5.000000e-01 : f32
    %748 = vector.broadcast %cst_238 : f32 to vector<2x96xf32>
    %749 = arith.mulf %748, %747 : vector<2x96xf32>
    %750 = math.tanh %749 : vector<2x96xf32>
    %cst_239 = arith.constant 5.000000e-01 : f32
    %751 = vector.broadcast %cst_239 : f32 to vector<2x96xf32>
    %752 = arith.mulf %751, %750 : vector<2x96xf32>
    %cst_240 = arith.constant 5.000000e-01 : f32
    %753 = vector.broadcast %cst_240 : f32 to vector<2x96xf32>
    %754 = arith.addf %752, %753 : vector<2x96xf32>
    %755 = vector.extract_strided_slice %746 {offsets = [0, 96], sizes = [2, 32], strides = [1, 1]} : vector<2x128xf32> to vector<2x32xf32>
    %756 = math.tanh %755 : vector<2x32xf32>
    %757 = vector.extract_strided_slice %707 {offsets = [0, 32], sizes = [2, 32], strides = [1, 1]} : vector<2x64xf32> to vector<2x32xf32>
    %758 = vector.extract_strided_slice %708 {offsets = [0, 32], sizes = [2, 32], strides = [1, 1]} : vector<2x64xf32> to vector<2x32xf32>
    %759 = vector.extract_strided_slice %754 {offsets = [0, 32], sizes = [2, 32], strides = [1, 1]} : vector<2x96xf32> to vector<2x32xf32>
    %760 = arith.mulf %759, %758 : vector<2x32xf32>
    %761 = vector.extract_strided_slice %754 {offsets = [0, 0], sizes = [2, 32], strides = [1, 1]} : vector<2x96xf32> to vector<2x32xf32>
    %762 = arith.mulf %761, %756 : vector<2x32xf32>
    %763 = arith.addf %760, %762 : vector<2x32xf32>
    %764 = vector.extract_strided_slice %754 {offsets = [0, 64], sizes = [2, 32], strides = [1, 1]} : vector<2x96xf32> to vector<2x32xf32>
    %765 = math.tanh %763 : vector<2x32xf32>
    %766 = arith.mulf %764, %765 : vector<2x32xf32>
    %c1_i32_241 = arith.constant 1 : i32
    %767 = arith.cmpi sge, %c10_i32, %c1_i32_241 : i32
    %c17_i32_242 = arith.constant 17 : i32
    %768 = arith.cmpi slt, %c10_i32, %c17_i32_242 : i32
    %769 = arith.andi %767, %768 : i1
    %770 = arith.select %769, %766, %757 : vector<2x32xf32>
    %771 = arith.select %769, %763, %758 : vector<2x32xf32>
    %772 = arith.extui %769 : i1 to i32
    %c0_i32_243 = arith.constant 0 : i32
    %773 = arith.cmpi ne, %772, %c0_i32_243 : i32
    scf.if %773 {
      %c1_i32_414 = arith.constant 1 : i32
      %1226 = arith.subi %c10_i32, %c1_i32_414 : i32
      %c0_i32_415 = arith.constant 0 : i32
      %1227 = arith.maxsi %1226, %c0_i32_415 : i32
      %c2_i32_416 = arith.constant 2 : i32
      %1228 = arith.muli %1227, %c2_i32_416 : i32
      %1229 = arith.index_cast %1228 : i32 to index
      %c0_417 = arith.constant 0 : index
      %1230 = vector.load %arg9[%1229, %c0_417] : memref<32x32xf32, #tpu.memory_space<vmem>>, vector<2x32xf32>
      tpu.vector_store %arg9[%1229, %c0_417], %766 {strides = array<i32>} : memref<32x32xf32, #tpu.memory_space<vmem>>, vector<2x32xf32>,
    } else {
    }
    %774 = tpu.concatenate %744, %770 in 1 : vector<2x32xf32>, vector<2x32xf32> -> vector<2x64xf32>
    %775 = tpu.concatenate %745, %771 in 1 : vector<2x32xf32>, vector<2x32xf32> -> vector<2x64xf32>
    %c11_i32 = arith.constant 11 : i32
    %776 = arith.truncf %774 : vector<2x64xf32> to vector<2x64xbf16>
    %c0_244 = arith.constant 0 : index
    %c0_245 = arith.constant 0 : index
    %777 = vector.load %arg3[%c0_244, %c0_245] : memref<64x256xbf16, #tpu.memory_space<vmem>>, vector<64x256xbf16>
    %cst_246 = arith.constant dense<0.000000e+00> : vector<2x256xf32>
    %778 = tpu.matmul %776, %777, %cst_246 {dimension_numbers = #tpu.dot_dimension_numbers<[1], [0], [0], [1], [0, 0, 1, 1], [], []>} : vector<2x64xbf16>, vector<64x256xbf16>, vector<2x256xf32> -> vector<2x256xf32>
    %c0_247 = arith.constant 0 : index
    %c0_248 = arith.constant 0 : index
    %779 = vector.load %arg4[%c0_247, %c0_248] : memref<1x256xf32, #tpu.memory_space<vmem>>, vector<1x256xf32>
    %780 = vector.broadcast %779 : vector<1x256xf32> to vector<2x256xf32>
    %781 = arith.addf %778, %780 : vector<2x256xf32>
    %c15_i32_249 = arith.constant 15 : i32
    %782 = arith.minsi %c11_i32, %c15_i32_249 : i32
    %c2_i32_250 = arith.constant 2 : i32
    %783 = arith.muli %782, %c2_i32_250 : i32
    %784 = arith.index_cast %783 : i32 to index
    %c0_251 = arith.constant 0 : index
    %785 = vector.load %arg8[%784, %c0_251] : memref<32x128xf32, #tpu.memory_space<vmem>>, vector<2x128xf32>
    %786 = vector.extract_strided_slice %781 {offsets = [0, 0], sizes = [2, 128], strides = [1, 1]} : vector<2x256xf32> to vector<2x128xf32>
    %787 = arith.addf %786, %785 : vector<2x128xf32>
    %788 = vector.extract_strided_slice %787 {offsets = [0, 0], sizes = [2, 96], strides = [1, 1]} : vector<2x128xf32> to vector<2x96xf32>
    %cst_252 = arith.constant 5.000000e-01 : f32
    %789 = vector.broadcast %cst_252 : f32 to vector<2x96xf32>
    %790 = arith.mulf %789, %788 : vector<2x96xf32>
    %791 = math.tanh %790 : vector<2x96xf32>
    %cst_253 = arith.constant 5.000000e-01 : f32
    %792 = vector.broadcast %cst_253 : f32 to vector<2x96xf32>
    %793 = arith.mulf %792, %791 : vector<2x96xf32>
    %cst_254 = arith.constant 5.000000e-01 : f32
    %794 = vector.broadcast %cst_254 : f32 to vector<2x96xf32>
    %795 = arith.addf %793, %794 : vector<2x96xf32>
    %796 = vector.extract_strided_slice %787 {offsets = [0, 96], sizes = [2, 32], strides = [1, 1]} : vector<2x128xf32> to vector<2x32xf32>
    %797 = math.tanh %796 : vector<2x32xf32>
    %798 = vector.extract_strided_slice %774 {offsets = [0, 0], sizes = [2, 32], strides = [1, 1]} : vector<2x64xf32> to vector<2x32xf32>
    %799 = vector.extract_strided_slice %775 {offsets = [0, 0], sizes = [2, 32], strides = [1, 1]} : vector<2x64xf32> to vector<2x32xf32>
    %800 = vector.extract_strided_slice %795 {offsets = [0, 32], sizes = [2, 32], strides = [1, 1]} : vector<2x96xf32> to vector<2x32xf32>
    %801 = arith.mulf %800, %799 : vector<2x32xf32>
    %802 = vector.extract_strided_slice %795 {offsets = [0, 0], sizes = [2, 32], strides = [1, 1]} : vector<2x96xf32> to vector<2x32xf32>
    %803 = arith.mulf %802, %797 : vector<2x32xf32>
    %804 = arith.addf %801, %803 : vector<2x32xf32>
    %805 = vector.extract_strided_slice %795 {offsets = [0, 64], sizes = [2, 32], strides = [1, 1]} : vector<2x96xf32> to vector<2x32xf32>
    %806 = math.tanh %804 : vector<2x32xf32>
    %807 = arith.mulf %805, %806 : vector<2x32xf32>
    %c0_i32_255 = arith.constant 0 : i32
    %808 = arith.cmpi sge, %c11_i32, %c0_i32_255 : i32
    %c16_i32_256 = arith.constant 16 : i32
    %809 = arith.cmpi slt, %c11_i32, %c16_i32_256 : i32
    %810 = arith.andi %808, %809 : i1
    %811 = arith.select %810, %807, %798 : vector<2x32xf32>
    %812 = arith.select %810, %804, %799 : vector<2x32xf32>
    %813 = vector.extract_strided_slice %781 {offsets = [0, 128], sizes = [2, 128], strides = [1, 1]} : vector<2x256xf32> to vector<2x128xf32>
    %814 = vector.extract_strided_slice %813 {offsets = [0, 0], sizes = [2, 96], strides = [1, 1]} : vector<2x128xf32> to vector<2x96xf32>
    %cst_257 = arith.constant 5.000000e-01 : f32
    %815 = vector.broadcast %cst_257 : f32 to vector<2x96xf32>
    %816 = arith.mulf %815, %814 : vector<2x96xf32>
    %817 = math.tanh %816 : vector<2x96xf32>
    %cst_258 = arith.constant 5.000000e-01 : f32
    %818 = vector.broadcast %cst_258 : f32 to vector<2x96xf32>
    %819 = arith.mulf %818, %817 : vector<2x96xf32>
    %cst_259 = arith.constant 5.000000e-01 : f32
    %820 = vector.broadcast %cst_259 : f32 to vector<2x96xf32>
    %821 = arith.addf %819, %820 : vector<2x96xf32>
    %822 = vector.extract_strided_slice %813 {offsets = [0, 96], sizes = [2, 32], strides = [1, 1]} : vector<2x128xf32> to vector<2x32xf32>
    %823 = math.tanh %822 : vector<2x32xf32>
    %824 = vector.extract_strided_slice %774 {offsets = [0, 32], sizes = [2, 32], strides = [1, 1]} : vector<2x64xf32> to vector<2x32xf32>
    %825 = vector.extract_strided_slice %775 {offsets = [0, 32], sizes = [2, 32], strides = [1, 1]} : vector<2x64xf32> to vector<2x32xf32>
    %826 = vector.extract_strided_slice %821 {offsets = [0, 32], sizes = [2, 32], strides = [1, 1]} : vector<2x96xf32> to vector<2x32xf32>
    %827 = arith.mulf %826, %825 : vector<2x32xf32>
    %828 = vector.extract_strided_slice %821 {offsets = [0, 0], sizes = [2, 32], strides = [1, 1]} : vector<2x96xf32> to vector<2x32xf32>
    %829 = arith.mulf %828, %823 : vector<2x32xf32>
    %830 = arith.addf %827, %829 : vector<2x32xf32>
    %831 = vector.extract_strided_slice %821 {offsets = [0, 64], sizes = [2, 32], strides = [1, 1]} : vector<2x96xf32> to vector<2x32xf32>
    %832 = math.tanh %830 : vector<2x32xf32>
    %833 = arith.mulf %831, %832 : vector<2x32xf32>
    %c1_i32_260 = arith.constant 1 : i32
    %834 = arith.cmpi sge, %c11_i32, %c1_i32_260 : i32
    %c17_i32_261 = arith.constant 17 : i32
    %835 = arith.cmpi slt, %c11_i32, %c17_i32_261 : i32
    %836 = arith.andi %834, %835 : i1
    %837 = arith.select %836, %833, %824 : vector<2x32xf32>
    %838 = arith.select %836, %830, %825 : vector<2x32xf32>
    %839 = arith.extui %836 : i1 to i32
    %c0_i32_262 = arith.constant 0 : i32
    %840 = arith.cmpi ne, %839, %c0_i32_262 : i32
    scf.if %840 {
      %c1_i32_414 = arith.constant 1 : i32
      %1226 = arith.subi %c11_i32, %c1_i32_414 : i32
      %c0_i32_415 = arith.constant 0 : i32
      %1227 = arith.maxsi %1226, %c0_i32_415 : i32
      %c2_i32_416 = arith.constant 2 : i32
      %1228 = arith.muli %1227, %c2_i32_416 : i32
      %1229 = arith.index_cast %1228 : i32 to index
      %c0_417 = arith.constant 0 : index
      %1230 = vector.load %arg9[%1229, %c0_417] : memref<32x32xf32, #tpu.memory_space<vmem>>, vector<2x32xf32>
      tpu.vector_store %arg9[%1229, %c0_417], %833 {strides = array<i32>} : memref<32x32xf32, #tpu.memory_space<vmem>>, vector<2x32xf32>,
    } else {
    }
    %841 = tpu.concatenate %811, %837 in 1 : vector<2x32xf32>, vector<2x32xf32> -> vector<2x64xf32>
    %842 = tpu.concatenate %812, %838 in 1 : vector<2x32xf32>, vector<2x32xf32> -> vector<2x64xf32>
    %c12_i32 = arith.constant 12 : i32
    %843 = arith.truncf %841 : vector<2x64xf32> to vector<2x64xbf16>
    %c0_263 = arith.constant 0 : index
    %c0_264 = arith.constant 0 : index
    %844 = vector.load %arg3[%c0_263, %c0_264] : memref<64x256xbf16, #tpu.memory_space<vmem>>, vector<64x256xbf16>
    %cst_265 = arith.constant dense<0.000000e+00> : vector<2x256xf32>
    %845 = tpu.matmul %843, %844, %cst_265 {dimension_numbers = #tpu.dot_dimension_numbers<[1], [0], [0], [1], [0, 0, 1, 1], [], []>} : vector<2x64xbf16>, vector<64x256xbf16>, vector<2x256xf32> -> vector<2x256xf32>
    %c0_266 = arith.constant 0 : index
    %c0_267 = arith.constant 0 : index
    %846 = vector.load %arg4[%c0_266, %c0_267] : memref<1x256xf32, #tpu.memory_space<vmem>>, vector<1x256xf32>
    %847 = vector.broadcast %846 : vector<1x256xf32> to vector<2x256xf32>
    %848 = arith.addf %845, %847 : vector<2x256xf32>
    %c15_i32_268 = arith.constant 15 : i32
    %849 = arith.minsi %c12_i32, %c15_i32_268 : i32
    %c2_i32_269 = arith.constant 2 : i32
    %850 = arith.muli %849, %c2_i32_269 : i32
    %851 = arith.index_cast %850 : i32 to index
    %c0_270 = arith.constant 0 : index
    %852 = vector.load %arg8[%851, %c0_270] : memref<32x128xf32, #tpu.memory_space<vmem>>, vector<2x128xf32>
    %853 = vector.extract_strided_slice %848 {offsets = [0, 0], sizes = [2, 128], strides = [1, 1]} : vector<2x256xf32> to vector<2x128xf32>
    %854 = arith.addf %853, %852 : vector<2x128xf32>
    %855 = vector.extract_strided_slice %854 {offsets = [0, 0], sizes = [2, 96], strides = [1, 1]} : vector<2x128xf32> to vector<2x96xf32>
    %cst_271 = arith.constant 5.000000e-01 : f32
    %856 = vector.broadcast %cst_271 : f32 to vector<2x96xf32>
    %857 = arith.mulf %856, %855 : vector<2x96xf32>
    %858 = math.tanh %857 : vector<2x96xf32>
    %cst_272 = arith.constant 5.000000e-01 : f32
    %859 = vector.broadcast %cst_272 : f32 to vector<2x96xf32>
    %860 = arith.mulf %859, %858 : vector<2x96xf32>
    %cst_273 = arith.constant 5.000000e-01 : f32
    %861 = vector.broadcast %cst_273 : f32 to vector<2x96xf32>
    %862 = arith.addf %860, %861 : vector<2x96xf32>
    %863 = vector.extract_strided_slice %854 {offsets = [0, 96], sizes = [2, 32], strides = [1, 1]} : vector<2x128xf32> to vector<2x32xf32>
    %864 = math.tanh %863 : vector<2x32xf32>
    %865 = vector.extract_strided_slice %841 {offsets = [0, 0], sizes = [2, 32], strides = [1, 1]} : vector<2x64xf32> to vector<2x32xf32>
    %866 = vector.extract_strided_slice %842 {offsets = [0, 0], sizes = [2, 32], strides = [1, 1]} : vector<2x64xf32> to vector<2x32xf32>
    %867 = vector.extract_strided_slice %862 {offsets = [0, 32], sizes = [2, 32], strides = [1, 1]} : vector<2x96xf32> to vector<2x32xf32>
    %868 = arith.mulf %867, %866 : vector<2x32xf32>
    %869 = vector.extract_strided_slice %862 {offsets = [0, 0], sizes = [2, 32], strides = [1, 1]} : vector<2x96xf32> to vector<2x32xf32>
    %870 = arith.mulf %869, %864 : vector<2x32xf32>
    %871 = arith.addf %868, %870 : vector<2x32xf32>
    %872 = vector.extract_strided_slice %862 {offsets = [0, 64], sizes = [2, 32], strides = [1, 1]} : vector<2x96xf32> to vector<2x32xf32>
    %873 = math.tanh %871 : vector<2x32xf32>
    %874 = arith.mulf %872, %873 : vector<2x32xf32>
    %c0_i32_274 = arith.constant 0 : i32
    %875 = arith.cmpi sge, %c12_i32, %c0_i32_274 : i32
    %c16_i32_275 = arith.constant 16 : i32
    %876 = arith.cmpi slt, %c12_i32, %c16_i32_275 : i32
    %877 = arith.andi %875, %876 : i1
    %878 = arith.select %877, %874, %865 : vector<2x32xf32>
    %879 = arith.select %877, %871, %866 : vector<2x32xf32>
    %880 = vector.extract_strided_slice %848 {offsets = [0, 128], sizes = [2, 128], strides = [1, 1]} : vector<2x256xf32> to vector<2x128xf32>
    %881 = vector.extract_strided_slice %880 {offsets = [0, 0], sizes = [2, 96], strides = [1, 1]} : vector<2x128xf32> to vector<2x96xf32>
    %cst_276 = arith.constant 5.000000e-01 : f32
    %882 = vector.broadcast %cst_276 : f32 to vector<2x96xf32>
    %883 = arith.mulf %882, %881 : vector<2x96xf32>
    %884 = math.tanh %883 : vector<2x96xf32>
    %cst_277 = arith.constant 5.000000e-01 : f32
    %885 = vector.broadcast %cst_277 : f32 to vector<2x96xf32>
    %886 = arith.mulf %885, %884 : vector<2x96xf32>
    %cst_278 = arith.constant 5.000000e-01 : f32
    %887 = vector.broadcast %cst_278 : f32 to vector<2x96xf32>
    %888 = arith.addf %886, %887 : vector<2x96xf32>
    %889 = vector.extract_strided_slice %880 {offsets = [0, 96], sizes = [2, 32], strides = [1, 1]} : vector<2x128xf32> to vector<2x32xf32>
    %890 = math.tanh %889 : vector<2x32xf32>
    %891 = vector.extract_strided_slice %841 {offsets = [0, 32], sizes = [2, 32], strides = [1, 1]} : vector<2x64xf32> to vector<2x32xf32>
    %892 = vector.extract_strided_slice %842 {offsets = [0, 32], sizes = [2, 32], strides = [1, 1]} : vector<2x64xf32> to vector<2x32xf32>
    %893 = vector.extract_strided_slice %888 {offsets = [0, 32], sizes = [2, 32], strides = [1, 1]} : vector<2x96xf32> to vector<2x32xf32>
    %894 = arith.mulf %893, %892 : vector<2x32xf32>
    %895 = vector.extract_strided_slice %888 {offsets = [0, 0], sizes = [2, 32], strides = [1, 1]} : vector<2x96xf32> to vector<2x32xf32>
    %896 = arith.mulf %895, %890 : vector<2x32xf32>
    %897 = arith.addf %894, %896 : vector<2x32xf32>
    %898 = vector.extract_strided_slice %888 {offsets = [0, 64], sizes = [2, 32], strides = [1, 1]} : vector<2x96xf32> to vector<2x32xf32>
    %899 = math.tanh %897 : vector<2x32xf32>
    %900 = arith.mulf %898, %899 : vector<2x32xf32>
    %c1_i32_279 = arith.constant 1 : i32
    %901 = arith.cmpi sge, %c12_i32, %c1_i32_279 : i32
    %c17_i32_280 = arith.constant 17 : i32
    %902 = arith.cmpi slt, %c12_i32, %c17_i32_280 : i32
    %903 = arith.andi %901, %902 : i1
    %904 = arith.select %903, %900, %891 : vector<2x32xf32>
    %905 = arith.select %903, %897, %892 : vector<2x32xf32>
    %906 = arith.extui %903 : i1 to i32
    %c0_i32_281 = arith.constant 0 : i32
    %907 = arith.cmpi ne, %906, %c0_i32_281 : i32
    scf.if %907 {
      %c1_i32_414 = arith.constant 1 : i32
      %1226 = arith.subi %c12_i32, %c1_i32_414 : i32
      %c0_i32_415 = arith.constant 0 : i32
      %1227 = arith.maxsi %1226, %c0_i32_415 : i32
      %c2_i32_416 = arith.constant 2 : i32
      %1228 = arith.muli %1227, %c2_i32_416 : i32
      %1229 = arith.index_cast %1228 : i32 to index
      %c0_417 = arith.constant 0 : index
      %1230 = vector.load %arg9[%1229, %c0_417] : memref<32x32xf32, #tpu.memory_space<vmem>>, vector<2x32xf32>
      tpu.vector_store %arg9[%1229, %c0_417], %900 {strides = array<i32>} : memref<32x32xf32, #tpu.memory_space<vmem>>, vector<2x32xf32>,
    } else {
    }
    %908 = tpu.concatenate %878, %904 in 1 : vector<2x32xf32>, vector<2x32xf32> -> vector<2x64xf32>
    %909 = tpu.concatenate %879, %905 in 1 : vector<2x32xf32>, vector<2x32xf32> -> vector<2x64xf32>
    %c13_i32 = arith.constant 13 : i32
    %910 = arith.truncf %908 : vector<2x64xf32> to vector<2x64xbf16>
    %c0_282 = arith.constant 0 : index
    %c0_283 = arith.constant 0 : index
    %911 = vector.load %arg3[%c0_282, %c0_283] : memref<64x256xbf16, #tpu.memory_space<vmem>>, vector<64x256xbf16>
    %cst_284 = arith.constant dense<0.000000e+00> : vector<2x256xf32>
    %912 = tpu.matmul %910, %911, %cst_284 {dimension_numbers = #tpu.dot_dimension_numbers<[1], [0], [0], [1], [0, 0, 1, 1], [], []>} : vector<2x64xbf16>, vector<64x256xbf16>, vector<2x256xf32> -> vector<2x256xf32>
    %c0_285 = arith.constant 0 : index
    %c0_286 = arith.constant 0 : index
    %913 = vector.load %arg4[%c0_285, %c0_286] : memref<1x256xf32, #tpu.memory_space<vmem>>, vector<1x256xf32>
    %914 = vector.broadcast %913 : vector<1x256xf32> to vector<2x256xf32>
    %915 = arith.addf %912, %914 : vector<2x256xf32>
    %c15_i32_287 = arith.constant 15 : i32
    %916 = arith.minsi %c13_i32, %c15_i32_287 : i32
    %c2_i32_288 = arith.constant 2 : i32
    %917 = arith.muli %916, %c2_i32_288 : i32
    %918 = arith.index_cast %917 : i32 to index
    %c0_289 = arith.constant 0 : index
    %919 = vector.load %arg8[%918, %c0_289] : memref<32x128xf32, #tpu.memory_space<vmem>>, vector<2x128xf32>
    %920 = vector.extract_strided_slice %915 {offsets = [0, 0], sizes = [2, 128], strides = [1, 1]} : vector<2x256xf32> to vector<2x128xf32>
    %921 = arith.addf %920, %919 : vector<2x128xf32>
    %922 = vector.extract_strided_slice %921 {offsets = [0, 0], sizes = [2, 96], strides = [1, 1]} : vector<2x128xf32> to vector<2x96xf32>
    %cst_290 = arith.constant 5.000000e-01 : f32
    %923 = vector.broadcast %cst_290 : f32 to vector<2x96xf32>
    %924 = arith.mulf %923, %922 : vector<2x96xf32>
    %925 = math.tanh %924 : vector<2x96xf32>
    %cst_291 = arith.constant 5.000000e-01 : f32
    %926 = vector.broadcast %cst_291 : f32 to vector<2x96xf32>
    %927 = arith.mulf %926, %925 : vector<2x96xf32>
    %cst_292 = arith.constant 5.000000e-01 : f32
    %928 = vector.broadcast %cst_292 : f32 to vector<2x96xf32>
    %929 = arith.addf %927, %928 : vector<2x96xf32>
    %930 = vector.extract_strided_slice %921 {offsets = [0, 96], sizes = [2, 32], strides = [1, 1]} : vector<2x128xf32> to vector<2x32xf32>
    %931 = math.tanh %930 : vector<2x32xf32>
    %932 = vector.extract_strided_slice %908 {offsets = [0, 0], sizes = [2, 32], strides = [1, 1]} : vector<2x64xf32> to vector<2x32xf32>
    %933 = vector.extract_strided_slice %909 {offsets = [0, 0], sizes = [2, 32], strides = [1, 1]} : vector<2x64xf32> to vector<2x32xf32>
    %934 = vector.extract_strided_slice %929 {offsets = [0, 32], sizes = [2, 32], strides = [1, 1]} : vector<2x96xf32> to vector<2x32xf32>
    %935 = arith.mulf %934, %933 : vector<2x32xf32>
    %936 = vector.extract_strided_slice %929 {offsets = [0, 0], sizes = [2, 32], strides = [1, 1]} : vector<2x96xf32> to vector<2x32xf32>
    %937 = arith.mulf %936, %931 : vector<2x32xf32>
    %938 = arith.addf %935, %937 : vector<2x32xf32>
    %939 = vector.extract_strided_slice %929 {offsets = [0, 64], sizes = [2, 32], strides = [1, 1]} : vector<2x96xf32> to vector<2x32xf32>
    %940 = math.tanh %938 : vector<2x32xf32>
    %941 = arith.mulf %939, %940 : vector<2x32xf32>
    %c0_i32_293 = arith.constant 0 : i32
    %942 = arith.cmpi sge, %c13_i32, %c0_i32_293 : i32
    %c16_i32_294 = arith.constant 16 : i32
    %943 = arith.cmpi slt, %c13_i32, %c16_i32_294 : i32
    %944 = arith.andi %942, %943 : i1
    %945 = arith.select %944, %941, %932 : vector<2x32xf32>
    %946 = arith.select %944, %938, %933 : vector<2x32xf32>
    %947 = vector.extract_strided_slice %915 {offsets = [0, 128], sizes = [2, 128], strides = [1, 1]} : vector<2x256xf32> to vector<2x128xf32>
    %948 = vector.extract_strided_slice %947 {offsets = [0, 0], sizes = [2, 96], strides = [1, 1]} : vector<2x128xf32> to vector<2x96xf32>
    %cst_295 = arith.constant 5.000000e-01 : f32
    %949 = vector.broadcast %cst_295 : f32 to vector<2x96xf32>
    %950 = arith.mulf %949, %948 : vector<2x96xf32>
    %951 = math.tanh %950 : vector<2x96xf32>
    %cst_296 = arith.constant 5.000000e-01 : f32
    %952 = vector.broadcast %cst_296 : f32 to vector<2x96xf32>
    %953 = arith.mulf %952, %951 : vector<2x96xf32>
    %cst_297 = arith.constant 5.000000e-01 : f32
    %954 = vector.broadcast %cst_297 : f32 to vector<2x96xf32>
    %955 = arith.addf %953, %954 : vector<2x96xf32>
    %956 = vector.extract_strided_slice %947 {offsets = [0, 96], sizes = [2, 32], strides = [1, 1]} : vector<2x128xf32> to vector<2x32xf32>
    %957 = math.tanh %956 : vector<2x32xf32>
    %958 = vector.extract_strided_slice %908 {offsets = [0, 32], sizes = [2, 32], strides = [1, 1]} : vector<2x64xf32> to vector<2x32xf32>
    %959 = vector.extract_strided_slice %909 {offsets = [0, 32], sizes = [2, 32], strides = [1, 1]} : vector<2x64xf32> to vector<2x32xf32>
    %960 = vector.extract_strided_slice %955 {offsets = [0, 32], sizes = [2, 32], strides = [1, 1]} : vector<2x96xf32> to vector<2x32xf32>
    %961 = arith.mulf %960, %959 : vector<2x32xf32>
    %962 = vector.extract_strided_slice %955 {offsets = [0, 0], sizes = [2, 32], strides = [1, 1]} : vector<2x96xf32> to vector<2x32xf32>
    %963 = arith.mulf %962, %957 : vector<2x32xf32>
    %964 = arith.addf %961, %963 : vector<2x32xf32>
    %965 = vector.extract_strided_slice %955 {offsets = [0, 64], sizes = [2, 32], strides = [1, 1]} : vector<2x96xf32> to vector<2x32xf32>
    %966 = math.tanh %964 : vector<2x32xf32>
    %967 = arith.mulf %965, %966 : vector<2x32xf32>
    %c1_i32_298 = arith.constant 1 : i32
    %968 = arith.cmpi sge, %c13_i32, %c1_i32_298 : i32
    %c17_i32_299 = arith.constant 17 : i32
    %969 = arith.cmpi slt, %c13_i32, %c17_i32_299 : i32
    %970 = arith.andi %968, %969 : i1
    %971 = arith.select %970, %967, %958 : vector<2x32xf32>
    %972 = arith.select %970, %964, %959 : vector<2x32xf32>
    %973 = arith.extui %970 : i1 to i32
    %c0_i32_300 = arith.constant 0 : i32
    %974 = arith.cmpi ne, %973, %c0_i32_300 : i32
    scf.if %974 {
      %c1_i32_414 = arith.constant 1 : i32
      %1226 = arith.subi %c13_i32, %c1_i32_414 : i32
      %c0_i32_415 = arith.constant 0 : i32
      %1227 = arith.maxsi %1226, %c0_i32_415 : i32
      %c2_i32_416 = arith.constant 2 : i32
      %1228 = arith.muli %1227, %c2_i32_416 : i32
      %1229 = arith.index_cast %1228 : i32 to index
      %c0_417 = arith.constant 0 : index
      %1230 = vector.load %arg9[%1229, %c0_417] : memref<32x32xf32, #tpu.memory_space<vmem>>, vector<2x32xf32>
      tpu.vector_store %arg9[%1229, %c0_417], %967 {strides = array<i32>} : memref<32x32xf32, #tpu.memory_space<vmem>>, vector<2x32xf32>,
    } else {
    }
    %975 = tpu.concatenate %945, %971 in 1 : vector<2x32xf32>, vector<2x32xf32> -> vector<2x64xf32>
    %976 = tpu.concatenate %946, %972 in 1 : vector<2x32xf32>, vector<2x32xf32> -> vector<2x64xf32>
    %c14_i32 = arith.constant 14 : i32
    %977 = arith.truncf %975 : vector<2x64xf32> to vector<2x64xbf16>
    %c0_301 = arith.constant 0 : index
    %c0_302 = arith.constant 0 : index
    %978 = vector.load %arg3[%c0_301, %c0_302] : memref<64x256xbf16, #tpu.memory_space<vmem>>, vector<64x256xbf16>
    %cst_303 = arith.constant dense<0.000000e+00> : vector<2x256xf32>
    %979 = tpu.matmul %977, %978, %cst_303 {dimension_numbers = #tpu.dot_dimension_numbers<[1], [0], [0], [1], [0, 0, 1, 1], [], []>} : vector<2x64xbf16>, vector<64x256xbf16>, vector<2x256xf32> -> vector<2x256xf32>
    %c0_304 = arith.constant 0 : index
    %c0_305 = arith.constant 0 : index
    %980 = vector.load %arg4[%c0_304, %c0_305] : memref<1x256xf32, #tpu.memory_space<vmem>>, vector<1x256xf32>
    %981 = vector.broadcast %980 : vector<1x256xf32> to vector<2x256xf32>
    %982 = arith.addf %979, %981 : vector<2x256xf32>
    %c15_i32_306 = arith.constant 15 : i32
    %983 = arith.minsi %c14_i32, %c15_i32_306 : i32
    %c2_i32_307 = arith.constant 2 : i32
    %984 = arith.muli %983, %c2_i32_307 : i32
    %985 = arith.index_cast %984 : i32 to index
    %c0_308 = arith.constant 0 : index
    %986 = vector.load %arg8[%985, %c0_308] : memref<32x128xf32, #tpu.memory_space<vmem>>, vector<2x128xf32>
    %987 = vector.extract_strided_slice %982 {offsets = [0, 0], sizes = [2, 128], strides = [1, 1]} : vector<2x256xf32> to vector<2x128xf32>
    %988 = arith.addf %987, %986 : vector<2x128xf32>
    %989 = vector.extract_strided_slice %988 {offsets = [0, 0], sizes = [2, 96], strides = [1, 1]} : vector<2x128xf32> to vector<2x96xf32>
    %cst_309 = arith.constant 5.000000e-01 : f32
    %990 = vector.broadcast %cst_309 : f32 to vector<2x96xf32>
    %991 = arith.mulf %990, %989 : vector<2x96xf32>
    %992 = math.tanh %991 : vector<2x96xf32>
    %cst_310 = arith.constant 5.000000e-01 : f32
    %993 = vector.broadcast %cst_310 : f32 to vector<2x96xf32>
    %994 = arith.mulf %993, %992 : vector<2x96xf32>
    %cst_311 = arith.constant 5.000000e-01 : f32
    %995 = vector.broadcast %cst_311 : f32 to vector<2x96xf32>
    %996 = arith.addf %994, %995 : vector<2x96xf32>
    %997 = vector.extract_strided_slice %988 {offsets = [0, 96], sizes = [2, 32], strides = [1, 1]} : vector<2x128xf32> to vector<2x32xf32>
    %998 = math.tanh %997 : vector<2x32xf32>
    %999 = vector.extract_strided_slice %975 {offsets = [0, 0], sizes = [2, 32], strides = [1, 1]} : vector<2x64xf32> to vector<2x32xf32>
    %1000 = vector.extract_strided_slice %976 {offsets = [0, 0], sizes = [2, 32], strides = [1, 1]} : vector<2x64xf32> to vector<2x32xf32>
    %1001 = vector.extract_strided_slice %996 {offsets = [0, 32], sizes = [2, 32], strides = [1, 1]} : vector<2x96xf32> to vector<2x32xf32>
    %1002 = arith.mulf %1001, %1000 : vector<2x32xf32>
    %1003 = vector.extract_strided_slice %996 {offsets = [0, 0], sizes = [2, 32], strides = [1, 1]} : vector<2x96xf32> to vector<2x32xf32>
    %1004 = arith.mulf %1003, %998 : vector<2x32xf32>
    %1005 = arith.addf %1002, %1004 : vector<2x32xf32>
    %1006 = vector.extract_strided_slice %996 {offsets = [0, 64], sizes = [2, 32], strides = [1, 1]} : vector<2x96xf32> to vector<2x32xf32>
    %1007 = math.tanh %1005 : vector<2x32xf32>
    %1008 = arith.mulf %1006, %1007 : vector<2x32xf32>
    %c0_i32_312 = arith.constant 0 : i32
    %1009 = arith.cmpi sge, %c14_i32, %c0_i32_312 : i32
    %c16_i32_313 = arith.constant 16 : i32
    %1010 = arith.cmpi slt, %c14_i32, %c16_i32_313 : i32
    %1011 = arith.andi %1009, %1010 : i1
    %1012 = arith.select %1011, %1008, %999 : vector<2x32xf32>
    %1013 = arith.select %1011, %1005, %1000 : vector<2x32xf32>
    %1014 = vector.extract_strided_slice %982 {offsets = [0, 128], sizes = [2, 128], strides = [1, 1]} : vector<2x256xf32> to vector<2x128xf32>
    %1015 = vector.extract_strided_slice %1014 {offsets = [0, 0], sizes = [2, 96], strides = [1, 1]} : vector<2x128xf32> to vector<2x96xf32>
    %cst_314 = arith.constant 5.000000e-01 : f32
    %1016 = vector.broadcast %cst_314 : f32 to vector<2x96xf32>
    %1017 = arith.mulf %1016, %1015 : vector<2x96xf32>
    %1018 = math.tanh %1017 : vector<2x96xf32>
    %cst_315 = arith.constant 5.000000e-01 : f32
    %1019 = vector.broadcast %cst_315 : f32 to vector<2x96xf32>
    %1020 = arith.mulf %1019, %1018 : vector<2x96xf32>
    %cst_316 = arith.constant 5.000000e-01 : f32
    %1021 = vector.broadcast %cst_316 : f32 to vector<2x96xf32>
    %1022 = arith.addf %1020, %1021 : vector<2x96xf32>
    %1023 = vector.extract_strided_slice %1014 {offsets = [0, 96], sizes = [2, 32], strides = [1, 1]} : vector<2x128xf32> to vector<2x32xf32>
    %1024 = math.tanh %1023 : vector<2x32xf32>
    %1025 = vector.extract_strided_slice %975 {offsets = [0, 32], sizes = [2, 32], strides = [1, 1]} : vector<2x64xf32> to vector<2x32xf32>
    %1026 = vector.extract_strided_slice %976 {offsets = [0, 32], sizes = [2, 32], strides = [1, 1]} : vector<2x64xf32> to vector<2x32xf32>
    %1027 = vector.extract_strided_slice %1022 {offsets = [0, 32], sizes = [2, 32], strides = [1, 1]} : vector<2x96xf32> to vector<2x32xf32>
    %1028 = arith.mulf %1027, %1026 : vector<2x32xf32>
    %1029 = vector.extract_strided_slice %1022 {offsets = [0, 0], sizes = [2, 32], strides = [1, 1]} : vector<2x96xf32> to vector<2x32xf32>
    %1030 = arith.mulf %1029, %1024 : vector<2x32xf32>
    %1031 = arith.addf %1028, %1030 : vector<2x32xf32>
    %1032 = vector.extract_strided_slice %1022 {offsets = [0, 64], sizes = [2, 32], strides = [1, 1]} : vector<2x96xf32> to vector<2x32xf32>
    %1033 = math.tanh %1031 : vector<2x32xf32>
    %1034 = arith.mulf %1032, %1033 : vector<2x32xf32>
    %c1_i32_317 = arith.constant 1 : i32
    %1035 = arith.cmpi sge, %c14_i32, %c1_i32_317 : i32
    %c17_i32_318 = arith.constant 17 : i32
    %1036 = arith.cmpi slt, %c14_i32, %c17_i32_318 : i32
    %1037 = arith.andi %1035, %1036 : i1
    %1038 = arith.select %1037, %1034, %1025 : vector<2x32xf32>
    %1039 = arith.select %1037, %1031, %1026 : vector<2x32xf32>
    %1040 = arith.extui %1037 : i1 to i32
    %c0_i32_319 = arith.constant 0 : i32
    %1041 = arith.cmpi ne, %1040, %c0_i32_319 : i32
    scf.if %1041 {
      %c1_i32_414 = arith.constant 1 : i32
      %1226 = arith.subi %c14_i32, %c1_i32_414 : i32
      %c0_i32_415 = arith.constant 0 : i32
      %1227 = arith.maxsi %1226, %c0_i32_415 : i32
      %c2_i32_416 = arith.constant 2 : i32
      %1228 = arith.muli %1227, %c2_i32_416 : i32
      %1229 = arith.index_cast %1228 : i32 to index
      %c0_417 = arith.constant 0 : index
      %1230 = vector.load %arg9[%1229, %c0_417] : memref<32x32xf32, #tpu.memory_space<vmem>>, vector<2x32xf32>
      tpu.vector_store %arg9[%1229, %c0_417], %1034 {strides = array<i32>} : memref<32x32xf32, #tpu.memory_space<vmem>>, vector<2x32xf32>,
    } else {
    }
    %1042 = tpu.concatenate %1012, %1038 in 1 : vector<2x32xf32>, vector<2x32xf32> -> vector<2x64xf32>
    %1043 = tpu.concatenate %1013, %1039 in 1 : vector<2x32xf32>, vector<2x32xf32> -> vector<2x64xf32>
    %c15_i32_320 = arith.constant 15 : i32
    %1044 = arith.truncf %1042 : vector<2x64xf32> to vector<2x64xbf16>
    %c0_321 = arith.constant 0 : index
    %c0_322 = arith.constant 0 : index
    %1045 = vector.load %arg3[%c0_321, %c0_322] : memref<64x256xbf16, #tpu.memory_space<vmem>>, vector<64x256xbf16>
    %cst_323 = arith.constant dense<0.000000e+00> : vector<2x256xf32>
    %1046 = tpu.matmul %1044, %1045, %cst_323 {dimension_numbers = #tpu.dot_dimension_numbers<[1], [0], [0], [1], [0, 0, 1, 1], [], []>} : vector<2x64xbf16>, vector<64x256xbf16>, vector<2x256xf32> -> vector<2x256xf32>
    %c0_324 = arith.constant 0 : index
    %c0_325 = arith.constant 0 : index
    %1047 = vector.load %arg4[%c0_324, %c0_325] : memref<1x256xf32, #tpu.memory_space<vmem>>, vector<1x256xf32>
    %1048 = vector.broadcast %1047 : vector<1x256xf32> to vector<2x256xf32>
    %1049 = arith.addf %1046, %1048 : vector<2x256xf32>
    %c15_i32_326 = arith.constant 15 : i32
    %1050 = arith.minsi %c15_i32_320, %c15_i32_326 : i32
    %c2_i32_327 = arith.constant 2 : i32
    %1051 = arith.muli %1050, %c2_i32_327 : i32
    %1052 = arith.index_cast %1051 : i32 to index
    %c0_328 = arith.constant 0 : index
    %1053 = vector.load %arg8[%1052, %c0_328] : memref<32x128xf32, #tpu.memory_space<vmem>>, vector<2x128xf32>
    %1054 = vector.extract_strided_slice %1049 {offsets = [0, 0], sizes = [2, 128], strides = [1, 1]} : vector<2x256xf32> to vector<2x128xf32>
    %1055 = arith.addf %1054, %1053 : vector<2x128xf32>
    %1056 = vector.extract_strided_slice %1055 {offsets = [0, 0], sizes = [2, 96], strides = [1, 1]} : vector<2x128xf32> to vector<2x96xf32>
    %cst_329 = arith.constant 5.000000e-01 : f32
    %1057 = vector.broadcast %cst_329 : f32 to vector<2x96xf32>
    %1058 = arith.mulf %1057, %1056 : vector<2x96xf32>
    %1059 = math.tanh %1058 : vector<2x96xf32>
    %cst_330 = arith.constant 5.000000e-01 : f32
    %1060 = vector.broadcast %cst_330 : f32 to vector<2x96xf32>
    %1061 = arith.mulf %1060, %1059 : vector<2x96xf32>
    %cst_331 = arith.constant 5.000000e-01 : f32
    %1062 = vector.broadcast %cst_331 : f32 to vector<2x96xf32>
    %1063 = arith.addf %1061, %1062 : vector<2x96xf32>
    %1064 = vector.extract_strided_slice %1055 {offsets = [0, 96], sizes = [2, 32], strides = [1, 1]} : vector<2x128xf32> to vector<2x32xf32>
    %1065 = math.tanh %1064 : vector<2x32xf32>
    %1066 = vector.extract_strided_slice %1042 {offsets = [0, 0], sizes = [2, 32], strides = [1, 1]} : vector<2x64xf32> to vector<2x32xf32>
    %1067 = vector.extract_strided_slice %1043 {offsets = [0, 0], sizes = [2, 32], strides = [1, 1]} : vector<2x64xf32> to vector<2x32xf32>
    %1068 = vector.extract_strided_slice %1063 {offsets = [0, 32], sizes = [2, 32], strides = [1, 1]} : vector<2x96xf32> to vector<2x32xf32>
    %1069 = arith.mulf %1068, %1067 : vector<2x32xf32>
    %1070 = vector.extract_strided_slice %1063 {offsets = [0, 0], sizes = [2, 32], strides = [1, 1]} : vector<2x96xf32> to vector<2x32xf32>
    %1071 = arith.mulf %1070, %1065 : vector<2x32xf32>
    %1072 = arith.addf %1069, %1071 : vector<2x32xf32>
    %1073 = vector.extract_strided_slice %1063 {offsets = [0, 64], sizes = [2, 32], strides = [1, 1]} : vector<2x96xf32> to vector<2x32xf32>
    %1074 = math.tanh %1072 : vector<2x32xf32>
    %1075 = arith.mulf %1073, %1074 : vector<2x32xf32>
    %c0_i32_332 = arith.constant 0 : i32
    %1076 = arith.cmpi sge, %c15_i32_320, %c0_i32_332 : i32
    %c16_i32_333 = arith.constant 16 : i32
    %1077 = arith.cmpi slt, %c15_i32_320, %c16_i32_333 : i32
    %1078 = arith.andi %1076, %1077 : i1
    %1079 = arith.select %1078, %1075, %1066 : vector<2x32xf32>
    %1080 = arith.select %1078, %1072, %1067 : vector<2x32xf32>
    %1081 = vector.extract_strided_slice %1049 {offsets = [0, 128], sizes = [2, 128], strides = [1, 1]} : vector<2x256xf32> to vector<2x128xf32>
    %1082 = vector.extract_strided_slice %1081 {offsets = [0, 0], sizes = [2, 96], strides = [1, 1]} : vector<2x128xf32> to vector<2x96xf32>
    %cst_334 = arith.constant 5.000000e-01 : f32
    %1083 = vector.broadcast %cst_334 : f32 to vector<2x96xf32>
    %1084 = arith.mulf %1083, %1082 : vector<2x96xf32>
    %1085 = math.tanh %1084 : vector<2x96xf32>
    %cst_335 = arith.constant 5.000000e-01 : f32
    %1086 = vector.broadcast %cst_335 : f32 to vector<2x96xf32>
    %1087 = arith.mulf %1086, %1085 : vector<2x96xf32>
    %cst_336 = arith.constant 5.000000e-01 : f32
    %1088 = vector.broadcast %cst_336 : f32 to vector<2x96xf32>
    %1089 = arith.addf %1087, %1088 : vector<2x96xf32>
    %1090 = vector.extract_strided_slice %1081 {offsets = [0, 96], sizes = [2, 32], strides = [1, 1]} : vector<2x128xf32> to vector<2x32xf32>
    %1091 = math.tanh %1090 : vector<2x32xf32>
    %1092 = vector.extract_strided_slice %1042 {offsets = [0, 32], sizes = [2, 32], strides = [1, 1]} : vector<2x64xf32> to vector<2x32xf32>
    %1093 = vector.extract_strided_slice %1043 {offsets = [0, 32], sizes = [2, 32], strides = [1, 1]} : vector<2x64xf32> to vector<2x32xf32>
    %1094 = vector.extract_strided_slice %1089 {offsets = [0, 32], sizes = [2, 32], strides = [1, 1]} : vector<2x96xf32> to vector<2x32xf32>
    %1095 = arith.mulf %1094, %1093 : vector<2x32xf32>
    %1096 = vector.extract_strided_slice %1089 {offsets = [0, 0], sizes = [2, 32], strides = [1, 1]} : vector<2x96xf32> to vector<2x32xf32>
    %1097 = arith.mulf %1096, %1091 : vector<2x32xf32>
    %1098 = arith.addf %1095, %1097 : vector<2x32xf32>
    %1099 = vector.extract_strided_slice %1089 {offsets = [0, 64], sizes = [2, 32], strides = [1, 1]} : vector<2x96xf32> to vector<2x32xf32>
    %1100 = math.tanh %1098 : vector<2x32xf32>
    %1101 = arith.mulf %1099, %1100 : vector<2x32xf32>
    %c1_i32_337 = arith.constant 1 : i32
    %1102 = arith.cmpi sge, %c15_i32_320, %c1_i32_337 : i32
    %c17_i32_338 = arith.constant 17 : i32
    %1103 = arith.cmpi slt, %c15_i32_320, %c17_i32_338 : i32
    %1104 = arith.andi %1102, %1103 : i1
    %1105 = arith.select %1104, %1101, %1092 : vector<2x32xf32>
    %1106 = arith.select %1104, %1098, %1093 : vector<2x32xf32>
    %1107 = arith.extui %1104 : i1 to i32
    %c0_i32_339 = arith.constant 0 : i32
    %1108 = arith.cmpi ne, %1107, %c0_i32_339 : i32
    scf.if %1108 {
      %c1_i32_414 = arith.constant 1 : i32
      %1226 = arith.subi %c15_i32_320, %c1_i32_414 : i32
      %c0_i32_415 = arith.constant 0 : i32
      %1227 = arith.maxsi %1226, %c0_i32_415 : i32
      %c2_i32_416 = arith.constant 2 : i32
      %1228 = arith.muli %1227, %c2_i32_416 : i32
      %1229 = arith.index_cast %1228 : i32 to index
      %c0_417 = arith.constant 0 : index
      %1230 = vector.load %arg9[%1229, %c0_417] : memref<32x32xf32, #tpu.memory_space<vmem>>, vector<2x32xf32>
      tpu.vector_store %arg9[%1229, %c0_417], %1101 {strides = array<i32>} : memref<32x32xf32, #tpu.memory_space<vmem>>, vector<2x32xf32>,
    } else {
    }
    %1109 = tpu.concatenate %1079, %1105 in 1 : vector<2x32xf32>, vector<2x32xf32> -> vector<2x64xf32>
    %1110 = tpu.concatenate %1080, %1106 in 1 : vector<2x32xf32>, vector<2x32xf32> -> vector<2x64xf32>
    %c16_i32_340 = arith.constant 16 : i32
    %1111 = arith.truncf %1109 : vector<2x64xf32> to vector<2x64xbf16>
    %c0_341 = arith.constant 0 : index
    %c0_342 = arith.constant 0 : index
    %1112 = vector.load %arg3[%c0_341, %c0_342] : memref<64x256xbf16, #tpu.memory_space<vmem>>, vector<64x256xbf16>
    %cst_343 = arith.constant dense<0.000000e+00> : vector<2x256xf32>
    %1113 = tpu.matmul %1111, %1112, %cst_343 {dimension_numbers = #tpu.dot_dimension_numbers<[1], [0], [0], [1], [0, 0, 1, 1], [], []>} : vector<2x64xbf16>, vector<64x256xbf16>, vector<2x256xf32> -> vector<2x256xf32>
    %c0_344 = arith.constant 0 : index
    %c0_345 = arith.constant 0 : index
    %1114 = vector.load %arg4[%c0_344, %c0_345] : memref<1x256xf32, #tpu.memory_space<vmem>>, vector<1x256xf32>
    %1115 = vector.broadcast %1114 : vector<1x256xf32> to vector<2x256xf32>
    %1116 = arith.addf %1113, %1115 : vector<2x256xf32>
    %c15_i32_346 = arith.constant 15 : i32
    %1117 = arith.minsi %c16_i32_340, %c15_i32_346 : i32
    %c2_i32_347 = arith.constant 2 : i32
    %1118 = arith.muli %1117, %c2_i32_347 : i32
    %1119 = arith.index_cast %1118 : i32 to index
    %c0_348 = arith.constant 0 : index
    %1120 = vector.load %arg8[%1119, %c0_348] : memref<32x128xf32, #tpu.memory_space<vmem>>, vector<2x128xf32>
    %1121 = vector.extract_strided_slice %1116 {offsets = [0, 0], sizes = [2, 128], strides = [1, 1]} : vector<2x256xf32> to vector<2x128xf32>
    %1122 = arith.addf %1121, %1120 : vector<2x128xf32>
    %1123 = vector.extract_strided_slice %1122 {offsets = [0, 0], sizes = [2, 96], strides = [1, 1]} : vector<2x128xf32> to vector<2x96xf32>
    %cst_349 = arith.constant 5.000000e-01 : f32
    %1124 = vector.broadcast %cst_349 : f32 to vector<2x96xf32>
    %1125 = arith.mulf %1124, %1123 : vector<2x96xf32>
    %1126 = math.tanh %1125 : vector<2x96xf32>
    %cst_350 = arith.constant 5.000000e-01 : f32
    %1127 = vector.broadcast %cst_350 : f32 to vector<2x96xf32>
    %1128 = arith.mulf %1127, %1126 : vector<2x96xf32>
    %cst_351 = arith.constant 5.000000e-01 : f32
    %1129 = vector.broadcast %cst_351 : f32 to vector<2x96xf32>
    %1130 = arith.addf %1128, %1129 : vector<2x96xf32>
    %1131 = vector.extract_strided_slice %1122 {offsets = [0, 96], sizes = [2, 32], strides = [1, 1]} : vector<2x128xf32> to vector<2x32xf32>
    %1132 = math.tanh %1131 : vector<2x32xf32>
    %1133 = vector.extract_strided_slice %1109 {offsets = [0, 0], sizes = [2, 32], strides = [1, 1]} : vector<2x64xf32> to vector<2x32xf32>
    %1134 = vector.extract_strided_slice %1110 {offsets = [0, 0], sizes = [2, 32], strides = [1, 1]} : vector<2x64xf32> to vector<2x32xf32>
    %1135 = vector.extract_strided_slice %1130 {offsets = [0, 32], sizes = [2, 32], strides = [1, 1]} : vector<2x96xf32> to vector<2x32xf32>
    %1136 = arith.mulf %1135, %1134 : vector<2x32xf32>
    %1137 = vector.extract_strided_slice %1130 {offsets = [0, 0], sizes = [2, 32], strides = [1, 1]} : vector<2x96xf32> to vector<2x32xf32>
    %1138 = arith.mulf %1137, %1132 : vector<2x32xf32>
    %1139 = arith.addf %1136, %1138 : vector<2x32xf32>
    %1140 = vector.extract_strided_slice %1130 {offsets = [0, 64], sizes = [2, 32], strides = [1, 1]} : vector<2x96xf32> to vector<2x32xf32>
    %1141 = math.tanh %1139 : vector<2x32xf32>
    %1142 = arith.mulf %1140, %1141 : vector<2x32xf32>
    %c0_i32_352 = arith.constant 0 : i32
    %1143 = arith.cmpi sge, %c16_i32_340, %c0_i32_352 : i32
    %c16_i32_353 = arith.constant 16 : i32
    %1144 = arith.cmpi slt, %c16_i32_340, %c16_i32_353 : i32
    %1145 = arith.andi %1143, %1144 : i1
    %1146 = arith.select %1145, %1142, %1133 : vector<2x32xf32>
    %1147 = arith.select %1145, %1139, %1134 : vector<2x32xf32>
    %1148 = vector.extract_strided_slice %1116 {offsets = [0, 128], sizes = [2, 128], strides = [1, 1]} : vector<2x256xf32> to vector<2x128xf32>
    %1149 = vector.extract_strided_slice %1148 {offsets = [0, 0], sizes = [2, 96], strides = [1, 1]} : vector<2x128xf32> to vector<2x96xf32>
    %cst_354 = arith.constant 5.000000e-01 : f32
    %1150 = vector.broadcast %cst_354 : f32 to vector<2x96xf32>
    %1151 = arith.mulf %1150, %1149 : vector<2x96xf32>
    %1152 = math.tanh %1151 : vector<2x96xf32>
    %cst_355 = arith.constant 5.000000e-01 : f32
    %1153 = vector.broadcast %cst_355 : f32 to vector<2x96xf32>
    %1154 = arith.mulf %1153, %1152 : vector<2x96xf32>
    %cst_356 = arith.constant 5.000000e-01 : f32
    %1155 = vector.broadcast %cst_356 : f32 to vector<2x96xf32>
    %1156 = arith.addf %1154, %1155 : vector<2x96xf32>
    %1157 = vector.extract_strided_slice %1148 {offsets = [0, 96], sizes = [2, 32], strides = [1, 1]} : vector<2x128xf32> to vector<2x32xf32>
    %1158 = math.tanh %1157 : vector<2x32xf32>
    %1159 = vector.extract_strided_slice %1109 {offsets = [0, 32], sizes = [2, 32], strides = [1, 1]} : vector<2x64xf32> to vector<2x32xf32>
    %1160 = vector.extract_strided_slice %1110 {offsets = [0, 32], sizes = [2, 32], strides = [1, 1]} : vector<2x64xf32> to vector<2x32xf32>
    %1161 = vector.extract_strided_slice %1156 {offsets = [0, 32], sizes = [2, 32], strides = [1, 1]} : vector<2x96xf32> to vector<2x32xf32>
    %1162 = arith.mulf %1161, %1160 : vector<2x32xf32>
    %1163 = vector.extract_strided_slice %1156 {offsets = [0, 0], sizes = [2, 32], strides = [1, 1]} : vector<2x96xf32> to vector<2x32xf32>
    %1164 = arith.mulf %1163, %1158 : vector<2x32xf32>
    %1165 = arith.addf %1162, %1164 : vector<2x32xf32>
    %1166 = vector.extract_strided_slice %1156 {offsets = [0, 64], sizes = [2, 32], strides = [1, 1]} : vector<2x96xf32> to vector<2x32xf32>
    %1167 = math.tanh %1165 : vector<2x32xf32>
    %1168 = arith.mulf %1166, %1167 : vector<2x32xf32>
    %c1_i32_357 = arith.constant 1 : i32
    %1169 = arith.cmpi sge, %c16_i32_340, %c1_i32_357 : i32
    %c17_i32_358 = arith.constant 17 : i32
    %1170 = arith.cmpi slt, %c16_i32_340, %c17_i32_358 : i32
    %1171 = arith.andi %1169, %1170 : i1
    %1172 = arith.select %1171, %1168, %1159 : vector<2x32xf32>
    %1173 = arith.select %1171, %1165, %1160 : vector<2x32xf32>
    %1174 = arith.extui %1171 : i1 to i32
    %c0_i32_359 = arith.constant 0 : i32
    %1175 = arith.cmpi ne, %1174, %c0_i32_359 : i32
    scf.if %1175 {
      %c1_i32_414 = arith.constant 1 : i32
      %1226 = arith.subi %c16_i32_340, %c1_i32_414 : i32
      %c0_i32_415 = arith.constant 0 : i32
      %1227 = arith.maxsi %1226, %c0_i32_415 : i32
      %c2_i32_416 = arith.constant 2 : i32
      %1228 = arith.muli %1227, %c2_i32_416 : i32
      %1229 = arith.index_cast %1228 : i32 to index
      %c0_417 = arith.constant 0 : index
      %1230 = vector.load %arg9[%1229, %c0_417] : memref<32x32xf32, #tpu.memory_space<vmem>>, vector<2x32xf32>
      tpu.vector_store %arg9[%1229, %c0_417], %1168 {strides = array<i32>} : memref<32x32xf32, #tpu.memory_space<vmem>>, vector<2x32xf32>,
    } else {
    }
    %1176 = tpu.concatenate %1146, %1172 in 1 : vector<2x32xf32>, vector<2x32xf32> -> vector<2x64xf32>
    %1177 = tpu.concatenate %1147, %1173 in 1 : vector<2x32xf32>, vector<2x32xf32> -> vector<2x64xf32>
    %c17_i32_360 = arith.constant 17 : i32
    %1178 = vector.extract_strided_slice %1176 {offsets = [0, 0], sizes = [2, 32], strides = [1, 1]} : vector<2x64xf32> to vector<2x32xf32>
    %c0_361 = arith.constant 0 : index
    %c0_362 = arith.constant 0 : index
    %c0_363 = arith.constant 0 : index
    %1179 = vector.load %arg6[%c0_361, %c0_362, %c0_363] : memref<2x2x32xf32, #tpu.memory_space<vmem>>, vector<1x2x32xf32>
    %1180 = vector.shape_cast %1179 : vector<1x2x32xf32> to vector<2x32xf32>
    %1181 = vector.shape_cast %1178 : vector<2x32xf32> to vector<1x2x32xf32>
    tpu.vector_store %arg6[%c0_361, %c0_362, %c0_363], %1181 {strides = array<i32>} : memref<2x2x32xf32, #tpu.memory_space<vmem>>, vector<1x2x32xf32>,
    %1182 = vector.extract_strided_slice %1177 {offsets = [0, 0], sizes = [2, 32], strides = [1, 1]} : vector<2x64xf32> to vector<2x32xf32>
    %c0_364 = arith.constant 0 : index
    %c0_365 = arith.constant 0 : index
    %c0_366 = arith.constant 0 : index
    %1183 = vector.load %arg7[%c0_364, %c0_365, %c0_366] : memref<2x2x32xf32, #tpu.memory_space<vmem>>, vector<1x2x32xf32>
    %1184 = vector.shape_cast %1183 : vector<1x2x32xf32> to vector<2x32xf32>
    %1185 = vector.shape_cast %1182 : vector<2x32xf32> to vector<1x2x32xf32>
    tpu.vector_store %arg7[%c0_364, %c0_365, %c0_366], %1185 {strides = array<i32>} : memref<2x2x32xf32, #tpu.memory_space<vmem>>, vector<1x2x32xf32>,
    %1186 = vector.extract_strided_slice %1176 {offsets = [0, 32], sizes = [2, 32], strides = [1, 1]} : vector<2x64xf32> to vector<2x32xf32>
    %c1_367 = arith.constant 1 : index
    %c0_368 = arith.constant 0 : index
    %c0_369 = arith.constant 0 : index
    %1187 = vector.load %arg6[%c1_367, %c0_368, %c0_369] : memref<2x2x32xf32, #tpu.memory_space<vmem>>, vector<1x2x32xf32>
    %1188 = vector.shape_cast %1187 : vector<1x2x32xf32> to vector<2x32xf32>
    %1189 = vector.shape_cast %1186 : vector<2x32xf32> to vector<1x2x32xf32>
    tpu.vector_store %arg6[%c1_367, %c0_368, %c0_369], %1189 {strides = array<i32>} : memref<2x2x32xf32, #tpu.memory_space<vmem>>, vector<1x2x32xf32>,
    %1190 = vector.extract_strided_slice %1177 {offsets = [0, 32], sizes = [2, 32], strides = [1, 1]} : vector<2x64xf32> to vector<2x32xf32>
    %c1_370 = arith.constant 1 : index
    %c0_371 = arith.constant 0 : index
    %c0_372 = arith.constant 0 : index
    %1191 = vector.load %arg7[%c1_370, %c0_371, %c0_372] : memref<2x2x32xf32, #tpu.memory_space<vmem>>, vector<1x2x32xf32>
    %1192 = vector.shape_cast %1191 : vector<1x2x32xf32> to vector<2x32xf32>
    %1193 = vector.shape_cast %1190 : vector<2x32xf32> to vector<1x2x32xf32>
    tpu.vector_store %arg7[%c1_370, %c0_371, %c0_372], %1193 {strides = array<i32>} : memref<2x2x32xf32, #tpu.memory_space<vmem>>, vector<1x2x32xf32>,
    %c0_373 = arith.constant 0 : index
    %c0_374 = arith.constant 0 : index
    %1194 = vector.load %arg9[%c0_373, %c0_374] : memref<32x32xf32, #tpu.memory_space<vmem>>, vector<2x32xf32>
    %c0_375 = arith.constant 0 : index
    %c0_376 = arith.constant 0 : index
    %1195 = vector.load %arg5[%c0_375, %c0_376] : memref<2x512xf32, #tpu.memory_space<vmem>>, vector<2x32xf32>
    tpu.vector_store %arg5[%c0_375, %c0_376], %1194 {strides = array<i32>} : memref<2x512xf32, #tpu.memory_space<vmem>>, vector<2x32xf32>,
    %c2_377 = arith.constant 2 : index
    %c0_378 = arith.constant 0 : index
    %1196 = vector.load %arg9[%c2_377, %c0_378] : memref<32x32xf32, #tpu.memory_space<vmem>>, vector<2x32xf32>
    %c0_379 = arith.constant 0 : index
    %c32 = arith.constant 32 : index
    %1197 = vector.load %arg5[%c0_379, %c32] : memref<2x512xf32, #tpu.memory_space<vmem>>, vector<2x32xf32>
    tpu.vector_store %arg5[%c0_379, %c32], %1196 {strides = array<i32>} : memref<2x512xf32, #tpu.memory_space<vmem>>, vector<2x32xf32>,
    %c4_380 = arith.constant 4 : index
    %c0_381 = arith.constant 0 : index
    %1198 = vector.load %arg9[%c4_380, %c0_381] : memref<32x32xf32, #tpu.memory_space<vmem>>, vector<2x32xf32>
    %c0_382 = arith.constant 0 : index
    %c64 = arith.constant 64 : index
    %1199 = vector.load %arg5[%c0_382, %c64] : memref<2x512xf32, #tpu.memory_space<vmem>>, vector<2x32xf32>
    tpu.vector_store %arg5[%c0_382, %c64], %1198 {strides = array<i32>} : memref<2x512xf32, #tpu.memory_space<vmem>>, vector<2x32xf32>,
    %c6_383 = arith.constant 6 : index
    %c0_384 = arith.constant 0 : index
    %1200 = vector.load %arg9[%c6_383, %c0_384] : memref<32x32xf32, #tpu.memory_space<vmem>>, vector<2x32xf32>
    %c0_385 = arith.constant 0 : index
    %c96 = arith.constant 96 : index
    %1201 = vector.load %arg5[%c0_385, %c96] : memref<2x512xf32, #tpu.memory_space<vmem>>, vector<2x32xf32>
    tpu.vector_store %arg5[%c0_385, %c96], %1200 {strides = array<i32>} : memref<2x512xf32, #tpu.memory_space<vmem>>, vector<2x32xf32>,
    %c8_386 = arith.constant 8 : index
    %c0_387 = arith.constant 0 : index
    %1202 = vector.load %arg9[%c8_386, %c0_387] : memref<32x32xf32, #tpu.memory_space<vmem>>, vector<2x32xf32>
    %c0_388 = arith.constant 0 : index
    %c128 = arith.constant 128 : index
    %1203 = vector.load %arg5[%c0_388, %c128] : memref<2x512xf32, #tpu.memory_space<vmem>>, vector<2x32xf32>
    tpu.vector_store %arg5[%c0_388, %c128], %1202 {strides = array<i32>} : memref<2x512xf32, #tpu.memory_space<vmem>>, vector<2x32xf32>,
    %c10_389 = arith.constant 10 : index
    %c0_390 = arith.constant 0 : index
    %1204 = vector.load %arg9[%c10_389, %c0_390] : memref<32x32xf32, #tpu.memory_space<vmem>>, vector<2x32xf32>
    %c0_391 = arith.constant 0 : index
    %c160 = arith.constant 160 : index
    %1205 = vector.load %arg5[%c0_391, %c160] : memref<2x512xf32, #tpu.memory_space<vmem>>, vector<2x32xf32>
    tpu.vector_store %arg5[%c0_391, %c160], %1204 {strides = array<i32>} : memref<2x512xf32, #tpu.memory_space<vmem>>, vector<2x32xf32>,
    %c12_392 = arith.constant 12 : index
    %c0_393 = arith.constant 0 : index
    %1206 = vector.load %arg9[%c12_392, %c0_393] : memref<32x32xf32, #tpu.memory_space<vmem>>, vector<2x32xf32>
    %c0_394 = arith.constant 0 : index
    %c192 = arith.constant 192 : index
    %1207 = vector.load %arg5[%c0_394, %c192] : memref<2x512xf32, #tpu.memory_space<vmem>>, vector<2x32xf32>
    tpu.vector_store %arg5[%c0_394, %c192], %1206 {strides = array<i32>} : memref<2x512xf32, #tpu.memory_space<vmem>>, vector<2x32xf32>,
    %c14_395 = arith.constant 14 : index
    %c0_396 = arith.constant 0 : index
    %1208 = vector.load %arg9[%c14_395, %c0_396] : memref<32x32xf32, #tpu.memory_space<vmem>>, vector<2x32xf32>
    %c0_397 = arith.constant 0 : index
    %c224 = arith.constant 224 : index
    %1209 = vector.load %arg5[%c0_397, %c224] : memref<2x512xf32, #tpu.memory_space<vmem>>, vector<2x32xf32>
    tpu.vector_store %arg5[%c0_397, %c224], %1208 {strides = array<i32>} : memref<2x512xf32, #tpu.memory_space<vmem>>, vector<2x32xf32>,
    %c16 = arith.constant 16 : index
    %c0_398 = arith.constant 0 : index
    %1210 = vector.load %arg9[%c16, %c0_398] : memref<32x32xf32, #tpu.memory_space<vmem>>, vector<2x32xf32>
    %c0_399 = arith.constant 0 : index
    %c256 = arith.constant 256 : index
    %1211 = vector.load %arg5[%c0_399, %c256] : memref<2x512xf32, #tpu.memory_space<vmem>>, vector<2x32xf32>
    tpu.vector_store %arg5[%c0_399, %c256], %1210 {strides = array<i32>} : memref<2x512xf32, #tpu.memory_space<vmem>>, vector<2x32xf32>,
    %c18 = arith.constant 18 : index
    %c0_400 = arith.constant 0 : index
    %1212 = vector.load %arg9[%c18, %c0_400] : memref<32x32xf32, #tpu.memory_space<vmem>>, vector<2x32xf32>
    %c0_401 = arith.constant 0 : index
    %c288 = arith.constant 288 : index
    %1213 = vector.load %arg5[%c0_401, %c288] : memref<2x512xf32, #tpu.memory_space<vmem>>, vector<2x32xf32>
    tpu.vector_store %arg5[%c0_401, %c288], %1212 {strides = array<i32>} : memref<2x512xf32, #tpu.memory_space<vmem>>, vector<2x32xf32>,
    %c20 = arith.constant 20 : index
    %c0_402 = arith.constant 0 : index
    %1214 = vector.load %arg9[%c20, %c0_402] : memref<32x32xf32, #tpu.memory_space<vmem>>, vector<2x32xf32>
    %c0_403 = arith.constant 0 : index
    %c320 = arith.constant 320 : index
    %1215 = vector.load %arg5[%c0_403, %c320] : memref<2x512xf32, #tpu.memory_space<vmem>>, vector<2x32xf32>
    tpu.vector_store %arg5[%c0_403, %c320], %1214 {strides = array<i32>} : memref<2x512xf32, #tpu.memory_space<vmem>>, vector<2x32xf32>,
    %c22 = arith.constant 22 : index
    %c0_404 = arith.constant 0 : index
    %1216 = vector.load %arg9[%c22, %c0_404] : memref<32x32xf32, #tpu.memory_space<vmem>>, vector<2x32xf32>
    %c0_405 = arith.constant 0 : index
    %c352 = arith.constant 352 : index
    %1217 = vector.load %arg5[%c0_405, %c352] : memref<2x512xf32, #tpu.memory_space<vmem>>, vector<2x32xf32>
    tpu.vector_store %arg5[%c0_405, %c352], %1216 {strides = array<i32>} : memref<2x512xf32, #tpu.memory_space<vmem>>, vector<2x32xf32>,
    %c24 = arith.constant 24 : index
    %c0_406 = arith.constant 0 : index
    %1218 = vector.load %arg9[%c24, %c0_406] : memref<32x32xf32, #tpu.memory_space<vmem>>, vector<2x32xf32>
    %c0_407 = arith.constant 0 : index
    %c384 = arith.constant 384 : index
    %1219 = vector.load %arg5[%c0_407, %c384] : memref<2x512xf32, #tpu.memory_space<vmem>>, vector<2x32xf32>
    tpu.vector_store %arg5[%c0_407, %c384], %1218 {strides = array<i32>} : memref<2x512xf32, #tpu.memory_space<vmem>>, vector<2x32xf32>,
    %c26 = arith.constant 26 : index
    %c0_408 = arith.constant 0 : index
    %1220 = vector.load %arg9[%c26, %c0_408] : memref<32x32xf32, #tpu.memory_space<vmem>>, vector<2x32xf32>
    %c0_409 = arith.constant 0 : index
    %c416 = arith.constant 416 : index
    %1221 = vector.load %arg5[%c0_409, %c416] : memref<2x512xf32, #tpu.memory_space<vmem>>, vector<2x32xf32>
    tpu.vector_store %arg5[%c0_409, %c416], %1220 {strides = array<i32>} : memref<2x512xf32, #tpu.memory_space<vmem>>, vector<2x32xf32>,
    %c28 = arith.constant 28 : index
    %c0_410 = arith.constant 0 : index
    %1222 = vector.load %arg9[%c28, %c0_410] : memref<32x32xf32, #tpu.memory_space<vmem>>, vector<2x32xf32>
    %c0_411 = arith.constant 0 : index
    %c448 = arith.constant 448 : index
    %1223 = vector.load %arg5[%c0_411, %c448] : memref<2x512xf32, #tpu.memory_space<vmem>>, vector<2x32xf32>
    tpu.vector_store %arg5[%c0_411, %c448], %1222 {strides = array<i32>} : memref<2x512xf32, #tpu.memory_space<vmem>>, vector<2x32xf32>,
    %c30 = arith.constant 30 : index
    %c0_412 = arith.constant 0 : index
    %1224 = vector.load %arg9[%c30, %c0_412] : memref<32x32xf32, #tpu.memory_space<vmem>>, vector<2x32xf32>
    %c0_413 = arith.constant 0 : index
    %c480 = arith.constant 480 : index
    %1225 = vector.load %arg5[%c0_413, %c480] : memref<2x512xf32, #tpu.memory_space<vmem>>, vector<2x32xf32>
    tpu.vector_store %arg5[%c0_413, %c480], %1224 {strides = array<i32>} : memref<2x512xf32, #tpu.memory_space<vmem>>, vector<2x32xf32>,
    return
  }
  func.func @transform_0(%arg0: i32) -> (i32, i32, i32) {
    %c0_i32 = arith.constant 0 : i32
    %c0_i32_0 = arith.constant 0 : i32
    %c0_i32_1 = arith.constant 0 : i32
    return %arg0, %c0_i32, %c0_i32_0 : i32, i32, i32
  }
  func.func @transform_1(%arg0: i32) -> (i32, i32) {
    %c0_i32 = arith.constant 0 : i32
    %c0_i32_0 = arith.constant 0 : i32
    %c0_i32_1 = arith.constant 0 : i32
    return %c0_i32, %c0_i32_0 : i32, i32
  }
  func.func @transform_2(%arg0: i32) -> (i32, i32) {
    %c0_i32 = arith.constant 0 : i32
    %c0_i32_0 = arith.constant 0 : i32
    %c0_i32_1 = arith.constant 0 : i32
    return %c0_i32, %c0_i32_0 : i32, i32
  }
  func.func @transform_3(%arg0: i32) -> (i32, i32) {
    %c0_i32 = arith.constant 0 : i32
    %c0_i32_0 = arith.constant 0 : i32
    %c0_i32_1 = arith.constant 0 : i32
    return %c0_i32, %c0_i32_0 : i32, i32
  }
  func.func @transform_4(%arg0: i32) -> (i32, i32) {
    %c0_i32 = arith.constant 0 : i32
    %c0_i32_0 = arith.constant 0 : i32
    return %arg0, %c0_i32 : i32, i32
  }
  func.func @transform_5(%arg0: i32) -> (i32, i32, i32) {
    %c0_i32 = arith.constant 0 : i32
    %c0_i32_0 = arith.constant 0 : i32
    %c0_i32_1 = arith.constant 0 : i32
    return %c0_i32, %arg0, %c0_i32_0 : i32, i32, i32
  }
  func.func @transform_6(%arg0: i32) -> (i32, i32, i32) {
    %c0_i32 = arith.constant 0 : i32
    %c0_i32_0 = arith.constant 0 : i32
    %c0_i32_1 = arith.constant 0 : i32
    return %c0_i32, %arg0, %c0_i32_0 : i32, i32, i32
  }
}

</mosaic_0001>

<llo_original>
// kernel: tpu_custom_call.1
$region0: #{tpu_custom_call.1}
  #allocation0 [shape = 'u32[]', space=smem, size = 0x4, offset = 0x4, fixed_abs, tag = 'smem constant byte address 0x4 - core index']
  #allocation1 [shape = 'u32[144,128]{1,0:T(1,128)}', space=vmem, size = 0x12000, scoped, tag = 'internal scratch']
  #allocation2 [shape = 'f32[32,128]{1,0:T(8,128)}', space=vmem, size = 0x4000, scoped, tag = 'scratch operand']
  #allocation3 [shape = 'f32[32,32]{1,0:T(8,128)}', space=vmem, size = 0x4000, scoped, tag = 'scratch operand']
  %s0 = inlined_call_operand.vmem [shape: f32[2,16,8], index: 0, kind: input, shape index: {}]
  %s1 = inlined_call_operand.vmem [shape: bf16[8,128], index: 1, kind: input, shape index: {}]
  %s2 = inlined_call_operand.hbm [shape: bf16[64,256], index: 2, kind: input, shape index: {}]
  %s3 = inlined_call_operand.vmem [shape: f32[1,256], index: 3, kind: input, shape index: {}]
  %s4 = inlined_call_operand.hbm [shape: f32[2,512], index: 4, kind: output, shape index: {0}]
  %s5 = inlined_call_operand.hbm [shape: f32[2,2,32], index: 5, kind: output, shape index: {1}]
  %s6 = inlined_call_operand.hbm [shape: f32[2,2,32], index: 6, kind: output, shape index: {2}]
  %7 = xla_tuple %s4, %s5, %s6
  %s8 = sld [smem:[#allocation0]]
  $region46: #{tpu_custom_call.1} parent=0
    _
  %s10 = ssub.s32 1, %s8
  %s11 = scalar_select 0, %s10, %s8
  $region1: #{tpu_custom_call.1} parent=0
    #allocation4 [shape = 'u8[32768]{0}', space=vmem, size = 0x8000, scoped, tag = 'input window, operand 2, single buffered']
    #allocation5 [shape = 's32[1]{0}', space=sflag, size = 0x4, scoped, tag = 'scoped memory for tpu_custom_call.1']
    #allocation6 [shape = 's32[1]{0}', space=sflag, size = 0x4, scoped, tag = 'scoped memory for tpu_custom_call.1']
    #allocation7 [shape = 'u8[4096]{0}', space=vmem, size = 0x1000, scoped, tag = 'output window, operand 0, single buffered']
    #allocation8 [shape = 'u8[2048]{0}', space=vmem, size = 0x800, scoped, tag = 'output window, operand 1, single buffered']
    #allocation9 [shape = 's32[1]{0}', space=sflag, size = 0x4, scoped, tag = 'scoped memory for tpu_custom_call.1']
    #allocation10 [shape = 'u8[2048]{0}', space=vmem, size = 0x800, scoped, tag = 'output window, operand 2, single buffered']
    %12 = vsyncpa [#allocation5], 0
    %13 = vsyncpa [#allocation6], 0
    %14 = vsyncpa [#allocation9], 0
    // Predicated region
    $region2: #{tpu_custom_call.1} parent=1 // pred_check
      _
    $region3: #{tpu_custom_call.1} parent=1 // pred_check_branch
      %16 = sbr.rel (0) target = $region5
    $region4: #{tpu_custom_call.1} parent=1 // pred_region
      _
    $region5: #{tpu_custom_call.1} parent=1 // pred_fallthru
      _
    // Predicated region
    $region6: #{tpu_custom_call.1} parent=1 // pred_check
      _
    $region7: #{tpu_custom_call.1} parent=1 // pred_check_branch
      %18 = sbr.rel (0) target = $region9
    $region8: #{tpu_custom_call.1} parent=1 // pred_region
      _
    $region9: #{tpu_custom_call.1} parent=1 // pred_fallthru
      _
    // Predicated region
    $region10: #{tpu_custom_call.1} parent=1 // pred_check
      _
    $region11: #{tpu_custom_call.1} parent=1 // pred_check_branch
      %20 = sbr.rel (0) target = $region13
    $region12: #{tpu_custom_call.1} parent=1 // pred_region
      %s22 = ssub.s32 1024, 1024
      %23 = vsyncadd [#allocation5], %s22
      %s24 = sshll.u32 [#allocation4], 4
      %s25 = int_to_ptr.vmem [resolvable:$true] %s24
      %30 = dma.hbm_to_vmem [thread:$0]  %s2, 1024, %s25, [#allocation5], 128, 128, 8
    $region13: #{tpu_custom_call.1} parent=1 // pred_fallthru
      _
    // Predicated region
    $region14: #{tpu_custom_call.1} parent=1 // pred_check
      _
    $region15: #{tpu_custom_call.1} parent=1 // pred_check_branch
      %32 = sbr.rel (0) target = $region17
    $region16: #{tpu_custom_call.1} parent=1 // pred_region
      _
    $region17: #{tpu_custom_call.1} parent=1 // pred_fallthru
      _
    // Predicated region
    $region18: #{tpu_custom_call.1} parent=1 // pred_check
      _
    $region19: #{tpu_custom_call.1} parent=1 // pred_check_branch
      %34 = sbr.rel (0) target = $region21
    $region20: #{tpu_custom_call.1} parent=1 // pred_region
      %35 = dma.done [#allocation5], 1024
    $region21: #{tpu_custom_call.1} parent=1 // pred_fallthru
      _
    %v37 = vld [vmem:[%s0] sm:$0x1]
    %v38 = vld [vmem:[%s0 + $0x10] sm:$0x1]
    %v39 = vld [vmem:[%s0 + $0x1] sm:$0x1]
    %v40 = vld [vmem:[%s0 + $0x11] sm:$0x1]
    %v41 = vld [vmem:[%s0 + $0x2] sm:$0x1]
    %v42 = vld [vmem:[%s0 + $0x12] sm:$0x1]
    %v43 = vld [vmem:[%s0 + $0x3] sm:$0x1]
    %v44 = vld [vmem:[%s0 + $0x13] sm:$0x1]
    %v45 = vld [vmem:[%s0 + $0x4] sm:$0x1]
    %v46 = vld [vmem:[%s0 + $0x14] sm:$0x1]
    %v47 = vld [vmem:[%s0 + $0x5] sm:$0x1]
    %v48 = vld [vmem:[%s0 + $0x15] sm:$0x1]
    %v49 = vld [vmem:[%s0 + $0x6] sm:$0x1]
    %v50 = vld [vmem:[%s0 + $0x16] sm:$0x1]
    %v51 = vld [vmem:[%s0 + $0x7] sm:$0x1]
    %v52 = vld [vmem:[%s0 + $0x17] sm:$0x1]
    %v53 = vld [vmem:[%s0 + $0x8] sm:$0x1]
    %v54 = vld [vmem:[%s0 + $0x18] sm:$0x1]
    %v55 = vld [vmem:[%s0 + $0x9] sm:$0x1]
    %v56 = vld [vmem:[%s0 + $0x19] sm:$0x1]
    %v57 = vld [vmem:[%s0 + $0xa] sm:$0x1]
    %v58 = vld [vmem:[%s0 + $0x1a] sm:$0x1]
    %v59 = vld [vmem:[%s0 + $0xb] sm:$0x1]
    %v60 = vld [vmem:[%s0 + $0x1b] sm:$0x1]
    %v61 = vld [vmem:[%s0 + $0xc] sm:$0x1]
    %v62 = vld [vmem:[%s0 + $0x1c] sm:$0x1]
    %v63 = vld [vmem:[%s0 + $0xd] sm:$0x1]
    %v64 = vld [vmem:[%s0 + $0x1d] sm:$0x1]
    %v65 = vld [vmem:[%s0 + $0xe] sm:$0x1]
    %v66 = vld [vmem:[%s0 + $0x1e] sm:$0x1]
    %v67 = vld [vmem:[%s0 + $0xf] sm:$0x1]
    %v68 = vld [vmem:[%s0 + $0x1f] sm:$0x1]
    %v71 = vrot.slane %v38, 7
    %vm72 = vcmask 1041409
    %v73 = vsel %vm72, %v71, %v37
    %v77 = vrot.slane %v39, 6
    %v78 = vrot.slane %v40, 5
    %vm79 = vcmask 1043459
    %v80 = vsel %vm79, %v78, %v77
    %v84 = vrot.slane %v41, 4
    %v85 = vrot.slane %v42, 3
    %vm86 = vcmask 1045509
    %v87 = vsel %vm86, %v85, %v84
    %v91 = vrot.slane %v43, 2
    %v92 = vrot.slane %v44, 1
    %vm93 = vcmask 1047559
    %v94 = vsel %vm93, %v92, %v91
    %v98 = vrot.slane %v46, 7
    %v99 = vsel %vm72, %v98, %v45
    %v103 = vrot.slane %v47, 6
    %v104 = vrot.slane %v48, 5
    %v105 = vsel %vm79, %v104, %v103
    %v109 = vrot.slane %v49, 4
    %v110 = vrot.slane %v50, 3
    %v111 = vsel %vm86, %v110, %v109
    %v115 = vrot.slane %v51, 2
    %v116 = vrot.slane %v52, 1
    %v117 = vsel %vm93, %v116, %v115
    %v121 = vrot.slane %v54, 7
    %v122 = vsel %vm72, %v121, %v53
    %v126 = vrot.slane %v55, 6
    %v127 = vrot.slane %v56, 5
    %v128 = vsel %vm79, %v127, %v126
    %v132 = vrot.slane %v57, 4
    %v133 = vrot.slane %v58, 3
    %v134 = vsel %vm86, %v133, %v132
    %v138 = vrot.slane %v59, 2
    %v139 = vrot.slane %v60, 1
    %v140 = vsel %vm93, %v139, %v138
    %v144 = vrot.slane %v62, 7
    %v145 = vsel %vm72, %v144, %v61
    %v149 = vrot.slane %v63, 6
    %v150 = vrot.slane %v64, 5
    %v151 = vsel %vm79, %v150, %v149
    %v155 = vrot.slane %v65, 4
    %v156 = vrot.slane %v66, 3
    %v157 = vsel %vm86, %v156, %v155
    %v161 = vrot.slane %v67, 2
    %v162 = vrot.slane %v68, 1
    %v163 = vsel %vm93, %v162, %v161
    %vm165 = vcmask 1041408
    %v166 = vsel %vm165, %v73, %v80
    %vm167 = vcmask 1043456
    %v168 = vsel %vm167, %v166, %v87
    %vm169 = vcmask 1045504
    %v170 = vsel %vm169, %v168, %v94
    %v171 = vsel %vm165, %v99, %v105
    %v172 = vsel %vm167, %v171, %v111
    %v173 = vsel %vm169, %v172, %v117
    %v174 = vsel %vm165, %v122, %v128
    %v175 = vsel %vm167, %v174, %v134
    %v176 = vsel %vm169, %v175, %v140
    %v177 = vsel %vm165, %v145, %v151
    %v178 = vsel %vm167, %v177, %v157
    %v179 = vsel %vm169, %v178, %v163
    %v180 = vpack.c.bf16 %v173, %v170
    %v181 = vpack.c.bf16 %v179, %v176
    %v182 = vld [vmem:[%s1] sm:$0xf]
    %vm183 = vcmask 64512
    %v185 = vsel %vm183, %v180, 0
    %v188 = vsel %vm183, %v181, 0
    %v191 = vsel %vm167, %v182, 0
    %193 = vmatprep.subr.bf16.mxu0 0
    %194 = vmatpush1.bf16.msra.mxu0 %v191
    %195 = vmatprep.subr.bf16.mxu0 0
    %196 = vmatpush1.bf16.msra.mxu0 0
    %197 = vmatprep.subr.bf16.mxu0 0
    %198 = vmatpush1.bf16.msra.mxu0 0
    %199 = vmatprep.subr.bf16.mxu0 0
    %200 = vmatpush1.bf16.msra.mxu0 0
    %201 = vmatprep.subr.bf16.mxu0 0
    %202 = vmatpush1.bf16.msra.mxu0 0
    %203 = vmatprep.subr.bf16.mxu0 0
    %204 = vmatpush1.bf16.msra.mxu0 0
    %205 = vmatprep.subr.bf16.mxu0 0
    %206 = vmatpush1.bf16.msra.mxu0 0
    %207 = vmatprep.subr.bf16.mxu0 0
    %208 = vmatpush1.bf16.msra.mxu0 0
    %209 = vmatprep.subr.bf16.mxu0 0
    %210 = vmatpush1.bf16.msra.mxu0 0
    %211 = vmatprep.subr.bf16.mxu0 0
    %212 = vmatpush1.bf16.msra.mxu0 0
    %213 = vmatprep.subr.bf16.mxu0 0
    %214 = vmatpush1.bf16.msra.mxu0 0
    %215 = vmatprep.subr.bf16.mxu0 0
    %216 = vmatpush1.bf16.msra.mxu0 0
    %217 = vmatprep.subr.bf16.mxu0 0
    %218 = vmatpush1.bf16.msra.mxu0 0
    %219 = vmatprep.subr.bf16.mxu0 0
    %220 = vmatpush1.bf16.msra.mxu0 0
    %221 = vmatprep.subr.bf16.mxu0 0
    %222 = vmatpush1.bf16.msra.mxu0 0
    %223 = vmatprep.subr.bf16.mxu0 0
    %224 = vmatpush1.bf16.msra.mxu0 0
    %225 = vmatprep.mubr.bf16.mxu0 0
    %226 = vmatmul.mubr.bf16.gmra.mrb[0].mxu0 %v185
    %v227 = vpop.f32.mrb[0].mxu0
    %v228 = vadd.f32 0.0, %v227
    %v229 = vpop.f32.mrb[0].mxu0
    %v230 = vpop.f32.mrb[0].mxu0
    %v231 = vadd.f32 0.0, %v230
    %v232 = vpop.f32.mrb[0].mxu0
    %233 = vmatprep.mubr.bf16.mxu0 0
    %234 = vmatmul.mubr.bf16.gmra.mrb[0].mxu0 %v188
    %v235 = vpop.f32.mrb[0].mxu0
    %v236 = vadd.f32 0.0, %v235
    %v237 = vpop.f32.mrb[0].mxu0
    %v238 = vpop.f32.mrb[0].mxu0
    %v239 = vadd.f32 0.0, %v238
    %v240 = vpop.f32.mrb[0].mxu0
    %241 = vdwg.mxu0
    %242 = vst [vmem:[#allocation2] sm:$0xff] %v228
    %243 = vst [vmem:[#allocation2 + $0x8] sm:$0xff] %v231
    %244 = vst [vmem:[#allocation2 + $0x10] sm:$0xff] %v236
    %245 = vst [vmem:[#allocation2 + $0x18] sm:$0xff] %v239
    %v246 = vld [vmem:[#allocation4] sm:$0xff]
    %v247 = vld [vmem:[#allocation4 + $0x8] sm:$0xff]
    %v248 = vld [vmem:[#allocation4 + $0x10] sm:$0xff]
    %v249 = vld [vmem:[#allocation4 + $0x18] sm:$0xff]
    %v250 = vld [vmem:[#allocation4 + $0x20] sm:$0xff]
    %v251 = vld [vmem:[#allocation4 + $0x28] sm:$0xff]
    %v252 = vld [vmem:[#allocation4 + $0x30] sm:$0xff]
    %v253 = vld [vmem:[#allocation4 + $0x38] sm:$0xff]
    %v254 = vld [vmem:[%s3] sm:$0x3]
    %v256 = vlaneseq
    %v257 = vshrl.u32 %v256, 7
    %v258 = vsub.s32 0, %v257
    %v259 = vrot.slane %v254, %v258
    %v260 = vlaneseq
    %v261 = vshrl.u32 %v260, 7
    %v262 = vsub.s32 1, %v261
    %v263 = vrot.slane %v254, %v262
    %v274 = vunpack.c.l.b16 %v246
    %v275 = vunpack.c.h.b16 %v246
    %v276 = vunpack.c.l.b16 %v247
    %v277 = vunpack.c.h.b16 %v247
    %v278 = vunpack.c.l.b16 %v248
    %v279 = vunpack.c.h.b16 %v248
    %v280 = vunpack.c.l.b16 %v249
    %v281 = vunpack.c.h.b16 %v249
    %v282 = vunpack.c.l.b16 %v250
    %v283 = vunpack.c.h.b16 %v250
    %v284 = vunpack.c.l.b16 %v251
    %v285 = vunpack.c.h.b16 %v251
    %v286 = vunpack.c.l.b16 %v252
    %v287 = vunpack.c.h.b16 %v252
    %v288 = vunpack.c.l.b16 %v253
    %v289 = vunpack.c.h.b16 %v253
    %v290 = vpack.c.b16 %v276, %v274
    %v291 = vpack.c.b16 %v277, %v275
    %v292 = vpack.c.b16 %v280, %v278
    %v293 = vpack.c.b16 %v281, %v279
    %v294 = vpack.c.b16 %v284, %v282
    %v295 = vpack.c.b16 %v285, %v283
    %v296 = vpack.c.b16 %v288, %v286
    %v297 = vpack.c.b16 %v289, %v287
    %vm306 = vcmask 523264
    %v308 = vsel %vm306, 0, 0
    %310 = vmatprep.subr.bf16.mxu0 %v291
    %311 = vmatpush1.bf16.msra.mxu0 %v290
    %312 = vmatprep.subr.bf16.mxu0 %v293
    %313 = vmatpush1.bf16.msra.mxu0 %v292
    %314 = vmatprep.subr.bf16.mxu0 %v295
    %315 = vmatpush1.bf16.msra.mxu0 %v294
    %316 = vmatprep.subr.bf16.mxu0 %v297
    %317 = vmatpush1.bf16.msra.mxu0 %v296
    %318 = vmatprep.subr.bf16.mxu0 0
    %319 = vmatpush1.bf16.msra.mxu0 0
    %320 = vmatprep.subr.bf16.mxu0 0
    %321 = vmatpush1.bf16.msra.mxu0 0
    %322 = vmatprep.subr.bf16.mxu0 0
    %323 = vmatpush1.bf16.msra.mxu0 0
    %324 = vmatprep.subr.bf16.mxu0 0
    %325 = vmatpush1.bf16.msra.mxu0 0
    %326 = vmatprep.subr.bf16.mxu0 0
    %327 = vmatpush1.bf16.msra.mxu0 0
    %328 = vmatprep.subr.bf16.mxu0 0
    %329 = vmatpush1.bf16.msra.mxu0 0
    %330 = vmatprep.subr.bf16.mxu0 0
    %331 = vmatpush1.bf16.msra.mxu0 0
    %332 = vmatprep.subr.bf16.mxu0 0
    %333 = vmatpush1.bf16.msra.mxu0 0
    %334 = vmatprep.subr.bf16.mxu0 0
    %335 = vmatpush1.bf16.msra.mxu0 0
    %336 = vmatprep.subr.bf16.mxu0 0
    %337 = vmatpush1.bf16.msra.mxu0 0
    %338 = vmatprep.subr.bf16.mxu0 0
    %339 = vmatpush1.bf16.msra.mxu0 0
    %340 = vmatprep.subr.bf16.mxu0 0
    %341 = vmatpush1.bf16.msra.mxu0 0
    %342 = vmatprep.mubr.bf16.mxu0 0
    %343 = vmatmul.mubr.bf16.gmra.mrb[0].mxu0 %v308
    %v344 = vpop.f32.mrb[0].mxu0
    %v345 = vadd.f32 %v259, %v344
    %v346 = vpop.f32.mrb[0].mxu0
    %v347 = vpop.f32.mrb[0].mxu0
    %v348 = vpop.f32.mrb[0].mxu0
    %349 = vdwg.mxu0
    %v350 = vld [vmem:[#allocation2] sm:$0x3]
    %v351 = vadd.f32 %v345, %v350
    %v352 = vmul.f32 %v351, 0.5
    %v353 = vtanh.pop %v352
    %v354 = vmul.f32 %v353, 0.5
    %v355 = vadd.f32 %v354, 0.5
    %v356 = vtanh.pop %v351
    %v357 = vmul.f32 %v355, 0.0
    %359 = vrot.lane.b32.xlu0 %v356, 32
    %v360 = vpop.permute.xlu0 %359
    %v362 = vmul.f32 %v355, %v360
    %364 = vrot.lane.b32.xlu0 %v362, 32
    %v365 = vpop.permute.xlu0 %364
    %v367 = vadd.f32 %v357, %v365
    %v368 = vtanh.pop %v367
    %370 = vrot.lane.b32.xlu0 %v368, 32
    %v371 = vpop.permute.xlu0 %370
    %v373 = vmul.f32 %v355, %v371
    %375 = vrot.lane.b32.xlu0 %v373, 64
    %v376 = vpop.permute.xlu0 %375
    %vm378 = vcmask 261120
    %v379 = vsel %vm378, %v376, 0.0
    %381 = vrot.lane.b32.xlu0 %v367, 96
    %v382 = vpop.permute.xlu0 %381
    %v384 = vsel %vm378, %v382, 0.0
    %v385 = vpack.c.bf16 %v379, %v379
    %v387 = vsel %vm306, %v385, 0
    %389 = vmatprep.subr.bf16.mxu0 %v291
    %390 = vmatpush1.bf16.msra.mxu0 %v290
    %391 = vmatprep.subr.bf16.mxu0 %v293
    %392 = vmatpush1.bf16.msra.mxu0 %v292
    %393 = vmatprep.subr.bf16.mxu0 %v295
    %394 = vmatpush1.bf16.msra.mxu0 %v294
    %395 = vmatprep.subr.bf16.mxu0 %v297
    %396 = vmatpush1.bf16.msra.mxu0 %v296
    %397 = vmatprep.subr.bf16.mxu0 0
    %398 = vmatpush1.bf16.msra.mxu0 0
    %399 = vmatprep.subr.bf16.mxu0 0
    %400 = vmatpush1.bf16.msra.mxu0 0
    %401 = vmatprep.subr.bf16.mxu0 0
    %402 = vmatpush1.bf16.msra.mxu0 0
    %403 = vmatprep.subr.bf16.mxu0 0
    %404 = vmatpush1.bf16.msra.mxu0 0
    %405 = vmatprep.subr.bf16.mxu0 0
    %406 = vmatpush1.bf16.msra.mxu0 0
    %407 = vmatprep.subr.bf16.mxu0 0
    %408 = vmatpush1.bf16.msra.mxu0 0
    %409 = vmatprep.subr.bf16.mxu0 0
    %410 = vmatpush1.bf16.msra.mxu0 0
    %411 = vmatprep.subr.bf16.mxu0 0
    %412 = vmatpush1.bf16.msra.mxu0 0
    %413 = vmatprep.subr.bf16.mxu0 0
    %414 = vmatpush1.bf16.msra.mxu0 0
    %415 = vmatprep.subr.bf16.mxu0 0
    %416 = vmatpush1.bf16.msra.mxu0 0
    %417 = vmatprep.subr.bf16.mxu0 0
    %418 = vmatpush1.bf16.msra.mxu0 0
    %419 = vmatprep.subr.bf16.mxu0 0
    %420 = vmatpush1.bf16.msra.mxu0 0
    %421 = vmatprep.mubr.bf16.mxu0 0
    %422 = vmatmul.mubr.bf16.gmra.mrb[0].mxu0 %v387
    %v423 = vpop.f32.mrb[0].mxu0
    %v424 = vadd.f32 %v259, %v423
    %v425 = vpop.f32.mrb[0].mxu0
    %v426 = vadd.f32 %v263, %v425
    %v427 = vpop.f32.mrb[0].mxu0
    %v428 = vpop.f32.mrb[0].mxu0
    %429 = vdwg.mxu0
    %v430 = vld [vmem:[#allocation2 + $0x2] sm:$0x3]
    %v431 = vadd.f32 %v424, %v430
    %v432 = vmul.f32 %v431, 0.5
    %v433 = vtanh.pop %v432
    %v434 = vmul.f32 %v433, 0.5
    %v435 = vadd.f32 %v434, 0.5
    %v436 = vtanh.pop %v431
    %438 = vrot.lane.b32.xlu0 %v384, 32
    %v439 = vpop.permute.xlu0 %438
    %v441 = vmul.f32 %v435, %v439
    %443 = vrot.lane.b32.xlu0 %v436, 32
    %v444 = vpop.permute.xlu0 %443
    %v446 = vmul.f32 %v435, %v444
    %448 = vrot.lane.b32.xlu0 %v446, 32
    %v449 = vpop.permute.xlu0 %448
    %v451 = vadd.f32 %v441, %v449
    %v452 = vtanh.pop %v451
    %454 = vrot.lane.b32.xlu0 %v452, 32
    %v455 = vpop.permute.xlu0 %454
    %v457 = vmul.f32 %v435, %v455
    %v458 = vmul.f32 %v426, 0.5
    %v459 = vtanh.pop %v458
    %v460 = vmul.f32 %v459, 0.5
    %v461 = vadd.f32 %v460, 0.5
    %v462 = vtanh.pop %v426
    %v463 = vmul.f32 %v461, %v384
    %465 = vrot.lane.b32.xlu0 %v462, 32
    %v466 = vpop.permute.xlu0 %465
    %v468 = vmul.f32 %v461, %v466
    %470 = vrot.lane.b32.xlu0 %v468, 32
    %v471 = vpop.permute.xlu0 %470
    %v473 = vadd.f32 %v463, %v471
    %v474 = vtanh.pop %v473
    %476 = vrot.lane.b32.xlu0 %v474, 32
    %v477 = vpop.permute.xlu0 %476
    %v479 = vmul.f32 %v461, %v477
    %481 = vrot.lane.b32.xlu0 %v479, 64
    %v482 = vpop.permute.xlu0 %481
    %vm484 = vcmask 254976
    %485 = vst.msk [vmem:[#allocation3] sm:$0x3] %vm484, %v482
    %487 = vrot.lane.b32.xlu0 %v457, 64
    %v488 = vpop.permute.xlu0 %487
    %490 = vrot.lane.b32.xlu0 %v479, 96
    %v491 = vpop.permute.xlu0 %490
    %v493 = vsel %vm378, %v488, %v491
    %495 = vrot.lane.b32.xlu0 %v451, 96
    %v496 = vpop.permute.xlu0 %495
    %v498 = vsel %vm378, %v496, %v473
    %v499 = vpack.c.bf16 %v493, %v493
    %v500 = vld [vmem:[#allocation4] sm:$0xff]
    %v501 = vld [vmem:[#allocation4 + $0x8] sm:$0xff]
    %v502 = vld [vmem:[#allocation4 + $0x10] sm:$0xff]
    %v503 = vld [vmem:[#allocation4 + $0x18] sm:$0xff]
    %v504 = vld [vmem:[#allocation4 + $0x20] sm:$0xff]
    %v505 = vld [vmem:[#allocation4 + $0x28] sm:$0xff]
    %v506 = vld [vmem:[#allocation4 + $0x30] sm:$0xff]
    %v507 = vld [vmem:[#allocation4 + $0x38] sm:$0xff]
    %v508 = vld [vmem:[%s3] sm:$0x3]
    %v510 = vlaneseq
    %v511 = vshrl.u32 %v510, 7
    %v512 = vsub.s32 0, %v511
    %v513 = vrot.slane %v508, %v512
    %v514 = vlaneseq
    %v515 = vshrl.u32 %v514, 7
    %v516 = vsub.s32 1, %v515
    %v517 = vrot.slane %v508, %v516
    %v528 = vunpack.c.l.b16 %v500
    %v529 = vunpack.c.h.b16 %v500
    %v530 = vunpack.c.l.b16 %v501
    %v531 = vunpack.c.h.b16 %v501
    %v532 = vunpack.c.l.b16 %v502
    %v533 = vunpack.c.h.b16 %v502
    %v534 = vunpack.c.l.b16 %v503
    %v535 = vunpack.c.h.b16 %v503
    %v536 = vunpack.c.l.b16 %v504
    %v537 = vunpack.c.h.b16 %v504
    %v538 = vunpack.c.l.b16 %v505
    %v539 = vunpack.c.h.b16 %v505
    %v540 = vunpack.c.l.b16 %v506
    %v541 = vunpack.c.h.b16 %v506
    %v542 = vunpack.c.l.b16 %v507
    %v543 = vunpack.c.h.b16 %v507
    %v544 = vpack.c.b16 %v530, %v528
    %v545 = vpack.c.b16 %v531, %v529
    %v546 = vpack.c.b16 %v534, %v532
    %v547 = vpack.c.b16 %v535, %v533
    %v548 = vpack.c.b16 %v538, %v536
    %v549 = vpack.c.b16 %v539, %v537
    %v550 = vpack.c.b16 %v542, %v540
    %v551 = vpack.c.b16 %v543, %v541
    %v561 = vsel %vm306, %v499, 0
    %563 = vmatprep.subr.bf16.mxu0 %v545
    %564 = vmatpush1.bf16.msra.mxu0 %v544
    %565 = vmatprep.subr.bf16.mxu0 %v547
    %566 = vmatpush1.bf16.msra.mxu0 %v546
    %567 = vmatprep.subr.bf16.mxu0 %v549
    %568 = vmatpush1.bf16.msra.mxu0 %v548
    %569 = vmatprep.subr.bf16.mxu0 %v551
    %570 = vmatpush1.bf16.msra.mxu0 %v550
    %571 = vmatprep.subr.bf16.mxu0 0
    %572 = vmatpush1.bf16.msra.mxu0 0
    %573 = vmatprep.subr.bf16.mxu0 0
    %574 = vmatpush1.bf16.msra.mxu0 0
    %575 = vmatprep.subr.bf16.mxu0 0
    %576 = vmatpush1.bf16.msra.mxu0 0
    %577 = vmatprep.subr.bf16.mxu0 0
    %578 = vmatpush1.bf16.msra.mxu0 0
    %579 = vmatprep.subr.bf16.mxu0 0
    %580 = vmatpush1.bf16.msra.mxu0 0
    %581 = vmatprep.subr.bf16.mxu0 0
    %582 = vmatpush1.bf16.msra.mxu0 0
    %583 = vmatprep.subr.bf16.mxu0 0
    %584 = vmatpush1.bf16.msra.mxu0 0
    %585 = vmatprep.subr.bf16.mxu0 0
    %586 = vmatpush1.bf16.msra.mxu0 0
    %587 = vmatprep.subr.bf16.mxu0 0
    %588 = vmatpush1.bf16.msra.mxu0 0
    %589 = vmatprep.subr.bf16.mxu0 0
    %590 = vmatpush1.bf16.msra.mxu0 0
    %591 = vmatprep.subr.bf16.mxu0 0
    %592 = vmatpush1.bf16.msra.mxu0 0
    %593 = vmatprep.subr.bf16.mxu0 0
    %594 = vmatpush1.bf16.msra.mxu0 0
    %595 = vmatprep.mubr.bf16.mxu0 0
    %596 = vmatmul.mubr.bf16.gmra.mrb[0].mxu0 %v561
    %v597 = vpop.f32.mrb[0].mxu0
    %v598 = vadd.f32 %v513, %v597
    %v599 = vpop.f32.mrb[0].mxu0
    %v600 = vadd.f32 %v517, %v599
    %v601 = vpop.f32.mrb[0].mxu0
    %v602 = vpop.f32.mrb[0].mxu0
    %603 = vdwg.mxu0
    %v604 = vld [vmem:[#allocation2 + $0x4] sm:$0x3]
    %v605 = vadd.f32 %v598, %v604
    %v606 = vmul.f32 %v605, 0.5
    %v607 = vtanh.pop %v606
    %v608 = vmul.f32 %v607, 0.5
    %v609 = vadd.f32 %v608, 0.5
    %v610 = vtanh.pop %v605
    %612 = vrot.lane.b32.xlu0 %v498, 32
    %v613 = vpop.permute.xlu0 %612
    %v615 = vmul.f32 %v609, %v613
    %617 = vrot.lane.b32.xlu0 %v610, 32
    %v618 = vpop.permute.xlu0 %617
    %v620 = vmul.f32 %v609, %v618
    %622 = vrot.lane.b32.xlu0 %v620, 32
    %v623 = vpop.permute.xlu0 %622
    %v625 = vadd.f32 %v615, %v623
    %v626 = vtanh.pop %v625
    %628 = vrot.lane.b32.xlu0 %v626, 32
    %v629 = vpop.permute.xlu0 %628
    %v631 = vmul.f32 %v609, %v629
    %v632 = vmul.f32 %v600, 0.5
    %v633 = vtanh.pop %v632
    %v634 = vmul.f32 %v633, 0.5
    %v635 = vadd.f32 %v634, 0.5
    %v636 = vtanh.pop %v600
    %v637 = vmul.f32 %v635, %v498
    %639 = vrot.lane.b32.xlu0 %v636, 32
    %v640 = vpop.permute.xlu0 %639
    %v642 = vmul.f32 %v635, %v640
    %644 = vrot.lane.b32.xlu0 %v642, 32
    %v645 = vpop.permute.xlu0 %644
    %v647 = vadd.f32 %v637, %v645
    %v648 = vtanh.pop %v647
    %650 = vrot.lane.b32.xlu0 %v648, 32
    %v651 = vpop.permute.xlu0 %650
    %v653 = vmul.f32 %v635, %v651
    %655 = vrot.lane.b32.xlu0 %v653, 64
    %v656 = vpop.permute.xlu0 %655
    %658 = vst.msk [vmem:[#allocation3 + $0x2] sm:$0x3] %vm484, %v656
    %660 = vrot.lane.b32.xlu0 %v631, 64
    %v661 = vpop.permute.xlu0 %660
    %663 = vrot.lane.b32.xlu0 %v653, 96
    %v664 = vpop.permute.xlu0 %663
    %v666 = vsel %vm378, %v661, %v664
    %668 = vrot.lane.b32.xlu0 %v625, 96
    %v669 = vpop.permute.xlu0 %668
    %v671 = vsel %vm378, %v669, %v647
    %v672 = vpack.c.bf16 %v666, %v666
    %v673 = vld [vmem:[#allocation4] sm:$0xff]
    %v674 = vld [vmem:[#allocation4 + $0x8] sm:$0xff]
    %v675 = vld [vmem:[#allocation4 + $0x10] sm:$0xff]
    %v676 = vld [vmem:[#allocation4 + $0x18] sm:$0xff]
    %v677 = vld [vmem:[#allocation4 + $0x20] sm:$0xff]
    %v678 = vld [vmem:[#allocation4 + $0x28] sm:$0xff]
    %v679 = vld [vmem:[#allocation4 + $0x30] sm:$0xff]
    %v680 = vld [vmem:[#allocation4 + $0x38] sm:$0xff]
    %v681 = vld [vmem:[%s3] sm:$0x3]
    %v683 = vlaneseq
    %v684 = vshrl.u32 %v683, 7
    %v685 = vsub.s32 0, %v684
    %v686 = vrot.slane %v681, %v685
    %v687 = vlaneseq
    %v688 = vshrl.u32 %v687, 7
    %v689 = vsub.s32 1, %v688
    %v690 = vrot.slane %v681, %v689
    %v701 = vunpack.c.l.b16 %v673
    %v702 = vunpack.c.h.b16 %v673
    %v703 = vunpack.c.l.b16 %v674
    %v704 = vunpack.c.h.b16 %v674
    %v705 = vunpack.c.l.b16 %v675
    %v706 = vunpack.c.h.b16 %v675
    %v707 = vunpack.c.l.b16 %v676
    %v708 = vunpack.c.h.b16 %v676
    %v709 = vunpack.c.l.b16 %v677
    %v710 = vunpack.c.h.b16 %v677
    %v711 = vunpack.c.l.b16 %v678
    %v712 = vunpack.c.h.b16 %v678
    %v713 = vunpack.c.l.b16 %v679
    %v714 = vunpack.c.h.b16 %v679
    %v715 = vunpack.c.l.b16 %v680
    %v716 = vunpack.c.h.b16 %v680
    %v717 = vpack.c.b16 %v703, %v701
    %v718 = vpack.c.b16 %v704, %v702
    %v719 = vpack.c.b16 %v707, %v705
    %v720 = vpack.c.b16 %v708, %v706
    %v721 = vpack.c.b16 %v711, %v709
    %v722 = vpack.c.b16 %v712, %v710
    %v723 = vpack.c.b16 %v715, %v713
    %v724 = vpack.c.b16 %v716, %v714
    %v734 = vsel %vm306, %v672, 0
    %736 = vmatprep.subr.bf16.mxu0 %v718
    %737 = vmatpush1.bf16.msra.mxu0 %v717
    %738 = vmatprep.subr.bf16.mxu0 %v720
    %739 = vmatpush1.bf16.msra.mxu0 %v719
    %740 = vmatprep.subr.bf16.mxu0 %v722
    %741 = vmatpush1.bf16.msra.mxu0 %v721
    %742 = vmatprep.subr.bf16.mxu0 %v724
    %743 = vmatpush1.bf16.msra.mxu0 %v723
    %744 = vmatprep.subr.bf16.mxu0 0
    %745 = vmatpush1.bf16.msra.mxu0 0
    %746 = vmatprep.subr.bf16.mxu0 0
    %747 = vmatpush1.bf16.msra.mxu0 0
    %748 = vmatprep.subr.bf16.mxu0 0
    %749 = vmatpush1.bf16.msra.mxu0 0
    %750 = vmatprep.subr.bf16.mxu0 0
    %751 = vmatpush1.bf16.msra.mxu0 0
    %752 = vmatprep.subr.bf16.mxu0 0
    %753 = vmatpush1.bf16.msra.mxu0 0
    %754 = vmatprep.subr.bf16.mxu0 0
    %755 = vmatpush1.bf16.msra.mxu0 0
    %756 = vmatprep.subr.bf16.mxu0 0
    %757 = vmatpush1.bf16.msra.mxu0 0
    %758 = vmatprep.subr.bf16.mxu0 0
    %759 = vmatpush1.bf16.msra.mxu0 0
    %760 = vmatprep.subr.bf16.mxu0 0
    %761 = vmatpush1.bf16.msra.mxu0 0
    %762 = vmatprep.subr.bf16.mxu0 0
    %763 = vmatpush1.bf16.msra.mxu0 0
    %764 = vmatprep.subr.bf16.mxu0 0
    %765 = vmatpush1.bf16.msra.mxu0 0
    %766 = vmatprep.subr.bf16.mxu0 0
    %767 = vmatpush1.bf16.msra.mxu0 0
    %768 = vmatprep.mubr.bf16.mxu0 0
    %769 = vmatmul.mubr.bf16.gmra.mrb[0].mxu0 %v734
    %v770 = vpop.f32.mrb[0].mxu0
    %v771 = vadd.f32 %v686, %v770
    %v772 = vpop.f32.mrb[0].mxu0
    %v773 = vadd.f32 %v690, %v772
    %v774 = vpop.f32.mrb[0].mxu0
    %v775 = vpop.f32.mrb[0].mxu0
    %776 = vdwg.mxu0
    %v777 = vld [vmem:[#allocation2 + $0x6] sm:$0x3]
    %v778 = vadd.f32 %v771, %v777
    %v779 = vmul.f32 %v778, 0.5
    %v780 = vtanh.pop %v779
    %v781 = vmul.f32 %v780, 0.5
    %v782 = vadd.f32 %v781, 0.5
    %v783 = vtanh.pop %v778
    %785 = vrot.lane.b32.xlu0 %v671, 32
    %v786 = vpop.permute.xlu0 %785
    %v788 = vmul.f32 %v782, %v786
    %790 = vrot.lane.b32.xlu0 %v783, 32
    %v791 = vpop.permute.xlu0 %790
    %v793 = vmul.f32 %v782, %v791
    %795 = vrot.lane.b32.xlu0 %v793, 32
    %v796 = vpop.permute.xlu0 %795
    %v798 = vadd.f32 %v788, %v796
    %v799 = vtanh.pop %v798
    %801 = vrot.lane.b32.xlu0 %v799, 32
    %v802 = vpop.permute.xlu0 %801
    %v804 = vmul.f32 %v782, %v802
    %v805 = vmul.f32 %v773, 0.5
    %v806 = vtanh.pop %v805
    %v807 = vmul.f32 %v806, 0.5
    %v808 = vadd.f32 %v807, 0.5
    %v809 = vtanh.pop %v773
    %v810 = vmul.f32 %v808, %v671
    %812 = vrot.lane.b32.xlu0 %v809, 32
    %v813 = vpop.permute.xlu0 %812
    %v815 = vmul.f32 %v808, %v813
    %817 = vrot.lane.b32.xlu0 %v815, 32
    %v818 = vpop.permute.xlu0 %817
    %v820 = vadd.f32 %v810, %v818
    %v821 = vtanh.pop %v820
    %823 = vrot.lane.b32.xlu0 %v821, 32
    %v824 = vpop.permute.xlu0 %823
    %v826 = vmul.f32 %v808, %v824
    %828 = vrot.lane.b32.xlu0 %v826, 64
    %v829 = vpop.permute.xlu0 %828
    %831 = vst.msk [vmem:[#allocation3 + $0x4] sm:$0x3] %vm484, %v829
    %833 = vrot.lane.b32.xlu0 %v804, 64
    %v834 = vpop.permute.xlu0 %833
    %836 = vrot.lane.b32.xlu0 %v826, 96
    %v837 = vpop.permute.xlu0 %836
    %v839 = vsel %vm378, %v834, %v837
    %841 = vrot.lane.b32.xlu0 %v798, 96
    %v842 = vpop.permute.xlu0 %841
    %v844 = vsel %vm378, %v842, %v820
    %v845 = vpack.c.bf16 %v839, %v839
    %v846 = vld [vmem:[#allocation4] sm:$0xff]
    %v847 = vld [vmem:[#allocation4 + $0x8] sm:$0xff]
    %v848 = vld [vmem:[#allocation4 + $0x10] sm:$0xff]
    %v849 = vld [vmem:[#allocation4 + $0x18] sm:$0xff]
    %v850 = vld [vmem:[#allocation4 + $0x20] sm:$0xff]
    %v851 = vld [vmem:[#allocation4 + $0x28] sm:$0xff]
    %v852 = vld [vmem:[#allocation4 + $0x30] sm:$0xff]
    %v853 = vld [vmem:[#allocation4 + $0x38] sm:$0xff]
    %v854 = vld [vmem:[%s3] sm:$0x3]
    %v856 = vlaneseq
    %v857 = vshrl.u32 %v856, 7
    %v858 = vsub.s32 0, %v857
    %v859 = vrot.slane %v854, %v858
    %v860 = vlaneseq
    %v861 = vshrl.u32 %v860, 7
    %v862 = vsub.s32 1, %v861
    %v863 = vrot.slane %v854, %v862
    %v874 = vunpack.c.l.b16 %v846
    %v875 = vunpack.c.h.b16 %v846
    %v876 = vunpack.c.l.b16 %v847
    %v877 = vunpack.c.h.b16 %v847
    %v878 = vunpack.c.l.b16 %v848
    %v879 = vunpack.c.h.b16 %v848
    %v880 = vunpack.c.l.b16 %v849
    %v881 = vunpack.c.h.b16 %v849
    %v882 = vunpack.c.l.b16 %v850
    %v883 = vunpack.c.h.b16 %v850
    %v884 = vunpack.c.l.b16 %v851
    %v885 = vunpack.c.h.b16 %v851
    %v886 = vunpack.c.l.b16 %v852
    %v887 = vunpack.c.h.b16 %v852
    %v888 = vunpack.c.l.b16 %v853
    %v889 = vunpack.c.h.b16 %v853
    %v890 = vpack.c.b16 %v876, %v874
    %v891 = vpack.c.b16 %v877, %v875
    %v892 = vpack.c.b16 %v880, %v878
    %v893 = vpack.c.b16 %v881, %v879
    %v894 = vpack.c.b16 %v884, %v882
    %v895 = vpack.c.b16 %v885, %v883
    %v896 = vpack.c.b16 %v888, %v886
    %v897 = vpack.c.b16 %v889, %v887
    %v907 = vsel %vm306, %v845, 0
    %909 = vmatprep.subr.bf16.mxu0 %v891
    %910 = vmatpush1.bf16.msra.mxu0 %v890
    %911 = vmatprep.subr.bf16.mxu0 %v893
    %912 = vmatpush1.bf16.msra.mxu0 %v892
    %913 = vmatprep.subr.bf16.mxu0 %v895
    %914 = vmatpush1.bf16.msra.mxu0 %v894
    %915 = vmatprep.subr.bf16.mxu0 %v897
    %916 = vmatpush1.bf16.msra.mxu0 %v896
    %917 = vmatprep.subr.bf16.mxu0 0
    %918 = vmatpush1.bf16.msra.mxu0 0
    %919 = vmatprep.subr.bf16.mxu0 0
    %920 = vmatpush1.bf16.msra.mxu0 0
    %921 = vmatprep.subr.bf16.mxu0 0
    %922 = vmatpush1.bf16.msra.mxu0 0
    %923 = vmatprep.subr.bf16.mxu0 0
    %924 = vmatpush1.bf16.msra.mxu0 0
    %925 = vmatprep.subr.bf16.mxu0 0
    %926 = vmatpush1.bf16.msra.mxu0 0
    %927 = vmatprep.subr.bf16.mxu0 0
    %928 = vmatpush1.bf16.msra.mxu0 0
    %929 = vmatprep.subr.bf16.mxu0 0
    %930 = vmatpush1.bf16.msra.mxu0 0
    %931 = vmatprep.subr.bf16.mxu0 0
    %932 = vmatpush1.bf16.msra.mxu0 0
    %933 = vmatprep.subr.bf16.mxu0 0
    %934 = vmatpush1.bf16.msra.mxu0 0
    %935 = vmatprep.subr.bf16.mxu0 0
    %936 = vmatpush1.bf16.msra.mxu0 0
    %937 = vmatprep.subr.bf16.mxu0 0
    %938 = vmatpush1.bf16.msra.mxu0 0
    %939 = vmatprep.subr.bf16.mxu0 0
    %940 = vmatpush1.bf16.msra.mxu0 0
    %941 = vmatprep.mubr.bf16.mxu0 0
    %942 = vmatmul.mubr.bf16.gmra.mrb[0].mxu0 %v907
    %v943 = vpop.f32.mrb[0].mxu0
    %v944 = vadd.f32 %v859, %v943
    %v945 = vpop.f32.mrb[0].mxu0
    %v946 = vadd.f32 %v863, %v945
    %v947 = vpop.f32.mrb[0].mxu0
    %v948 = vpop.f32.mrb[0].mxu0
    %949 = vdwg.mxu0
    %v950 = vld [vmem:[#allocation2 + $0x8] sm:$0x3]
    %v951 = vadd.f32 %v944, %v950
    %v952 = vmul.f32 %v951, 0.5
    %v953 = vtanh.pop %v952
    %v954 = vmul.f32 %v953, 0.5
    %v955 = vadd.f32 %v954, 0.5
    %v956 = vtanh.pop %v951
    %958 = vrot.lane.b32.xlu0 %v844, 32
    %v959 = vpop.permute.xlu0 %958
    %v961 = vmul.f32 %v955, %v959
    %963 = vrot.lane.b32.xlu0 %v956, 32
    %v964 = vpop.permute.xlu0 %963
    %v966 = vmul.f32 %v955, %v964
    %968 = vrot.lane.b32.xlu0 %v966, 32
    %v969 = vpop.permute.xlu0 %968
    %v971 = vadd.f32 %v961, %v969
    %v972 = vtanh.pop %v971
    %974 = vrot.lane.b32.xlu0 %v972, 32
    %v975 = vpop.permute.xlu0 %974
    %v977 = vmul.f32 %v955, %v975
    %v978 = vmul.f32 %v946, 0.5
    %v979 = vtanh.pop %v978
    %v980 = vmul.f32 %v979, 0.5
    %v981 = vadd.f32 %v980, 0.5
    %v982 = vtanh.pop %v946
    %v983 = vmul.f32 %v981, %v844
    %985 = vrot.lane.b32.xlu0 %v982, 32
    %v986 = vpop.permute.xlu0 %985
    %v988 = vmul.f32 %v981, %v986
    %990 = vrot.lane.b32.xlu0 %v988, 32
    %v991 = vpop.permute.xlu0 %990
    %v993 = vadd.f32 %v983, %v991
    %v994 = vtanh.pop %v993
    %996 = vrot.lane.b32.xlu0 %v994, 32
    %v997 = vpop.permute.xlu0 %996
    %v999 = vmul.f32 %v981, %v997
    %1001 = vrot.lane.b32.xlu0 %v999, 64
    %v1002 = vpop.permute.xlu0 %1001
    %1004 = vst.msk [vmem:[#allocation3 + $0x6] sm:$0x3] %vm484, %v1002
    %1006 = vrot.lane.b32.xlu0 %v977, 64
    %v1007 = vpop.permute.xlu0 %1006
    %1009 = vrot.lane.b32.xlu0 %v999, 96
    %v1010 = vpop.permute.xlu0 %1009
    %v1012 = vsel %vm378, %v1007, %v1010
    %1014 = vrot.lane.b32.xlu0 %v971, 96
    %v1015 = vpop.permute.xlu0 %1014
    %v1017 = vsel %vm378, %v1015, %v993
    %v1018 = vpack.c.bf16 %v1012, %v1012
    %v1019 = vld [vmem:[#allocation4] sm:$0xff]
    %v1020 = vld [vmem:[#allocation4 + $0x8] sm:$0xff]
    %v1021 = vld [vmem:[#allocation4 + $0x10] sm:$0xff]
    %v1022 = vld [vmem:[#allocation4 + $0x18] sm:$0xff]
    %v1023 = vld [vmem:[#allocation4 + $0x20] sm:$0xff]
    %v1024 = vld [vmem:[#allocation4 + $0x28] sm:$0xff]
    %v1025 = vld [vmem:[#allocation4 + $0x30] sm:$0xff]
    %v1026 = vld [vmem:[#allocation4 + $0x38] sm:$0xff]
    %v1027 = vld [vmem:[%s3] sm:$0x3]
    %v1029 = vlaneseq
    %v1030 = vshrl.u32 %v1029, 7
    %v1031 = vsub.s32 0, %v1030
    %v1032 = vrot.slane %v1027, %v1031
    %v1033 = vlaneseq
    %v1034 = vshrl.u32 %v1033, 7
    %v1035 = vsub.s32 1, %v1034
    %v1036 = vrot.slane %v1027, %v1035
    %v1047 = vunpack.c.l.b16 %v1019
    %v1048 = vunpack.c.h.b16 %v1019
    %v1049 = vunpack.c.l.b16 %v1020
    %v1050 = vunpack.c.h.b16 %v1020
    %v1051 = vunpack.c.l.b16 %v1021
    %v1052 = vunpack.c.h.b16 %v1021
    %v1053 = vunpack.c.l.b16 %v1022
    %v1054 = vunpack.c.h.b16 %v1022
    %v1055 = vunpack.c.l.b16 %v1023
    %v1056 = vunpack.c.h.b16 %v1023
    %v1057 = vunpack.c.l.b16 %v1024
    %v1058 = vunpack.c.h.b16 %v1024
    %v1059 = vunpack.c.l.b16 %v1025
    %v1060 = vunpack.c.h.b16 %v1025
    %v1061 = vunpack.c.l.b16 %v1026
    %v1062 = vunpack.c.h.b16 %v1026
    %v1063 = vpack.c.b16 %v1049, %v1047
    %v1064 = vpack.c.b16 %v1050, %v1048
    %v1065 = vpack.c.b16 %v1053, %v1051
    %v1066 = vpack.c.b16 %v1054, %v1052
    %v1067 = vpack.c.b16 %v1057, %v1055
    %v1068 = vpack.c.b16 %v1058, %v1056
    %v1069 = vpack.c.b16 %v1061, %v1059
    %v1070 = vpack.c.b16 %v1062, %v1060
    %v1080 = vsel %vm306, %v1018, 0
    %1082 = vmatprep.subr.bf16.mxu0 %v1064
    %1083 = vmatpush1.bf16.msra.mxu0 %v1063
    %1084 = vmatprep.subr.bf16.mxu0 %v1066
    %1085 = vmatpush1.bf16.msra.mxu0 %v1065
    %1086 = vmatprep.subr.bf16.mxu0 %v1068
    %1087 = vmatpush1.bf16.msra.mxu0 %v1067
    %1088 = vmatprep.subr.bf16.mxu0 %v1070
    %1089 = vmatpush1.bf16.msra.mxu0 %v1069
    %1090 = vmatprep.subr.bf16.mxu0 0
    %1091 = vmatpush1.bf16.msra.mxu0 0
    %1092 = vmatprep.subr.bf16.mxu0 0
    %1093 = vmatpush1.bf16.msra.mxu0 0
    %1094 = vmatprep.subr.bf16.mxu0 0
    %1095 = vmatpush1.bf16.msra.mxu0 0
    %1096 = vmatprep.subr.bf16.mxu0 0
    %1097 = vmatpush1.bf16.msra.mxu0 0
    %1098 = vmatprep.subr.bf16.mxu0 0
    %1099 = vmatpush1.bf16.msra.mxu0 0
    %1100 = vmatprep.subr.bf16.mxu0 0
    %1101 = vmatpush1.bf16.msra.mxu0 0
    %1102 = vmatprep.subr.bf16.mxu0 0
    %1103 = vmatpush1.bf16.msra.mxu0 0
    %1104 = vmatprep.subr.bf16.mxu0 0
    %1105 = vmatpush1.bf16.msra.mxu0 0
    %1106 = vmatprep.subr.bf16.mxu0 0
    %1107 = vmatpush1.bf16.msra.mxu0 0
    %1108 = vmatprep.subr.bf16.mxu0 0
    %1109 = vmatpush1.bf16.msra.mxu0 0
    %1110 = vmatprep.subr.bf16.mxu0 0
    %1111 = vmatpush1.bf16.msra.mxu0 0
    %1112 = vmatprep.subr.bf16.mxu0 0
    %1113 = vmatpush1.bf16.msra.mxu0 0
    %1114 = vmatprep.mubr.bf16.mxu0 0
    %1115 = vmatmul.mubr.bf16.gmra.mrb[0].mxu0 %v1080
    %v1116 = vpop.f32.mrb[0].mxu0
    %v1117 = vadd.f32 %v1032, %v1116
    %v1118 = vpop.f32.mrb[0].mxu0
    %v1119 = vadd.f32 %v1036, %v1118
    %v1120 = vpop.f32.mrb[0].mxu0
    %v1121 = vpop.f32.mrb[0].mxu0
    %1122 = vdwg.mxu0
    %v1123 = vld [vmem:[#allocation2 + $0xa] sm:$0x3]
    %v1124 = vadd.f32 %v1117, %v1123
    %v1125 = vmul.f32 %v1124, 0.5
    %v1126 = vtanh.pop %v1125
    %v1127 = vmul.f32 %v1126, 0.5
    %v1128 = vadd.f32 %v1127, 0.5
    %v1129 = vtanh.pop %v1124
    %1131 = vrot.lane.b32.xlu0 %v1017, 32
    %v1132 = vpop.permute.xlu0 %1131
    %v1134 = vmul.f32 %v1128, %v1132
    %1136 = vrot.lane.b32.xlu0 %v1129, 32
    %v1137 = vpop.permute.xlu0 %1136
    %v1139 = vmul.f32 %v1128, %v1137
    %1141 = vrot.lane.b32.xlu0 %v1139, 32
    %v1142 = vpop.permute.xlu0 %1141
    %v1144 = vadd.f32 %v1134, %v1142
    %v1145 = vtanh.pop %v1144
    %1147 = vrot.lane.b32.xlu0 %v1145, 32
    %v1148 = vpop.permute.xlu0 %1147
    %v1150 = vmul.f32 %v1128, %v1148
    %v1151 = vmul.f32 %v1119, 0.5
    %v1152 = vtanh.pop %v1151
    %v1153 = vmul.f32 %v1152, 0.5
    %v1154 = vadd.f32 %v1153, 0.5
    %v1155 = vtanh.pop %v1119
    %v1156 = vmul.f32 %v1154, %v1017
    %1158 = vrot.lane.b32.xlu0 %v1155, 32
    %v1159 = vpop.permute.xlu0 %1158
    %v1161 = vmul.f32 %v1154, %v1159
    %1163 = vrot.lane.b32.xlu0 %v1161, 32
    %v1164 = vpop.permute.xlu0 %1163
    %v1166 = vadd.f32 %v1156, %v1164
    %v1167 = vtanh.pop %v1166
    %1169 = vrot.lane.b32.xlu0 %v1167, 32
    %v1170 = vpop.permute.xlu0 %1169
    %v1172 = vmul.f32 %v1154, %v1170
    %1174 = vrot.lane.b32.xlu0 %v1172, 64
    %v1175 = vpop.permute.xlu0 %1174
    %1177 = vst.msk [vmem:[#allocation3 + $0x8] sm:$0x3] %vm484, %v1175
    %1179 = vrot.lane.b32.xlu0 %v1150, 64
    %v1180 = vpop.permute.xlu0 %1179
    %1182 = vrot.lane.b32.xlu0 %v1172, 96
    %v1183 = vpop.permute.xlu0 %1182
    %v1185 = vsel %vm378, %v1180, %v1183
    %1187 = vrot.lane.b32.xlu0 %v1144, 96
    %v1188 = vpop.permute.xlu0 %1187
    %v1190 = vsel %vm378, %v1188, %v1166
    %v1191 = vpack.c.bf16 %v1185, %v1185
    %v1192 = vld [vmem:[#allocation4] sm:$0xff]
    %v1193 = vld [vmem:[#allocation4 + $0x8] sm:$0xff]
    %v1194 = vld [vmem:[#allocation4 + $0x10] sm:$0xff]
    %v1195 = vld [vmem:[#allocation4 + $0x18] sm:$0xff]
    %v1196 = vld [vmem:[#allocation4 + $0x20] sm:$0xff]
    %v1197 = vld [vmem:[#allocation4 + $0x28] sm:$0xff]
    %v1198 = vld [vmem:[#allocation4 + $0x30] sm:$0xff]
    %v1199 = vld [vmem:[#allocation4 + $0x38] sm:$0xff]
    %v1200 = vld [vmem:[%s3] sm:$0x3]
    %v1202 = vlaneseq
    %v1203 = vshrl.u32 %v1202, 7
    %v1204 = vsub.s32 0, %v1203
    %v1205 = vrot.slane %v1200, %v1204
    %v1206 = vlaneseq
    %v1207 = vshrl.u32 %v1206, 7
    %v1208 = vsub.s32 1, %v1207
    %v1209 = vrot.slane %v1200, %v1208
    %v1220 = vunpack.c.l.b16 %v1192
    %v1221 = vunpack.c.h.b16 %v1192
    %v1222 = vunpack.c.l.b16 %v1193
    %v1223 = vunpack.c.h.b16 %v1193
    %v1224 = vunpack.c.l.b16 %v1194
    %v1225 = vunpack.c.h.b16 %v1194
    %v1226 = vunpack.c.l.b16 %v1195
    %v1227 = vunpack.c.h.b16 %v1195
    %v1228 = vunpack.c.l.b16 %v1196
    %v1229 = vunpack.c.h.b16 %v1196
    %v1230 = vunpack.c.l.b16 %v1197
    %v1231 = vunpack.c.h.b16 %v1197
    %v1232 = vunpack.c.l.b16 %v1198
    %v1233 = vunpack.c.h.b16 %v1198
    %v1234 = vunpack.c.l.b16 %v1199
    %v1235 = vunpack.c.h.b16 %v1199
    %v1236 = vpack.c.b16 %v1222, %v1220
    %v1237 = vpack.c.b16 %v1223, %v1221
    %v1238 = vpack.c.b16 %v1226, %v1224
    %v1239 = vpack.c.b16 %v1227, %v1225
    %v1240 = vpack.c.b16 %v1230, %v1228
    %v1241 = vpack.c.b16 %v1231, %v1229
    %v1242 = vpack.c.b16 %v1234, %v1232
    %v1243 = vpack.c.b16 %v1235, %v1233
    %v1253 = vsel %vm306, %v1191, 0
    %1255 = vmatprep.subr.bf16.mxu0 %v1237
    %1256 = vmatpush1.bf16.msra.mxu0 %v1236
    %1257 = vmatprep.subr.bf16.mxu0 %v1239
    %1258 = vmatpush1.bf16.msra.mxu0 %v1238
    %1259 = vmatprep.subr.bf16.mxu0 %v1241
    %1260 = vmatpush1.bf16.msra.mxu0 %v1240
    %1261 = vmatprep.subr.bf16.mxu0 %v1243
    %1262 = vmatpush1.bf16.msra.mxu0 %v1242
    %1263 = vmatprep.subr.bf16.mxu0 0
    %1264 = vmatpush1.bf16.msra.mxu0 0
    %1265 = vmatprep.subr.bf16.mxu0 0
    %1266 = vmatpush1.bf16.msra.mxu0 0
    %1267 = vmatprep.subr.bf16.mxu0 0
    %1268 = vmatpush1.bf16.msra.mxu0 0
    %1269 = vmatprep.subr.bf16.mxu0 0
    %1270 = vmatpush1.bf16.msra.mxu0 0
    %1271 = vmatprep.subr.bf16.mxu0 0
    %1272 = vmatpush1.bf16.msra.mxu0 0
    %1273 = vmatprep.subr.bf16.mxu0 0
    %1274 = vmatpush1.bf16.msra.mxu0 0
    %1275 = vmatprep.subr.bf16.mxu0 0
    %1276 = vmatpush1.bf16.msra.mxu0 0
    %1277 = vmatprep.subr.bf16.mxu0 0
    %1278 = vmatpush1.bf16.msra.mxu0 0
    %1279 = vmatprep.subr.bf16.mxu0 0
    %1280 = vmatpush1.bf16.msra.mxu0 0
    %1281 = vmatprep.subr.bf16.mxu0 0
    %1282 = vmatpush1.bf16.msra.mxu0 0
    %1283 = vmatprep.subr.bf16.mxu0 0
    %1284 = vmatpush1.bf16.msra.mxu0 0
    %1285 = vmatprep.subr.bf16.mxu0 0
    %1286 = vmatpush1.bf16.msra.mxu0 0
    %1287 = vmatprep.mubr.bf16.mxu0 0
    %1288 = vmatmul.mubr.bf16.gmra.mrb[0].mxu0 %v1253
    %v1289 = vpop.f32.mrb[0].mxu0
    %v1290 = vadd.f32 %v1205, %v1289
    %v1291 = vpop.f32.mrb[0].mxu0
    %v1292 = vadd.f32 %v1209, %v1291
    %v1293 = vpop.f32.mrb[0].mxu0
    %v1294 = vpop.f32.mrb[0].mxu0
    %1295 = vdwg.mxu0
    %v1296 = vld [vmem:[#allocation2 + $0xc] sm:$0x3]
    %v1297 = vadd.f32 %v1290, %v1296
    %v1298 = vmul.f32 %v1297, 0.5
    %v1299 = vtanh.pop %v1298
    %v1300 = vmul.f32 %v1299, 0.5
    %v1301 = vadd.f32 %v1300, 0.5
    %v1302 = vtanh.pop %v1297
    %1304 = vrot.lane.b32.xlu0 %v1190, 32
    %v1305 = vpop.permute.xlu0 %1304
    %v1307 = vmul.f32 %v1301, %v1305
    %1309 = vrot.lane.b32.xlu0 %v1302, 32
    %v1310 = vpop.permute.xlu0 %1309
    %v1312 = vmul.f32 %v1301, %v1310
    %1314 = vrot.lane.b32.xlu0 %v1312, 32
    %v1315 = vpop.permute.xlu0 %1314
    %v1317 = vadd.f32 %v1307, %v1315
    %v1318 = vtanh.pop %v1317
    %1320 = vrot.lane.b32.xlu0 %v1318, 32
    %v1321 = vpop.permute.xlu0 %1320
    %v1323 = vmul.f32 %v1301, %v1321
    %v1324 = vmul.f32 %v1292, 0.5
    %v1325 = vtanh.pop %v1324
    %v1326 = vmul.f32 %v1325, 0.5
    %v1327 = vadd.f32 %v1326, 0.5
    %v1328 = vtanh.pop %v1292
    %v1329 = vmul.f32 %v1327, %v1190
    %1331 = vrot.lane.b32.xlu0 %v1328, 32
    %v1332 = vpop.permute.xlu0 %1331
    %v1334 = vmul.f32 %v1327, %v1332
    %1336 = vrot.lane.b32.xlu0 %v1334, 32
    %v1337 = vpop.permute.xlu0 %1336
    %v1339 = vadd.f32 %v1329, %v1337
    %v1340 = vtanh.pop %v1339
    %1342 = vrot.lane.b32.xlu0 %v1340, 32
    %v1343 = vpop.permute.xlu0 %1342
    %v1345 = vmul.f32 %v1327, %v1343
    %1347 = vrot.lane.b32.xlu0 %v1345, 64
    %v1348 = vpop.permute.xlu0 %1347
    %1350 = vst.msk [vmem:[#allocation3 + $0xa] sm:$0x3] %vm484, %v1348
    %1352 = vrot.lane.b32.xlu0 %v1323, 64
    %v1353 = vpop.permute.xlu0 %1352
    %1355 = vrot.lane.b32.xlu0 %v1345, 96
    %v1356 = vpop.permute.xlu0 %1355
    %v1358 = vsel %vm378, %v1353, %v1356
    %1360 = vrot.lane.b32.xlu0 %v1317, 96
    %v1361 = vpop.permute.xlu0 %1360
    %v1363 = vsel %vm378, %v1361, %v1339
    %v1364 = vpack.c.bf16 %v1358, %v1358
    %v1365 = vld [vmem:[#allocation4] sm:$0xff]
    %v1366 = vld [vmem:[#allocation4 + $0x8] sm:$0xff]
    %v1367 = vld [vmem:[#allocation4 + $0x10] sm:$0xff]
    %v1368 = vld [vmem:[#allocation4 + $0x18] sm:$0xff]
    %v1369 = vld [vmem:[#allocation4 + $0x20] sm:$0xff]
    %v1370 = vld [vmem:[#allocation4 + $0x28] sm:$0xff]
    %v1371 = vld [vmem:[#allocation4 + $0x30] sm:$0xff]
    %v1372 = vld [vmem:[#allocation4 + $0x38] sm:$0xff]
    %v1373 = vld [vmem:[%s3] sm:$0x3]
    %v1375 = vlaneseq
    %v1376 = vshrl.u32 %v1375, 7
    %v1377 = vsub.s32 0, %v1376
    %v1378 = vrot.slane %v1373, %v1377
    %v1379 = vlaneseq
    %v1380 = vshrl.u32 %v1379, 7
    %v1381 = vsub.s32 1, %v1380
    %v1382 = vrot.slane %v1373, %v1381
    %v1393 = vunpack.c.l.b16 %v1365
    %v1394 = vunpack.c.h.b16 %v1365
    %v1395 = vunpack.c.l.b16 %v1366
    %v1396 = vunpack.c.h.b16 %v1366
    %v1397 = vunpack.c.l.b16 %v1367
    %v1398 = vunpack.c.h.b16 %v1367
    %v1399 = vunpack.c.l.b16 %v1368
    %v1400 = vunpack.c.h.b16 %v1368
    %v1401 = vunpack.c.l.b16 %v1369
    %v1402 = vunpack.c.h.b16 %v1369
    %v1403 = vunpack.c.l.b16 %v1370
    %v1404 = vunpack.c.h.b16 %v1370
    %v1405 = vunpack.c.l.b16 %v1371
    %v1406 = vunpack.c.h.b16 %v1371
    %v1407 = vunpack.c.l.b16 %v1372
    %v1408 = vunpack.c.h.b16 %v1372
    %v1409 = vpack.c.b16 %v1395, %v1393
    %v1410 = vpack.c.b16 %v1396, %v1394
    %v1411 = vpack.c.b16 %v1399, %v1397
    %v1412 = vpack.c.b16 %v1400, %v1398
    %v1413 = vpack.c.b16 %v1403, %v1401
    %v1414 = vpack.c.b16 %v1404, %v1402
    %v1415 = vpack.c.b16 %v1407, %v1405
    %v1416 = vpack.c.b16 %v1408, %v1406
    %v1426 = vsel %vm306, %v1364, 0
    %1428 = vmatprep.subr.bf16.mxu0 %v1410
    %1429 = vmatpush1.bf16.msra.mxu0 %v1409
    %1430 = vmatprep.subr.bf16.mxu0 %v1412
    %1431 = vmatpush1.bf16.msra.mxu0 %v1411
    %1432 = vmatprep.subr.bf16.mxu0 %v1414
    %1433 = vmatpush1.bf16.msra.mxu0 %v1413
    %1434 = vmatprep.subr.bf16.mxu0 %v1416
    %1435 = vmatpush1.bf16.msra.mxu0 %v1415
    %1436 = vmatprep.subr.bf16.mxu0 0
    %1437 = vmatpush1.bf16.msra.mxu0 0
    %1438 = vmatprep.subr.bf16.mxu0 0
    %1439 = vmatpush1.bf16.msra.mxu0 0
    %1440 = vmatprep.subr.bf16.mxu0 0
    %1441 = vmatpush1.bf16.msra.mxu0 0
    %1442 = vmatprep.subr.bf16.mxu0 0
    %1443 = vmatpush1.bf16.msra.mxu0 0
    %1444 = vmatprep.subr.bf16.mxu0 0
    %1445 = vmatpush1.bf16.msra.mxu0 0
    %1446 = vmatprep.subr.bf16.mxu0 0
    %1447 = vmatpush1.bf16.msra.mxu0 0
    %1448 = vmatprep.subr.bf16.mxu0 0
    %1449 = vmatpush1.bf16.msra.mxu0 0
    %1450 = vmatprep.subr.bf16.mxu0 0
    %1451 = vmatpush1.bf16.msra.mxu0 0
    %1452 = vmatprep.subr.bf16.mxu0 0
    %1453 = vmatpush1.bf16.msra.mxu0 0
    %1454 = vmatprep.subr.bf16.mxu0 0
    %1455 = vmatpush1.bf16.msra.mxu0 0
    %1456 = vmatprep.subr.bf16.mxu0 0
    %1457 = vmatpush1.bf16.msra.mxu0 0
    %1458 = vmatprep.subr.bf16.mxu0 0
    %1459 = vmatpush1.bf16.msra.mxu0 0
    %1460 = vmatprep.mubr.bf16.mxu0 0
    %1461 = vmatmul.mubr.bf16.gmra.mrb[0].mxu0 %v1426
    %v1462 = vpop.f32.mrb[0].mxu0
    %v1463 = vadd.f32 %v1378, %v1462
    %v1464 = vpop.f32.mrb[0].mxu0
    %v1465 = vadd.f32 %v1382, %v1464
    %v1466 = vpop.f32.mrb[0].mxu0
    %v1467 = vpop.f32.mrb[0].mxu0
    %1468 = vdwg.mxu0
    %v1469 = vld [vmem:[#allocation2 + $0xe] sm:$0x3]
    %v1470 = vadd.f32 %v1463, %v1469
    %v1471 = vmul.f32 %v1470, 0.5
    %v1472 = vtanh.pop %v1471
    %v1473 = vmul.f32 %v1472, 0.5
    %v1474 = vadd.f32 %v1473, 0.5
    %v1475 = vtanh.pop %v1470
    %1477 = vrot.lane.b32.xlu0 %v1363, 32
    %v1478 = vpop.permute.xlu0 %1477
    %v1480 = vmul.f32 %v1474, %v1478
    %1482 = vrot.lane.b32.xlu0 %v1475, 32
    %v1483 = vpop.permute.xlu0 %1482
    %v1485 = vmul.f32 %v1474, %v1483
    %1487 = vrot.lane.b32.xlu0 %v1485, 32
    %v1488 = vpop.permute.xlu0 %1487
    %v1490 = vadd.f32 %v1480, %v1488
    %v1491 = vtanh.pop %v1490
    %1493 = vrot.lane.b32.xlu0 %v1491, 32
    %v1494 = vpop.permute.xlu0 %1493
    %v1496 = vmul.f32 %v1474, %v1494
    %v1497 = vmul.f32 %v1465, 0.5
    %v1498 = vtanh.pop %v1497
    %v1499 = vmul.f32 %v1498, 0.5
    %v1500 = vadd.f32 %v1499, 0.5
    %v1501 = vtanh.pop %v1465
    %v1502 = vmul.f32 %v1500, %v1363
    %1504 = vrot.lane.b32.xlu0 %v1501, 32
    %v1505 = vpop.permute.xlu0 %1504
    %v1507 = vmul.f32 %v1500, %v1505
    %1509 = vrot.lane.b32.xlu0 %v1507, 32
    %v1510 = vpop.permute.xlu0 %1509
    %v1512 = vadd.f32 %v1502, %v1510
    %v1513 = vtanh.pop %v1512
    %1515 = vrot.lane.b32.xlu0 %v1513, 32
    %v1516 = vpop.permute.xlu0 %1515
    %v1518 = vmul.f32 %v1500, %v1516
    %1520 = vrot.lane.b32.xlu0 %v1518, 64
    %v1521 = vpop.permute.xlu0 %1520
    %1523 = vst.msk [vmem:[#allocation3 + $0xc] sm:$0x3] %vm484, %v1521
    %1525 = vrot.lane.b32.xlu0 %v1496, 64
    %v1526 = vpop.permute.xlu0 %1525
    %1528 = vrot.lane.b32.xlu0 %v1518, 96
    %v1529 = vpop.permute.xlu0 %1528
    %v1531 = vsel %vm378, %v1526, %v1529
    %1533 = vrot.lane.b32.xlu0 %v1490, 96
    %v1534 = vpop.permute.xlu0 %1533
    %v1536 = vsel %vm378, %v1534, %v1512
    %v1537 = vpack.c.bf16 %v1531, %v1531
    %v1538 = vld [vmem:[#allocation4] sm:$0xff]
    %v1539 = vld [vmem:[#allocation4 + $0x8] sm:$0xff]
    %v1540 = vld [vmem:[#allocation4 + $0x10] sm:$0xff]
    %v1541 = vld [vmem:[#allocation4 + $0x18] sm:$0xff]
    %v1542 = vld [vmem:[#allocation4 + $0x20] sm:$0xff]
    %v1543 = vld [vmem:[#allocation4 + $0x28] sm:$0xff]
    %v1544 = vld [vmem:[#allocation4 + $0x30] sm:$0xff]
    %v1545 = vld [vmem:[#allocation4 + $0x38] sm:$0xff]
    %v1546 = vld [vmem:[%s3] sm:$0x3]
    %v1548 = vlaneseq
    %v1549 = vshrl.u32 %v1548, 7
    %v1550 = vsub.s32 0, %v1549
    %v1551 = vrot.slane %v1546, %v1550
    %v1552 = vlaneseq
    %v1553 = vshrl.u32 %v1552, 7
    %v1554 = vsub.s32 1, %v1553
    %v1555 = vrot.slane %v1546, %v1554
    %v1566 = vunpack.c.l.b16 %v1538
    %v1567 = vunpack.c.h.b16 %v1538
    %v1568 = vunpack.c.l.b16 %v1539
    %v1569 = vunpack.c.h.b16 %v1539
    %v1570 = vunpack.c.l.b16 %v1540
    %v1571 = vunpack.c.h.b16 %v1540
    %v1572 = vunpack.c.l.b16 %v1541
    %v1573 = vunpack.c.h.b16 %v1541
    %v1574 = vunpack.c.l.b16 %v1542
    %v1575 = vunpack.c.h.b16 %v1542
    %v1576 = vunpack.c.l.b16 %v1543
    %v1577 = vunpack.c.h.b16 %v1543
    %v1578 = vunpack.c.l.b16 %v1544
    %v1579 = vunpack.c.h.b16 %v1544
    %v1580 = vunpack.c.l.b16 %v1545
    %v1581 = vunpack.c.h.b16 %v1545
    %v1582 = vpack.c.b16 %v1568, %v1566
    %v1583 = vpack.c.b16 %v1569, %v1567
    %v1584 = vpack.c.b16 %v1572, %v1570
    %v1585 = vpack.c.b16 %v1573, %v1571
    %v1586 = vpack.c.b16 %v1576, %v1574
    %v1587 = vpack.c.b16 %v1577, %v1575
    %v1588 = vpack.c.b16 %v1580, %v1578
    %v1589 = vpack.c.b16 %v1581, %v1579
    %v1599 = vsel %vm306, %v1537, 0
    %1601 = vmatprep.subr.bf16.mxu0 %v1583
    %1602 = vmatpush1.bf16.msra.mxu0 %v1582
    %1603 = vmatprep.subr.bf16.mxu0 %v1585
    %1604 = vmatpush1.bf16.msra.mxu0 %v1584
    %1605 = vmatprep.subr.bf16.mxu0 %v1587
    %1606 = vmatpush1.bf16.msra.mxu0 %v1586
    %1607 = vmatprep.subr.bf16.mxu0 %v1589
    %1608 = vmatpush1.bf16.msra.mxu0 %v1588
    %1609 = vmatprep.subr.bf16.mxu0 0
    %1610 = vmatpush1.bf16.msra.mxu0 0
    %1611 = vmatprep.subr.bf16.mxu0 0
    %1612 = vmatpush1.bf16.msra.mxu0 0
    %1613 = vmatprep.subr.bf16.mxu0 0
    %1614 = vmatpush1.bf16.msra.mxu0 0
    %1615 = vmatprep.subr.bf16.mxu0 0
    %1616 = vmatpush1.bf16.msra.mxu0 0
    %1617 = vmatprep.subr.bf16.mxu0 0
    %1618 = vmatpush1.bf16.msra.mxu0 0
    %1619 = vmatprep.subr.bf16.mxu0 0
    %1620 = vmatpush1.bf16.msra.mxu0 0
    %1621 = vmatprep.subr.bf16.mxu0 0
    %1622 = vmatpush1.bf16.msra.mxu0 0
    %1623 = vmatprep.subr.bf16.mxu0 0
    %1624 = vmatpush1.bf16.msra.mxu0 0
    %1625 = vmatprep.subr.bf16.mxu0 0
    %1626 = vmatpush1.bf16.msra.mxu0 0
    %1627 = vmatprep.subr.bf16.mxu0 0
    %1628 = vmatpush1.bf16.msra.mxu0 0
    %1629 = vmatprep.subr.bf16.mxu0 0
    %1630 = vmatpush1.bf16.msra.mxu0 0
    %1631 = vmatprep.subr.bf16.mxu0 0
    %1632 = vmatpush1.bf16.msra.mxu0 0
    %1633 = vmatprep.mubr.bf16.mxu0 0
    %1634 = vmatmul.mubr.bf16.gmra.mrb[0].mxu0 %v1599
    %v1635 = vpop.f32.mrb[0].mxu0
    %v1636 = vadd.f32 %v1551, %v1635
    %v1637 = vpop.f32.mrb[0].mxu0
    %v1638 = vadd.f32 %v1555, %v1637
    %v1639 = vpop.f32.mrb[0].mxu0
    %v1640 = vpop.f32.mrb[0].mxu0
    %1641 = vdwg.mxu0
    %v1642 = vld [vmem:[#allocation2 + $0x10] sm:$0x3]
    %v1643 = vadd.f32 %v1636, %v1642
    %v1644 = vmul.f32 %v1643, 0.5
    %v1645 = vtanh.pop %v1644
    %v1646 = vmul.f32 %v1645, 0.5
    %v1647 = vadd.f32 %v1646, 0.5
    %v1648 = vtanh.pop %v1643
    %1650 = vrot.lane.b32.xlu0 %v1536, 32
    %v1651 = vpop.permute.xlu0 %1650
    %v1653 = vmul.f32 %v1647, %v1651
    %1655 = vrot.lane.b32.xlu0 %v1648, 32
    %v1656 = vpop.permute.xlu0 %1655
    %v1658 = vmul.f32 %v1647, %v1656
    %1660 = vrot.lane.b32.xlu0 %v1658, 32
    %v1661 = vpop.permute.xlu0 %1660
    %v1663 = vadd.f32 %v1653, %v1661
    %v1664 = vtanh.pop %v1663
    %1666 = vrot.lane.b32.xlu0 %v1664, 32
    %v1667 = vpop.permute.xlu0 %1666
    %v1669 = vmul.f32 %v1647, %v1667
    %v1670 = vmul.f32 %v1638, 0.5
    %v1671 = vtanh.pop %v1670
    %v1672 = vmul.f32 %v1671, 0.5
    %v1673 = vadd.f32 %v1672, 0.5
    %v1674 = vtanh.pop %v1638
    %v1675 = vmul.f32 %v1673, %v1536
    %1677 = vrot.lane.b32.xlu0 %v1674, 32
    %v1678 = vpop.permute.xlu0 %1677
    %v1680 = vmul.f32 %v1673, %v1678
    %1682 = vrot.lane.b32.xlu0 %v1680, 32
    %v1683 = vpop.permute.xlu0 %1682
    %v1685 = vadd.f32 %v1675, %v1683
    %v1686 = vtanh.pop %v1685
    %1688 = vrot.lane.b32.xlu0 %v1686, 32
    %v1689 = vpop.permute.xlu0 %1688
    %v1691 = vmul.f32 %v1673, %v1689
    %1693 = vrot.lane.b32.xlu0 %v1691, 64
    %v1694 = vpop.permute.xlu0 %1693
    %1696 = vst.msk [vmem:[#allocation3 + $0xe] sm:$0x3] %vm484, %v1694
    %1698 = vrot.lane.b32.xlu0 %v1669, 64
    %v1699 = vpop.permute.xlu0 %1698
    %1701 = vrot.lane.b32.xlu0 %v1691, 96
    %v1702 = vpop.permute.xlu0 %1701
    %v1704 = vsel %vm378, %v1699, %v1702
    %1706 = vrot.lane.b32.xlu0 %v1663, 96
    %v1707 = vpop.permute.xlu0 %1706
    %v1709 = vsel %vm378, %v1707, %v1685
    %v1710 = vpack.c.bf16 %v1704, %v1704
    %v1711 = vld [vmem:[#allocation4] sm:$0xff]
    %v1712 = vld [vmem:[#allocation4 + $0x8] sm:$0xff]
    %v1713 = vld [vmem:[#allocation4 + $0x10] sm:$0xff]
    %v1714 = vld [vmem:[#allocation4 + $0x18] sm:$0xff]
    %v1715 = vld [vmem:[#allocation4 + $0x20] sm:$0xff]
    %v1716 = vld [vmem:[#allocation4 + $0x28] sm:$0xff]
    %v1717 = vld [vmem:[#allocation4 + $0x30] sm:$0xff]
    %v1718 = vld [vmem:[#allocation4 + $0x38] sm:$0xff]
    %v1719 = vld [vmem:[%s3] sm:$0x3]
    %v1721 = vlaneseq
    %v1722 = vshrl.u32 %v1721, 7
    %v1723 = vsub.s32 0, %v1722
    %v1724 = vrot.slane %v1719, %v1723
    %v1725 = vlaneseq
    %v1726 = vshrl.u32 %v1725, 7
    %v1727 = vsub.s32 1, %v1726
    %v1728 = vrot.slane %v1719, %v1727
    %v1739 = vunpack.c.l.b16 %v1711
    %v1740 = vunpack.c.h.b16 %v1711
    %v1741 = vunpack.c.l.b16 %v1712
    %v1742 = vunpack.c.h.b16 %v1712
    %v1743 = vunpack.c.l.b16 %v1713
    %v1744 = vunpack.c.h.b16 %v1713
    %v1745 = vunpack.c.l.b16 %v1714
    %v1746 = vunpack.c.h.b16 %v1714
    %v1747 = vunpack.c.l.b16 %v1715
    %v1748 = vunpack.c.h.b16 %v1715
    %v1749 = vunpack.c.l.b16 %v1716
    %v1750 = vunpack.c.h.b16 %v1716
    %v1751 = vunpack.c.l.b16 %v1717
    %v1752 = vunpack.c.h.b16 %v1717
    %v1753 = vunpack.c.l.b16 %v1718
    %v1754 = vunpack.c.h.b16 %v1718
    %v1755 = vpack.c.b16 %v1741, %v1739
    %v1756 = vpack.c.b16 %v1742, %v1740
    %v1757 = vpack.c.b16 %v1745, %v1743
    %v1758 = vpack.c.b16 %v1746, %v1744
    %v1759 = vpack.c.b16 %v1749, %v1747
    %v1760 = vpack.c.b16 %v1750, %v1748
    %v1761 = vpack.c.b16 %v1753, %v1751
    %v1762 = vpack.c.b16 %v1754, %v1752
    %v1772 = vsel %vm306, %v1710, 0
    %1774 = vmatprep.subr.bf16.mxu0 %v1756
    %1775 = vmatpush1.bf16.msra.mxu0 %v1755
    %1776 = vmatprep.subr.bf16.mxu0 %v1758
    %1777 = vmatpush1.bf16.msra.mxu0 %v1757
    %1778 = vmatprep.subr.bf16.mxu0 %v1760
    %1779 = vmatpush1.bf16.msra.mxu0 %v1759
    %1780 = vmatprep.subr.bf16.mxu0 %v1762
    %1781 = vmatpush1.bf16.msra.mxu0 %v1761
    %1782 = vmatprep.subr.bf16.mxu0 0
    %1783 = vmatpush1.bf16.msra.mxu0 0
    %1784 = vmatprep.subr.bf16.mxu0 0
    %1785 = vmatpush1.bf16.msra.mxu0 0
    %1786 = vmatprep.subr.bf16.mxu0 0
    %1787 = vmatpush1.bf16.msra.mxu0 0
    %1788 = vmatprep.subr.bf16.mxu0 0
    %1789 = vmatpush1.bf16.msra.mxu0 0
    %1790 = vmatprep.subr.bf16.mxu0 0
    %1791 = vmatpush1.bf16.msra.mxu0 0
    %1792 = vmatprep.subr.bf16.mxu0 0
    %1793 = vmatpush1.bf16.msra.mxu0 0
    %1794 = vmatprep.subr.bf16.mxu0 0
    %1795 = vmatpush1.bf16.msra.mxu0 0
    %1796 = vmatprep.subr.bf16.mxu0 0
    %1797 = vmatpush1.bf16.msra.mxu0 0
    %1798 = vmatprep.subr.bf16.mxu0 0
    %1799 = vmatpush1.bf16.msra.mxu0 0
    %1800 = vmatprep.subr.bf16.mxu0 0
    %1801 = vmatpush1.bf16.msra.mxu0 0
    %1802 = vmatprep.subr.bf16.mxu0 0
    %1803 = vmatpush1.bf16.msra.mxu0 0
    %1804 = vmatprep.subr.bf16.mxu0 0
    %1805 = vmatpush1.bf16.msra.mxu0 0
    %1806 = vmatprep.mubr.bf16.mxu0 0
    %1807 = vmatmul.mubr.bf16.gmra.mrb[0].mxu0 %v1772
    %v1808 = vpop.f32.mrb[0].mxu0
    %v1809 = vadd.f32 %v1724, %v1808
    %v1810 = vpop.f32.mrb[0].mxu0
    %v1811 = vadd.f32 %v1728, %v1810
    %v1812 = vpop.f32.mrb[0].mxu0
    %v1813 = vpop.f32.mrb[0].mxu0
    %1814 = vdwg.mxu0
    %v1815 = vld [vmem:[#allocation2 + $0x12] sm:$0x3]
    %v1816 = vadd.f32 %v1809, %v1815
    %v1817 = vmul.f32 %v1816, 0.5
    %v1818 = vtanh.pop %v1817
    %v1819 = vmul.f32 %v1818, 0.5
    %v1820 = vadd.f32 %v1819, 0.5
    %v1821 = vtanh.pop %v1816
    %1823 = vrot.lane.b32.xlu0 %v1709, 32
    %v1824 = vpop.permute.xlu0 %1823
    %v1826 = vmul.f32 %v1820, %v1824
    %1828 = vrot.lane.b32.xlu0 %v1821, 32
    %v1829 = vpop.permute.xlu0 %1828
    %v1831 = vmul.f32 %v1820, %v1829
    %1833 = vrot.lane.b32.xlu0 %v1831, 32
    %v1834 = vpop.permute.xlu0 %1833
    %v1836 = vadd.f32 %v1826, %v1834
    %v1837 = vtanh.pop %v1836
    %1839 = vrot.lane.b32.xlu0 %v1837, 32
    %v1840 = vpop.permute.xlu0 %1839
    %v1842 = vmul.f32 %v1820, %v1840
    %v1843 = vmul.f32 %v1811, 0.5
    %v1844 = vtanh.pop %v1843
    %v1845 = vmul.f32 %v1844, 0.5
    %v1846 = vadd.f32 %v1845, 0.5
    %v1847 = vtanh.pop %v1811
    %v1848 = vmul.f32 %v1846, %v1709
    %1850 = vrot.lane.b32.xlu0 %v1847, 32
    %v1851 = vpop.permute.xlu0 %1850
    %v1853 = vmul.f32 %v1846, %v1851
    %1855 = vrot.lane.b32.xlu0 %v1853, 32
    %v1856 = vpop.permute.xlu0 %1855
    %v1858 = vadd.f32 %v1848, %v1856
    %v1859 = vtanh.pop %v1858
    %1861 = vrot.lane.b32.xlu0 %v1859, 32
    %v1862 = vpop.permute.xlu0 %1861
    %v1864 = vmul.f32 %v1846, %v1862
    %1866 = vrot.lane.b32.xlu0 %v1864, 64
    %v1867 = vpop.permute.xlu0 %1866
    %1869 = vst.msk [vmem:[#allocation3 + $0x10] sm:$0x3] %vm484, %v1867
    %1871 = vrot.lane.b32.xlu0 %v1842, 64
    %v1872 = vpop.permute.xlu0 %1871
    %1874 = vrot.lane.b32.xlu0 %v1864, 96
    %v1875 = vpop.permute.xlu0 %1874
    %v1877 = vsel %vm378, %v1872, %v1875
    %1879 = vrot.lane.b32.xlu0 %v1836, 96
    %v1880 = vpop.permute.xlu0 %1879
    %v1882 = vsel %vm378, %v1880, %v1858
    %v1883 = vpack.c.bf16 %v1877, %v1877
    %v1884 = vld [vmem:[#allocation4] sm:$0xff]
    %v1885 = vld [vmem:[#allocation4 + $0x8] sm:$0xff]
    %v1886 = vld [vmem:[#allocation4 + $0x10] sm:$0xff]
    %v1887 = vld [vmem:[#allocation4 + $0x18] sm:$0xff]
    %v1888 = vld [vmem:[#allocation4 + $0x20] sm:$0xff]
    %v1889 = vld [vmem:[#allocation4 + $0x28] sm:$0xff]
    %v1890 = vld [vmem:[#allocation4 + $0x30] sm:$0xff]
    %v1891 = vld [vmem:[#allocation4 + $0x38] sm:$0xff]
    %v1892 = vld [vmem:[%s3] sm:$0x3]
    %v1894 = vlaneseq
    %v1895 = vshrl.u32 %v1894, 7
    %v1896 = vsub.s32 0, %v1895
    %v1897 = vrot.slane %v1892, %v1896
    %v1898 = vlaneseq
    %v1899 = vshrl.u32 %v1898, 7
    %v1900 = vsub.s32 1, %v1899
    %v1901 = vrot.slane %v1892, %v1900
    %v1912 = vunpack.c.l.b16 %v1884
    %v1913 = vunpack.c.h.b16 %v1884
    %v1914 = vunpack.c.l.b16 %v1885
    %v1915 = vunpack.c.h.b16 %v1885
    %v1916 = vunpack.c.l.b16 %v1886
    %v1917 = vunpack.c.h.b16 %v1886
    %v1918 = vunpack.c.l.b16 %v1887
    %v1919 = vunpack.c.h.b16 %v1887
    %v1920 = vunpack.c.l.b16 %v1888
    %v1921 = vunpack.c.h.b16 %v1888
    %v1922 = vunpack.c.l.b16 %v1889
    %v1923 = vunpack.c.h.b16 %v1889
    %v1924 = vunpack.c.l.b16 %v1890
    %v1925 = vunpack.c.h.b16 %v1890
    %v1926 = vunpack.c.l.b16 %v1891
    %v1927 = vunpack.c.h.b16 %v1891
    %v1928 = vpack.c.b16 %v1914, %v1912
    %v1929 = vpack.c.b16 %v1915, %v1913
    %v1930 = vpack.c.b16 %v1918, %v1916
    %v1931 = vpack.c.b16 %v1919, %v1917
    %v1932 = vpack.c.b16 %v1922, %v1920
    %v1933 = vpack.c.b16 %v1923, %v1921
    %v1934 = vpack.c.b16 %v1926, %v1924
    %v1935 = vpack.c.b16 %v1927, %v1925
    %v1945 = vsel %vm306, %v1883, 0
    %1947 = vmatprep.subr.bf16.mxu0 %v1929
    %1948 = vmatpush1.bf16.msra.mxu0 %v1928
    %1949 = vmatprep.subr.bf16.mxu0 %v1931
    %1950 = vmatpush1.bf16.msra.mxu0 %v1930
    %1951 = vmatprep.subr.bf16.mxu0 %v1933
    %1952 = vmatpush1.bf16.msra.mxu0 %v1932
    %1953 = vmatprep.subr.bf16.mxu0 %v1935
    %1954 = vmatpush1.bf16.msra.mxu0 %v1934
    %1955 = vmatprep.subr.bf16.mxu0 0
    %1956 = vmatpush1.bf16.msra.mxu0 0
    %1957 = vmatprep.subr.bf16.mxu0 0
    %1958 = vmatpush1.bf16.msra.mxu0 0
    %1959 = vmatprep.subr.bf16.mxu0 0
    %1960 = vmatpush1.bf16.msra.mxu0 0
    %1961 = vmatprep.subr.bf16.mxu0 0
    %1962 = vmatpush1.bf16.msra.mxu0 0
    %1963 = vmatprep.subr.bf16.mxu0 0
    %1964 = vmatpush1.bf16.msra.mxu0 0
    %1965 = vmatprep.subr.bf16.mxu0 0
    %1966 = vmatpush1.bf16.msra.mxu0 0
    %1967 = vmatprep.subr.bf16.mxu0 0
    %1968 = vmatpush1.bf16.msra.mxu0 0
    %1969 = vmatprep.subr.bf16.mxu0 0
    %1970 = vmatpush1.bf16.msra.mxu0 0
    %1971 = vmatprep.subr.bf16.mxu0 0
    %1972 = vmatpush1.bf16.msra.mxu0 0
    %1973 = vmatprep.subr.bf16.mxu0 0
    %1974 = vmatpush1.bf16.msra.mxu0 0
    %1975 = vmatprep.subr.bf16.mxu0 0
    %1976 = vmatpush1.bf16.msra.mxu0 0
    %1977 = vmatprep.subr.bf16.mxu0 0
    %1978 = vmatpush1.bf16.msra.mxu0 0
    %1979 = vmatprep.mubr.bf16.mxu0 0
    %1980 = vmatmul.mubr.bf16.gmra.mrb[0].mxu0 %v1945
    %v1981 = vpop.f32.mrb[0].mxu0
    %v1982 = vadd.f32 %v1897, %v1981
    %v1983 = vpop.f32.mrb[0].mxu0
    %v1984 = vadd.f32 %v1901, %v1983
    %v1985 = vpop.f32.mrb[0].mxu0
    %v1986 = vpop.f32.mrb[0].mxu0
    %1987 = vdwg.mxu0
    %v1988 = vld [vmem:[#allocation2 + $0x14] sm:$0x3]
    %v1989 = vadd.f32 %v1982, %v1988
    %v1990 = vmul.f32 %v1989, 0.5
    %v1991 = vtanh.pop %v1990
    %v1992 = vmul.f32 %v1991, 0.5
    %v1993 = vadd.f32 %v1992, 0.5
    %v1994 = vtanh.pop %v1989
    %1996 = vrot.lane.b32.xlu0 %v1882, 32
    %v1997 = vpop.permute.xlu0 %1996
    %v1999 = vmul.f32 %v1993, %v1997
    %2001 = vrot.lane.b32.xlu0 %v1994, 32
    %v2002 = vpop.permute.xlu0 %2001
    %v2004 = vmul.f32 %v1993, %v2002
    %2006 = vrot.lane.b32.xlu0 %v2004, 32
    %v2007 = vpop.permute.xlu0 %2006
    %v2009 = vadd.f32 %v1999, %v2007
    %v2010 = vtanh.pop %v2009
    %2012 = vrot.lane.b32.xlu0 %v2010, 32
    %v2013 = vpop.permute.xlu0 %2012
    %v2015 = vmul.f32 %v1993, %v2013
    %v2016 = vmul.f32 %v1984, 0.5
    %v2017 = vtanh.pop %v2016
    %v2018 = vmul.f32 %v2017, 0.5
    %v2019 = vadd.f32 %v2018, 0.5
    %v2020 = vtanh.pop %v1984
    %v2021 = vmul.f32 %v2019, %v1882
    %2023 = vrot.lane.b32.xlu0 %v2020, 32
    %v2024 = vpop.permute.xlu0 %2023
    %v2026 = vmul.f32 %v2019, %v2024
    %2028 = vrot.lane.b32.xlu0 %v2026, 32
    %v2029 = vpop.permute.xlu0 %2028
    %v2031 = vadd.f32 %v2021, %v2029
    %v2032 = vtanh.pop %v2031
    %2034 = vrot.lane.b32.xlu0 %v2032, 32
    %v2035 = vpop.permute.xlu0 %2034
    %v2037 = vmul.f32 %v2019, %v2035
    %2039 = vrot.lane.b32.xlu0 %v2037, 64
    %v2040 = vpop.permute.xlu0 %2039
    %2042 = vst.msk [vmem:[#allocation3 + $0x12] sm:$0x3] %vm484, %v2040
    %2044 = vrot.lane.b32.xlu0 %v2015, 64
    %v2045 = vpop.permute.xlu0 %2044
    %2047 = vrot.lane.b32.xlu0 %v2037, 96
    %v2048 = vpop.permute.xlu0 %2047
    %v2050 = vsel %vm378, %v2045, %v2048
    %2052 = vrot.lane.b32.xlu0 %v2009, 96
    %v2053 = vpop.permute.xlu0 %2052
    %v2055 = vsel %vm378, %v2053, %v2031
    %v2056 = vpack.c.bf16 %v2050, %v2050
    %v2057 = vld [vmem:[#allocation4] sm:$0xff]
    %v2058 = vld [vmem:[#allocation4 + $0x8] sm:$0xff]
    %v2059 = vld [vmem:[#allocation4 + $0x10] sm:$0xff]
    %v2060 = vld [vmem:[#allocation4 + $0x18] sm:$0xff]
    %v2061 = vld [vmem:[#allocation4 + $0x20] sm:$0xff]
    %v2062 = vld [vmem:[#allocation4 + $0x28] sm:$0xff]
    %v2063 = vld [vmem:[#allocation4 + $0x30] sm:$0xff]
    %v2064 = vld [vmem:[#allocation4 + $0x38] sm:$0xff]
    %v2065 = vld [vmem:[%s3] sm:$0x3]
    %v2067 = vlaneseq
    %v2068 = vshrl.u32 %v2067, 7
    %v2069 = vsub.s32 0, %v2068
    %v2070 = vrot.slane %v2065, %v2069
    %v2071 = vlaneseq
    %v2072 = vshrl.u32 %v2071, 7
    %v2073 = vsub.s32 1, %v2072
    %v2074 = vrot.slane %v2065, %v2073
    %v2085 = vunpack.c.l.b16 %v2057
    %v2086 = vunpack.c.h.b16 %v2057
    %v2087 = vunpack.c.l.b16 %v2058
    %v2088 = vunpack.c.h.b16 %v2058
    %v2089 = vunpack.c.l.b16 %v2059
    %v2090 = vunpack.c.h.b16 %v2059
    %v2091 = vunpack.c.l.b16 %v2060
    %v2092 = vunpack.c.h.b16 %v2060
    %v2093 = vunpack.c.l.b16 %v2061
    %v2094 = vunpack.c.h.b16 %v2061
    %v2095 = vunpack.c.l.b16 %v2062
    %v2096 = vunpack.c.h.b16 %v2062
    %v2097 = vunpack.c.l.b16 %v2063
    %v2098 = vunpack.c.h.b16 %v2063
    %v2099 = vunpack.c.l.b16 %v2064
    %v2100 = vunpack.c.h.b16 %v2064
    %v2101 = vpack.c.b16 %v2087, %v2085
    %v2102 = vpack.c.b16 %v2088, %v2086
    %v2103 = vpack.c.b16 %v2091, %v2089
    %v2104 = vpack.c.b16 %v2092, %v2090
    %v2105 = vpack.c.b16 %v2095, %v2093
    %v2106 = vpack.c.b16 %v2096, %v2094
    %v2107 = vpack.c.b16 %v2099, %v2097
    %v2108 = vpack.c.b16 %v2100, %v2098
    %v2118 = vsel %vm306, %v2056, 0
    %2120 = vmatprep.subr.bf16.mxu0 %v2102
    %2121 = vmatpush1.bf16.msra.mxu0 %v2101
    %2122 = vmatprep.subr.bf16.mxu0 %v2104
    %2123 = vmatpush1.bf16.msra.mxu0 %v2103
    %2124 = vmatprep.subr.bf16.mxu0 %v2106
    %2125 = vmatpush1.bf16.msra.mxu0 %v2105
    %2126 = vmatprep.subr.bf16.mxu0 %v2108
    %2127 = vmatpush1.bf16.msra.mxu0 %v2107
    %2128 = vmatprep.subr.bf16.mxu0 0
    %2129 = vmatpush1.bf16.msra.mxu0 0
    %2130 = vmatprep.subr.bf16.mxu0 0
    %2131 = vmatpush1.bf16.msra.mxu0 0
    %2132 = vmatprep.subr.bf16.mxu0 0
    %2133 = vmatpush1.bf16.msra.mxu0 0
    %2134 = vmatprep.subr.bf16.mxu0 0
    %2135 = vmatpush1.bf16.msra.mxu0 0
    %2136 = vmatprep.subr.bf16.mxu0 0
    %2137 = vmatpush1.bf16.msra.mxu0 0
    %2138 = vmatprep.subr.bf16.mxu0 0
    %2139 = vmatpush1.bf16.msra.mxu0 0
    %2140 = vmatprep.subr.bf16.mxu0 0
    %2141 = vmatpush1.bf16.msra.mxu0 0
    %2142 = vmatprep.subr.bf16.mxu0 0
    %2143 = vmatpush1.bf16.msra.mxu0 0
    %2144 = vmatprep.subr.bf16.mxu0 0
    %2145 = vmatpush1.bf16.msra.mxu0 0
    %2146 = vmatprep.subr.bf16.mxu0 0
    %2147 = vmatpush1.bf16.msra.mxu0 0
    %2148 = vmatprep.subr.bf16.mxu0 0
    %2149 = vmatpush1.bf16.msra.mxu0 0
    %2150 = vmatprep.subr.bf16.mxu0 0
    %2151 = vmatpush1.bf16.msra.mxu0 0
    %2152 = vmatprep.mubr.bf16.mxu0 0
    %2153 = vmatmul.mubr.bf16.gmra.mrb[0].mxu0 %v2118
    %v2154 = vpop.f32.mrb[0].mxu0
    %v2155 = vadd.f32 %v2070, %v2154
    %v2156 = vpop.f32.mrb[0].mxu0
    %v2157 = vadd.f32 %v2074, %v2156
    %v2158 = vpop.f32.mrb[0].mxu0
    %v2159 = vpop.f32.mrb[0].mxu0
    %2160 = vdwg.mxu0
    %v2161 = vld [vmem:[#allocation2 + $0x16] sm:$0x3]
    %v2162 = vadd.f32 %v2155, %v2161
    %v2163 = vmul.f32 %v2162, 0.5
    %v2164 = vtanh.pop %v2163
    %v2165 = vmul.f32 %v2164, 0.5
    %v2166 = vadd.f32 %v2165, 0.5
    %v2167 = vtanh.pop %v2162
    %2169 = vrot.lane.b32.xlu0 %v2055, 32
    %v2170 = vpop.permute.xlu0 %2169
    %v2172 = vmul.f32 %v2166, %v2170
    %2174 = vrot.lane.b32.xlu0 %v2167, 32
    %v2175 = vpop.permute.xlu0 %2174
    %v2177 = vmul.f32 %v2166, %v2175
    %2179 = vrot.lane.b32.xlu0 %v2177, 32
    %v2180 = vpop.permute.xlu0 %2179
    %v2182 = vadd.f32 %v2172, %v2180
    %v2183 = vtanh.pop %v2182
    %2185 = vrot.lane.b32.xlu0 %v2183, 32
    %v2186 = vpop.permute.xlu0 %2185
    %v2188 = vmul.f32 %v2166, %v2186
    %v2189 = vmul.f32 %v2157, 0.5
    %v2190 = vtanh.pop %v2189
    %v2191 = vmul.f32 %v2190, 0.5
    %v2192 = vadd.f32 %v2191, 0.5
    %v2193 = vtanh.pop %v2157
    %v2194 = vmul.f32 %v2192, %v2055
    %2196 = vrot.lane.b32.xlu0 %v2193, 32
    %v2197 = vpop.permute.xlu0 %2196
    %v2199 = vmul.f32 %v2192, %v2197
    %2201 = vrot.lane.b32.xlu0 %v2199, 32
    %v2202 = vpop.permute.xlu0 %2201
    %v2204 = vadd.f32 %v2194, %v2202
    %v2205 = vtanh.pop %v2204
    %2207 = vrot.lane.b32.xlu0 %v2205, 32
    %v2208 = vpop.permute.xlu0 %2207
    %v2210 = vmul.f32 %v2192, %v2208
    %2212 = vrot.lane.b32.xlu0 %v2210, 64
    %v2213 = vpop.permute.xlu0 %2212
    %2215 = vst.msk [vmem:[#allocation3 + $0x14] sm:$0x3] %vm484, %v2213
    %2217 = vrot.lane.b32.xlu0 %v2188, 64
    %v2218 = vpop.permute.xlu0 %2217
    %2220 = vrot.lane.b32.xlu0 %v2210, 96
    %v2221 = vpop.permute.xlu0 %2220
    %v2223 = vsel %vm378, %v2218, %v2221
    %2225 = vrot.lane.b32.xlu0 %v2182, 96
    %v2226 = vpop.permute.xlu0 %2225
    %v2228 = vsel %vm378, %v2226, %v2204
    %v2229 = vpack.c.bf16 %v2223, %v2223
    %v2230 = vld [vmem:[#allocation4] sm:$0xff]
    %v2231 = vld [vmem:[#allocation4 + $0x8] sm:$0xff]
    %v2232 = vld [vmem:[#allocation4 + $0x10] sm:$0xff]
    %v2233 = vld [vmem:[#allocation4 + $0x18] sm:$0xff]
    %v2234 = vld [vmem:[#allocation4 + $0x20] sm:$0xff]
    %v2235 = vld [vmem:[#allocation4 + $0x28] sm:$0xff]
    %v2236 = vld [vmem:[#allocation4 + $0x30] sm:$0xff]
    %v2237 = vld [vmem:[#allocation4 + $0x38] sm:$0xff]
    %v2238 = vld [vmem:[%s3] sm:$0x3]
    %v2240 = vlaneseq
    %v2241 = vshrl.u32 %v2240, 7
    %v2242 = vsub.s32 0, %v2241
    %v2243 = vrot.slane %v2238, %v2242
    %v2244 = vlaneseq
    %v2245 = vshrl.u32 %v2244, 7
    %v2246 = vsub.s32 1, %v2245
    %v2247 = vrot.slane %v2238, %v2246
    %v2258 = vunpack.c.l.b16 %v2230
    %v2259 = vunpack.c.h.b16 %v2230
    %v2260 = vunpack.c.l.b16 %v2231
    %v2261 = vunpack.c.h.b16 %v2231
    %v2262 = vunpack.c.l.b16 %v2232
    %v2263 = vunpack.c.h.b16 %v2232
    %v2264 = vunpack.c.l.b16 %v2233
    %v2265 = vunpack.c.h.b16 %v2233
    %v2266 = vunpack.c.l.b16 %v2234
    %v2267 = vunpack.c.h.b16 %v2234
    %v2268 = vunpack.c.l.b16 %v2235
    %v2269 = vunpack.c.h.b16 %v2235
    %v2270 = vunpack.c.l.b16 %v2236
    %v2271 = vunpack.c.h.b16 %v2236
    %v2272 = vunpack.c.l.b16 %v2237
    %v2273 = vunpack.c.h.b16 %v2237
    %v2274 = vpack.c.b16 %v2260, %v2258
    %v2275 = vpack.c.b16 %v2261, %v2259
    %v2276 = vpack.c.b16 %v2264, %v2262
    %v2277 = vpack.c.b16 %v2265, %v2263
    %v2278 = vpack.c.b16 %v2268, %v2266
    %v2279 = vpack.c.b16 %v2269, %v2267
    %v2280 = vpack.c.b16 %v2272, %v2270
    %v2281 = vpack.c.b16 %v2273, %v2271
    %v2291 = vsel %vm306, %v2229, 0
    %2293 = vmatprep.subr.bf16.mxu0 %v2275
    %2294 = vmatpush1.bf16.msra.mxu0 %v2274
    %2295 = vmatprep.subr.bf16.mxu0 %v2277
    %2296 = vmatpush1.bf16.msra.mxu0 %v2276
    %2297 = vmatprep.subr.bf16.mxu0 %v2279
    %2298 = vmatpush1.bf16.msra.mxu0 %v2278
    %2299 = vmatprep.subr.bf16.mxu0 %v2281
    %2300 = vmatpush1.bf16.msra.mxu0 %v2280
    %2301 = vmatprep.subr.bf16.mxu0 0
    %2302 = vmatpush1.bf16.msra.mxu0 0
    %2303 = vmatprep.subr.bf16.mxu0 0
    %2304 = vmatpush1.bf16.msra.mxu0 0
    %2305 = vmatprep.subr.bf16.mxu0 0
    %2306 = vmatpush1.bf16.msra.mxu0 0
    %2307 = vmatprep.subr.bf16.mxu0 0
    %2308 = vmatpush1.bf16.msra.mxu0 0
    %2309 = vmatprep.subr.bf16.mxu0 0
    %2310 = vmatpush1.bf16.msra.mxu0 0
    %2311 = vmatprep.subr.bf16.mxu0 0
    %2312 = vmatpush1.bf16.msra.mxu0 0
    %2313 = vmatprep.subr.bf16.mxu0 0
    %2314 = vmatpush1.bf16.msra.mxu0 0
    %2315 = vmatprep.subr.bf16.mxu0 0
    %2316 = vmatpush1.bf16.msra.mxu0 0
    %2317 = vmatprep.subr.bf16.mxu0 0
    %2318 = vmatpush1.bf16.msra.mxu0 0
    %2319 = vmatprep.subr.bf16.mxu0 0
    %2320 = vmatpush1.bf16.msra.mxu0 0
    %2321 = vmatprep.subr.bf16.mxu0 0
    %2322 = vmatpush1.bf16.msra.mxu0 0
    %2323 = vmatprep.subr.bf16.mxu0 0
    %2324 = vmatpush1.bf16.msra.mxu0 0
    %2325 = vmatprep.mubr.bf16.mxu0 0
    %2326 = vmatmul.mubr.bf16.gmra.mrb[0].mxu0 %v2291
    %v2327 = vpop.f32.mrb[0].mxu0
    %v2328 = vadd.f32 %v2243, %v2327
    %v2329 = vpop.f32.mrb[0].mxu0
    %v2330 = vadd.f32 %v2247, %v2329
    %v2331 = vpop.f32.mrb[0].mxu0
    %v2332 = vpop.f32.mrb[0].mxu0
    %2333 = vdwg.mxu0
    %v2334 = vld [vmem:[#allocation2 + $0x18] sm:$0x3]
    %v2335 = vadd.f32 %v2328, %v2334
    %v2336 = vmul.f32 %v2335, 0.5
    %v2337 = vtanh.pop %v2336
    %v2338 = vmul.f32 %v2337, 0.5
    %v2339 = vadd.f32 %v2338, 0.5
    %v2340 = vtanh.pop %v2335
    %2342 = vrot.lane.b32.xlu0 %v2228, 32
    %v2343 = vpop.permute.xlu0 %2342
    %v2345 = vmul.f32 %v2339, %v2343
    %2347 = vrot.lane.b32.xlu0 %v2340, 32
    %v2348 = vpop.permute.xlu0 %2347
    %v2350 = vmul.f32 %v2339, %v2348
    %2352 = vrot.lane.b32.xlu0 %v2350, 32
    %v2353 = vpop.permute.xlu0 %2352
    %v2355 = vadd.f32 %v2345, %v2353
    %v2356 = vtanh.pop %v2355
    %2358 = vrot.lane.b32.xlu0 %v2356, 32
    %v2359 = vpop.permute.xlu0 %2358
    %v2361 = vmul.f32 %v2339, %v2359
    %v2362 = vmul.f32 %v2330, 0.5
    %v2363 = vtanh.pop %v2362
    %v2364 = vmul.f32 %v2363, 0.5
    %v2365 = vadd.f32 %v2364, 0.5
    %v2366 = vtanh.pop %v2330
    %v2367 = vmul.f32 %v2365, %v2228
    %2369 = vrot.lane.b32.xlu0 %v2366, 32
    %v2370 = vpop.permute.xlu0 %2369
    %v2372 = vmul.f32 %v2365, %v2370
    %2374 = vrot.lane.b32.xlu0 %v2372, 32
    %v2375 = vpop.permute.xlu0 %2374
    %v2377 = vadd.f32 %v2367, %v2375
    %v2378 = vtanh.pop %v2377
    %2380 = vrot.lane.b32.xlu0 %v2378, 32
    %v2381 = vpop.permute.xlu0 %2380
    %v2383 = vmul.f32 %v2365, %v2381
    %2385 = vrot.lane.b32.xlu0 %v2383, 64
    %v2386 = vpop.permute.xlu0 %2385
    %2388 = vst.msk [vmem:[#allocation3 + $0x16] sm:$0x3] %vm484, %v2386
    %2390 = vrot.lane.b32.xlu0 %v2361, 64
    %v2391 = vpop.permute.xlu0 %2390
    %2393 = vrot.lane.b32.xlu0 %v2383, 96
    %v2394 = vpop.permute.xlu0 %2393
    %v2396 = vsel %vm378, %v2391, %v2394
    %2398 = vrot.lane.b32.xlu0 %v2355, 96
    %v2399 = vpop.permute.xlu0 %2398
    %v2401 = vsel %vm378, %v2399, %v2377
    %v2402 = vpack.c.bf16 %v2396, %v2396
    %v2403 = vld [vmem:[#allocation4] sm:$0xff]
    %v2404 = vld [vmem:[#allocation4 + $0x8] sm:$0xff]
    %v2405 = vld [vmem:[#allocation4 + $0x10] sm:$0xff]
    %v2406 = vld [vmem:[#allocation4 + $0x18] sm:$0xff]
    %v2407 = vld [vmem:[#allocation4 + $0x20] sm:$0xff]
    %v2408 = vld [vmem:[#allocation4 + $0x28] sm:$0xff]
    %v2409 = vld [vmem:[#allocation4 + $0x30] sm:$0xff]
    %v2410 = vld [vmem:[#allocation4 + $0x38] sm:$0xff]
    %v2411 = vld [vmem:[%s3] sm:$0x3]
    %v2413 = vlaneseq
    %v2414 = vshrl.u32 %v2413, 7
    %v2415 = vsub.s32 0, %v2414
    %v2416 = vrot.slane %v2411, %v2415
    %v2417 = vlaneseq
    %v2418 = vshrl.u32 %v2417, 7
    %v2419 = vsub.s32 1, %v2418
    %v2420 = vrot.slane %v2411, %v2419
    %v2431 = vunpack.c.l.b16 %v2403
    %v2432 = vunpack.c.h.b16 %v2403
    %v2433 = vunpack.c.l.b16 %v2404
    %v2434 = vunpack.c.h.b16 %v2404
    %v2435 = vunpack.c.l.b16 %v2405
    %v2436 = vunpack.c.h.b16 %v2405
    %v2437 = vunpack.c.l.b16 %v2406
    %v2438 = vunpack.c.h.b16 %v2406
    %v2439 = vunpack.c.l.b16 %v2407
    %v2440 = vunpack.c.h.b16 %v2407
    %v2441 = vunpack.c.l.b16 %v2408
    %v2442 = vunpack.c.h.b16 %v2408
    %v2443 = vunpack.c.l.b16 %v2409
    %v2444 = vunpack.c.h.b16 %v2409
    %v2445 = vunpack.c.l.b16 %v2410
    %v2446 = vunpack.c.h.b16 %v2410
    %v2447 = vpack.c.b16 %v2433, %v2431
    %v2448 = vpack.c.b16 %v2434, %v2432
    %v2449 = vpack.c.b16 %v2437, %v2435
    %v2450 = vpack.c.b16 %v2438, %v2436
    %v2451 = vpack.c.b16 %v2441, %v2439
    %v2452 = vpack.c.b16 %v2442, %v2440
    %v2453 = vpack.c.b16 %v2445, %v2443
    %v2454 = vpack.c.b16 %v2446, %v2444
    %v2464 = vsel %vm306, %v2402, 0
    %2466 = vmatprep.subr.bf16.mxu0 %v2448
    %2467 = vmatpush1.bf16.msra.mxu0 %v2447
    %2468 = vmatprep.subr.bf16.mxu0 %v2450
    %2469 = vmatpush1.bf16.msra.mxu0 %v2449
    %2470 = vmatprep.subr.bf16.mxu0 %v2452
    %2471 = vmatpush1.bf16.msra.mxu0 %v2451
    %2472 = vmatprep.subr.bf16.mxu0 %v2454
    %2473 = vmatpush1.bf16.msra.mxu0 %v2453
    %2474 = vmatprep.subr.bf16.mxu0 0
    %2475 = vmatpush1.bf16.msra.mxu0 0
    %2476 = vmatprep.subr.bf16.mxu0 0
    %2477 = vmatpush1.bf16.msra.mxu0 0
    %2478 = vmatprep.subr.bf16.mxu0 0
    %2479 = vmatpush1.bf16.msra.mxu0 0
    %2480 = vmatprep.subr.bf16.mxu0 0
    %2481 = vmatpush1.bf16.msra.mxu0 0
    %2482 = vmatprep.subr.bf16.mxu0 0
    %2483 = vmatpush1.bf16.msra.mxu0 0
    %2484 = vmatprep.subr.bf16.mxu0 0
    %2485 = vmatpush1.bf16.msra.mxu0 0
    %2486 = vmatprep.subr.bf16.mxu0 0
    %2487 = vmatpush1.bf16.msra.mxu0 0
    %2488 = vmatprep.subr.bf16.mxu0 0
    %2489 = vmatpush1.bf16.msra.mxu0 0
    %2490 = vmatprep.subr.bf16.mxu0 0
    %2491 = vmatpush1.bf16.msra.mxu0 0
    %2492 = vmatprep.subr.bf16.mxu0 0
    %2493 = vmatpush1.bf16.msra.mxu0 0
    %2494 = vmatprep.subr.bf16.mxu0 0
    %2495 = vmatpush1.bf16.msra.mxu0 0
    %2496 = vmatprep.subr.bf16.mxu0 0
    %2497 = vmatpush1.bf16.msra.mxu0 0
    %2498 = vmatprep.mubr.bf16.mxu0 0
    %2499 = vmatmul.mubr.bf16.gmra.mrb[0].mxu0 %v2464
    %v2500 = vpop.f32.mrb[0].mxu0
    %v2501 = vadd.f32 %v2416, %v2500
    %v2502 = vpop.f32.mrb[0].mxu0
    %v2503 = vadd.f32 %v2420, %v2502
    %v2504 = vpop.f32.mrb[0].mxu0
    %v2505 = vpop.f32.mrb[0].mxu0
    %2506 = vdwg.mxu0
    %v2507 = vld [vmem:[#allocation2 + $0x1a] sm:$0x3]
    %v2508 = vadd.f32 %v2501, %v2507
    %v2509 = vmul.f32 %v2508, 0.5
    %v2510 = vtanh.pop %v2509
    %v2511 = vmul.f32 %v2510, 0.5
    %v2512 = vadd.f32 %v2511, 0.5
    %v2513 = vtanh.pop %v2508
    %2515 = vrot.lane.b32.xlu0 %v2401, 32
    %v2516 = vpop.permute.xlu0 %2515
    %v2518 = vmul.f32 %v2512, %v2516
    %2520 = vrot.lane.b32.xlu0 %v2513, 32
    %v2521 = vpop.permute.xlu0 %2520
    %v2523 = vmul.f32 %v2512, %v2521
    %2525 = vrot.lane.b32.xlu0 %v2523, 32
    %v2526 = vpop.permute.xlu0 %2525
    %v2528 = vadd.f32 %v2518, %v2526
    %v2529 = vtanh.pop %v2528
    %2531 = vrot.lane.b32.xlu0 %v2529, 32
    %v2532 = vpop.permute.xlu0 %2531
    %v2534 = vmul.f32 %v2512, %v2532
    %v2535 = vmul.f32 %v2503, 0.5
    %v2536 = vtanh.pop %v2535
    %v2537 = vmul.f32 %v2536, 0.5
    %v2538 = vadd.f32 %v2537, 0.5
    %v2539 = vtanh.pop %v2503
    %v2540 = vmul.f32 %v2538, %v2401
    %2542 = vrot.lane.b32.xlu0 %v2539, 32
    %v2543 = vpop.permute.xlu0 %2542
    %v2545 = vmul.f32 %v2538, %v2543
    %2547 = vrot.lane.b32.xlu0 %v2545, 32
    %v2548 = vpop.permute.xlu0 %2547
    %v2550 = vadd.f32 %v2540, %v2548
    %v2551 = vtanh.pop %v2550
    %2553 = vrot.lane.b32.xlu0 %v2551, 32
    %v2554 = vpop.permute.xlu0 %2553
    %v2556 = vmul.f32 %v2538, %v2554
    %2558 = vrot.lane.b32.xlu0 %v2556, 64
    %v2559 = vpop.permute.xlu0 %2558
    %2561 = vst.msk [vmem:[#allocation3 + $0x18] sm:$0x3] %vm484, %v2559
    %2563 = vrot.lane.b32.xlu0 %v2534, 64
    %v2564 = vpop.permute.xlu0 %2563
    %2566 = vrot.lane.b32.xlu0 %v2556, 96
    %v2567 = vpop.permute.xlu0 %2566
    %v2569 = vsel %vm378, %v2564, %v2567
    %2571 = vrot.lane.b32.xlu0 %v2528, 96
    %v2572 = vpop.permute.xlu0 %2571
    %v2574 = vsel %vm378, %v2572, %v2550
    %v2575 = vpack.c.bf16 %v2569, %v2569
    %v2576 = vld [vmem:[#allocation4] sm:$0xff]
    %v2577 = vld [vmem:[#allocation4 + $0x8] sm:$0xff]
    %v2578 = vld [vmem:[#allocation4 + $0x10] sm:$0xff]
    %v2579 = vld [vmem:[#allocation4 + $0x18] sm:$0xff]
    %v2580 = vld [vmem:[#allocation4 + $0x20] sm:$0xff]
    %v2581 = vld [vmem:[#allocation4 + $0x28] sm:$0xff]
    %v2582 = vld [vmem:[#allocation4 + $0x30] sm:$0xff]
    %v2583 = vld [vmem:[#allocation4 + $0x38] sm:$0xff]
    %v2584 = vld [vmem:[%s3] sm:$0x3]
    %v2586 = vlaneseq
    %v2587 = vshrl.u32 %v2586, 7
    %v2588 = vsub.s32 0, %v2587
    %v2589 = vrot.slane %v2584, %v2588
    %v2590 = vlaneseq
    %v2591 = vshrl.u32 %v2590, 7
    %v2592 = vsub.s32 1, %v2591
    %v2593 = vrot.slane %v2584, %v2592
    %v2604 = vunpack.c.l.b16 %v2576
    %v2605 = vunpack.c.h.b16 %v2576
    %v2606 = vunpack.c.l.b16 %v2577
    %v2607 = vunpack.c.h.b16 %v2577
    %v2608 = vunpack.c.l.b16 %v2578
    %v2609 = vunpack.c.h.b16 %v2578
    %v2610 = vunpack.c.l.b16 %v2579
    %v2611 = vunpack.c.h.b16 %v2579
    %v2612 = vunpack.c.l.b16 %v2580
    %v2613 = vunpack.c.h.b16 %v2580
    %v2614 = vunpack.c.l.b16 %v2581
    %v2615 = vunpack.c.h.b16 %v2581
    %v2616 = vunpack.c.l.b16 %v2582
    %v2617 = vunpack.c.h.b16 %v2582
    %v2618 = vunpack.c.l.b16 %v2583
    %v2619 = vunpack.c.h.b16 %v2583
    %v2620 = vpack.c.b16 %v2606, %v2604
    %v2621 = vpack.c.b16 %v2607, %v2605
    %v2622 = vpack.c.b16 %v2610, %v2608
    %v2623 = vpack.c.b16 %v2611, %v2609
    %v2624 = vpack.c.b16 %v2614, %v2612
    %v2625 = vpack.c.b16 %v2615, %v2613
    %v2626 = vpack.c.b16 %v2618, %v2616
    %v2627 = vpack.c.b16 %v2619, %v2617
    %v2637 = vsel %vm306, %v2575, 0
    %2639 = vmatprep.subr.bf16.mxu0 %v2621
    %2640 = vmatpush1.bf16.msra.mxu0 %v2620
    %2641 = vmatprep.subr.bf16.mxu0 %v2623
    %2642 = vmatpush1.bf16.msra.mxu0 %v2622
    %2643 = vmatprep.subr.bf16.mxu0 %v2625
    %2644 = vmatpush1.bf16.msra.mxu0 %v2624
    %2645 = vmatprep.subr.bf16.mxu0 %v2627
    %2646 = vmatpush1.bf16.msra.mxu0 %v2626
    %2647 = vmatprep.subr.bf16.mxu0 0
    %2648 = vmatpush1.bf16.msra.mxu0 0
    %2649 = vmatprep.subr.bf16.mxu0 0
    %2650 = vmatpush1.bf16.msra.mxu0 0
    %2651 = vmatprep.subr.bf16.mxu0 0
    %2652 = vmatpush1.bf16.msra.mxu0 0
    %2653 = vmatprep.subr.bf16.mxu0 0
    %2654 = vmatpush1.bf16.msra.mxu0 0
    %2655 = vmatprep.subr.bf16.mxu0 0
    %2656 = vmatpush1.bf16.msra.mxu0 0
    %2657 = vmatprep.subr.bf16.mxu0 0
    %2658 = vmatpush1.bf16.msra.mxu0 0
    %2659 = vmatprep.subr.bf16.mxu0 0
    %2660 = vmatpush1.bf16.msra.mxu0 0
    %2661 = vmatprep.subr.bf16.mxu0 0
    %2662 = vmatpush1.bf16.msra.mxu0 0
    %2663 = vmatprep.subr.bf16.mxu0 0
    %2664 = vmatpush1.bf16.msra.mxu0 0
    %2665 = vmatprep.subr.bf16.mxu0 0
    %2666 = vmatpush1.bf16.msra.mxu0 0
    %2667 = vmatprep.subr.bf16.mxu0 0
    %2668 = vmatpush1.bf16.msra.mxu0 0
    %2669 = vmatprep.subr.bf16.mxu0 0
    %2670 = vmatpush1.bf16.msra.mxu0 0
    %2671 = vmatprep.mubr.bf16.mxu0 0
    %2672 = vmatmul.mubr.bf16.gmra.mrb[0].mxu0 %v2637
    %v2673 = vpop.f32.mrb[0].mxu0
    %v2674 = vadd.f32 %v2589, %v2673
    %v2675 = vpop.f32.mrb[0].mxu0
    %v2676 = vadd.f32 %v2593, %v2675
    %v2677 = vpop.f32.mrb[0].mxu0
    %v2678 = vpop.f32.mrb[0].mxu0
    %2679 = vdwg.mxu0
    %v2680 = vld [vmem:[#allocation2 + $0x1c] sm:$0x3]
    %v2681 = vadd.f32 %v2674, %v2680
    %v2682 = vmul.f32 %v2681, 0.5
    %v2683 = vtanh.pop %v2682
    %v2684 = vmul.f32 %v2683, 0.5
    %v2685 = vadd.f32 %v2684, 0.5
    %v2686 = vtanh.pop %v2681
    %2688 = vrot.lane.b32.xlu0 %v2574, 32
    %v2689 = vpop.permute.xlu0 %2688
    %v2691 = vmul.f32 %v2685, %v2689
    %2693 = vrot.lane.b32.xlu0 %v2686, 32
    %v2694 = vpop.permute.xlu0 %2693
    %v2696 = vmul.f32 %v2685, %v2694
    %2698 = vrot.lane.b32.xlu0 %v2696, 32
    %v2699 = vpop.permute.xlu0 %2698
    %v2701 = vadd.f32 %v2691, %v2699
    %v2702 = vtanh.pop %v2701
    %2704 = vrot.lane.b32.xlu0 %v2702, 32
    %v2705 = vpop.permute.xlu0 %2704
    %v2707 = vmul.f32 %v2685, %v2705
    %v2708 = vmul.f32 %v2676, 0.5
    %v2709 = vtanh.pop %v2708
    %v2710 = vmul.f32 %v2709, 0.5
    %v2711 = vadd.f32 %v2710, 0.5
    %v2712 = vtanh.pop %v2676
    %v2713 = vmul.f32 %v2711, %v2574
    %2715 = vrot.lane.b32.xlu0 %v2712, 32
    %v2716 = vpop.permute.xlu0 %2715
    %v2718 = vmul.f32 %v2711, %v2716
    %2720 = vrot.lane.b32.xlu0 %v2718, 32
    %v2721 = vpop.permute.xlu0 %2720
    %v2723 = vadd.f32 %v2713, %v2721
    %v2724 = vtanh.pop %v2723
    %2726 = vrot.lane.b32.xlu0 %v2724, 32
    %v2727 = vpop.permute.xlu0 %2726
    %v2729 = vmul.f32 %v2711, %v2727
    %2731 = vrot.lane.b32.xlu0 %v2729, 64
    %v2732 = vpop.permute.xlu0 %2731
    %2734 = vst.msk [vmem:[#allocation3 + $0x1a] sm:$0x3] %vm484, %v2732
    %2736 = vrot.lane.b32.xlu0 %v2707, 64
    %v2737 = vpop.permute.xlu0 %2736
    %2739 = vrot.lane.b32.xlu0 %v2729, 96
    %v2740 = vpop.permute.xlu0 %2739
    %v2742 = vsel %vm378, %v2737, %v2740
    %2744 = vrot.lane.b32.xlu0 %v2701, 96
    %v2745 = vpop.permute.xlu0 %2744
    %v2747 = vsel %vm378, %v2745, %v2723
    %v2748 = vpack.c.bf16 %v2742, %v2742
    %v2749 = vld [vmem:[#allocation4] sm:$0xff]
    %v2750 = vld [vmem:[#allocation4 + $0x8] sm:$0xff]
    %v2751 = vld [vmem:[#allocation4 + $0x10] sm:$0xff]
    %v2752 = vld [vmem:[#allocation4 + $0x18] sm:$0xff]
    %v2753 = vld [vmem:[#allocation4 + $0x20] sm:$0xff]
    %v2754 = vld [vmem:[#allocation4 + $0x28] sm:$0xff]
    %v2755 = vld [vmem:[#allocation4 + $0x30] sm:$0xff]
    %v2756 = vld [vmem:[#allocation4 + $0x38] sm:$0xff]
    %v2757 = vld [vmem:[%s3] sm:$0x3]
    %v2759 = vlaneseq
    %v2760 = vshrl.u32 %v2759, 7
    %v2761 = vsub.s32 0, %v2760
    %v2762 = vrot.slane %v2757, %v2761
    %v2763 = vlaneseq
    %v2764 = vshrl.u32 %v2763, 7
    %v2765 = vsub.s32 1, %v2764
    %v2766 = vrot.slane %v2757, %v2765
    %v2777 = vunpack.c.l.b16 %v2749
    %v2778 = vunpack.c.h.b16 %v2749
    %v2779 = vunpack.c.l.b16 %v2750
    %v2780 = vunpack.c.h.b16 %v2750
    %v2781 = vunpack.c.l.b16 %v2751
    %v2782 = vunpack.c.h.b16 %v2751
    %v2783 = vunpack.c.l.b16 %v2752
    %v2784 = vunpack.c.h.b16 %v2752
    %v2785 = vunpack.c.l.b16 %v2753
    %v2786 = vunpack.c.h.b16 %v2753
    %v2787 = vunpack.c.l.b16 %v2754
    %v2788 = vunpack.c.h.b16 %v2754
    %v2789 = vunpack.c.l.b16 %v2755
    %v2790 = vunpack.c.h.b16 %v2755
    %v2791 = vunpack.c.l.b16 %v2756
    %v2792 = vunpack.c.h.b16 %v2756
    %v2793 = vpack.c.b16 %v2779, %v2777
    %v2794 = vpack.c.b16 %v2780, %v2778
    %v2795 = vpack.c.b16 %v2783, %v2781
    %v2796 = vpack.c.b16 %v2784, %v2782
    %v2797 = vpack.c.b16 %v2787, %v2785
    %v2798 = vpack.c.b16 %v2788, %v2786
    %v2799 = vpack.c.b16 %v2791, %v2789
    %v2800 = vpack.c.b16 %v2792, %v2790
    %v2810 = vsel %vm306, %v2748, 0
    %2812 = vmatprep.subr.bf16.mxu0 %v2794
    %2813 = vmatpush1.bf16.msra.mxu0 %v2793
    %2814 = vmatprep.subr.bf16.mxu0 %v2796
    %2815 = vmatpush1.bf16.msra.mxu0 %v2795
    %2816 = vmatprep.subr.bf16.mxu0 %v2798
    %2817 = vmatpush1.bf16.msra.mxu0 %v2797
    %2818 = vmatprep.subr.bf16.mxu0 %v2800
    %2819 = vmatpush1.bf16.msra.mxu0 %v2799
    %2820 = vmatprep.subr.bf16.mxu0 0
    %2821 = vmatpush1.bf16.msra.mxu0 0
    %2822 = vmatprep.subr.bf16.mxu0 0
    %2823 = vmatpush1.bf16.msra.mxu0 0
    %2824 = vmatprep.subr.bf16.mxu0 0
    %2825 = vmatpush1.bf16.msra.mxu0 0
    %2826 = vmatprep.subr.bf16.mxu0 0
    %2827 = vmatpush1.bf16.msra.mxu0 0
    %2828 = vmatprep.subr.bf16.mxu0 0
    %2829 = vmatpush1.bf16.msra.mxu0 0
    %2830 = vmatprep.subr.bf16.mxu0 0
    %2831 = vmatpush1.bf16.msra.mxu0 0
    %2832 = vmatprep.subr.bf16.mxu0 0
    %2833 = vmatpush1.bf16.msra.mxu0 0
    %2834 = vmatprep.subr.bf16.mxu0 0
    %2835 = vmatpush1.bf16.msra.mxu0 0
    %2836 = vmatprep.subr.bf16.mxu0 0
    %2837 = vmatpush1.bf16.msra.mxu0 0
    %2838 = vmatprep.subr.bf16.mxu0 0
    %2839 = vmatpush1.bf16.msra.mxu0 0
    %2840 = vmatprep.subr.bf16.mxu0 0
    %2841 = vmatpush1.bf16.msra.mxu0 0
    %2842 = vmatprep.subr.bf16.mxu0 0
    %2843 = vmatpush1.bf16.msra.mxu0 0
    %2844 = vmatprep.mubr.bf16.mxu0 0
    %2845 = vmatmul.mubr.bf16.gmra.mrb[0].mxu0 %v2810
    %v2846 = vpop.f32.mrb[0].mxu0
    %v2847 = vadd.f32 %v2762, %v2846
    %v2848 = vpop.f32.mrb[0].mxu0
    %v2849 = vadd.f32 %v2766, %v2848
    %v2850 = vpop.f32.mrb[0].mxu0
    %v2851 = vpop.f32.mrb[0].mxu0
    %2852 = vdwg.mxu0
    %v2853 = vld [vmem:[#allocation2 + $0x1e] sm:$0x3]
    %v2854 = vadd.f32 %v2847, %v2853
    %v2855 = vmul.f32 %v2854, 0.5
    %v2856 = vtanh.pop %v2855
    %v2857 = vmul.f32 %v2856, 0.5
    %v2858 = vadd.f32 %v2857, 0.5
    %v2859 = vtanh.pop %v2854
    %2861 = vrot.lane.b32.xlu0 %v2747, 32
    %v2862 = vpop.permute.xlu0 %2861
    %v2864 = vmul.f32 %v2858, %v2862
    %2866 = vrot.lane.b32.xlu0 %v2859, 32
    %v2867 = vpop.permute.xlu0 %2866
    %v2869 = vmul.f32 %v2858, %v2867
    %2871 = vrot.lane.b32.xlu0 %v2869, 32
    %v2872 = vpop.permute.xlu0 %2871
    %v2874 = vadd.f32 %v2864, %v2872
    %v2875 = vtanh.pop %v2874
    %2877 = vrot.lane.b32.xlu0 %v2875, 32
    %v2878 = vpop.permute.xlu0 %2877
    %v2880 = vmul.f32 %v2858, %v2878
    %v2881 = vmul.f32 %v2849, 0.5
    %v2882 = vtanh.pop %v2881
    %v2883 = vmul.f32 %v2882, 0.5
    %v2884 = vadd.f32 %v2883, 0.5
    %v2885 = vtanh.pop %v2849
    %v2886 = vmul.f32 %v2884, %v2747
    %2888 = vrot.lane.b32.xlu0 %v2885, 32
    %v2889 = vpop.permute.xlu0 %2888
    %v2891 = vmul.f32 %v2884, %v2889
    %2893 = vrot.lane.b32.xlu0 %v2891, 32
    %v2894 = vpop.permute.xlu0 %2893
    %v2896 = vadd.f32 %v2886, %v2894
    %v2897 = vtanh.pop %v2896
    %2899 = vrot.lane.b32.xlu0 %v2897, 32
    %v2900 = vpop.permute.xlu0 %2899
    %v2902 = vmul.f32 %v2884, %v2900
    %2904 = vrot.lane.b32.xlu0 %v2902, 64
    %v2905 = vpop.permute.xlu0 %2904
    %2907 = vst.msk [vmem:[#allocation3 + $0x1c] sm:$0x3] %vm484, %v2905
    %2909 = vrot.lane.b32.xlu0 %v2880, 64
    %v2910 = vpop.permute.xlu0 %2909
    %2912 = vrot.lane.b32.xlu0 %v2902, 96
    %v2913 = vpop.permute.xlu0 %2912
    %v2915 = vsel %vm378, %v2910, %v2913
    %2917 = vrot.lane.b32.xlu0 %v2874, 96
    %v2918 = vpop.permute.xlu0 %2917
    %v2920 = vsel %vm378, %v2918, %v2896
    %v2921 = vpack.c.bf16 %v2915, %v2915
    %v2922 = vld [vmem:[#allocation4] sm:$0xff]
    %v2923 = vld [vmem:[#allocation4 + $0x8] sm:$0xff]
    %v2924 = vld [vmem:[#allocation4 + $0x10] sm:$0xff]
    %v2925 = vld [vmem:[#allocation4 + $0x18] sm:$0xff]
    %v2926 = vld [vmem:[#allocation4 + $0x20] sm:$0xff]
    %v2927 = vld [vmem:[#allocation4 + $0x28] sm:$0xff]
    %v2928 = vld [vmem:[#allocation4 + $0x30] sm:$0xff]
    %v2929 = vld [vmem:[#allocation4 + $0x38] sm:$0xff]
    %v2930 = vld [vmem:[%s3] sm:$0x3]
    %v2932 = vlaneseq
    %v2933 = vshrl.u32 %v2932, 7
    %v2934 = vsub.s32 1, %v2933
    %v2935 = vrot.slane %v2930, %v2934
    %v2945 = vunpack.c.l.b16 %v2922
    %v2946 = vunpack.c.h.b16 %v2922
    %v2947 = vunpack.c.l.b16 %v2923
    %v2948 = vunpack.c.h.b16 %v2923
    %v2949 = vunpack.c.l.b16 %v2924
    %v2950 = vunpack.c.h.b16 %v2924
    %v2951 = vunpack.c.l.b16 %v2925
    %v2952 = vunpack.c.h.b16 %v2925
    %v2953 = vunpack.c.l.b16 %v2926
    %v2954 = vunpack.c.h.b16 %v2926
    %v2955 = vunpack.c.l.b16 %v2927
    %v2956 = vunpack.c.h.b16 %v2927
    %v2957 = vunpack.c.l.b16 %v2928
    %v2958 = vunpack.c.h.b16 %v2928
    %v2959 = vunpack.c.l.b16 %v2929
    %v2960 = vunpack.c.h.b16 %v2929
    %v2961 = vpack.c.b16 %v2947, %v2945
    %v2962 = vpack.c.b16 %v2948, %v2946
    %v2963 = vpack.c.b16 %v2951, %v2949
    %v2964 = vpack.c.b16 %v2952, %v2950
    %v2965 = vpack.c.b16 %v2955, %v2953
    %v2966 = vpack.c.b16 %v2956, %v2954
    %v2967 = vpack.c.b16 %v2959, %v2957
    %v2968 = vpack.c.b16 %v2960, %v2958
    %v2978 = vsel %vm306, %v2921, 0
    %2980 = vmatprep.subr.bf16.mxu0 %v2962
    %2981 = vmatpush1.bf16.msra.mxu0 %v2961
    %2982 = vmatprep.subr.bf16.mxu0 %v2964
    %2983 = vmatpush1.bf16.msra.mxu0 %v2963
    %2984 = vmatprep.subr.bf16.mxu0 %v2966
    %2985 = vmatpush1.bf16.msra.mxu0 %v2965
    %2986 = vmatprep.subr.bf16.mxu0 %v2968
    %2987 = vmatpush1.bf16.msra.mxu0 %v2967
    %2988 = vmatprep.subr.bf16.mxu0 0
    %2989 = vmatpush1.bf16.msra.mxu0 0
    %2990 = vmatprep.subr.bf16.mxu0 0
    %2991 = vmatpush1.bf16.msra.mxu0 0
    %2992 = vmatprep.subr.bf16.mxu0 0
    %2993 = vmatpush1.bf16.msra.mxu0 0
    %2994 = vmatprep.subr.bf16.mxu0 0
    %2995 = vmatpush1.bf16.msra.mxu0 0
    %2996 = vmatprep.subr.bf16.mxu0 0
    %2997 = vmatpush1.bf16.msra.mxu0 0
    %2998 = vmatprep.subr.bf16.mxu0 0
    %2999 = vmatpush1.bf16.msra.mxu0 0
    %3000 = vmatprep.subr.bf16.mxu0 0
    %3001 = vmatpush1.bf16.msra.mxu0 0
    %3002 = vmatprep.subr.bf16.mxu0 0
    %3003 = vmatpush1.bf16.msra.mxu0 0
    %3004 = vmatprep.subr.bf16.mxu0 0
    %3005 = vmatpush1.bf16.msra.mxu0 0
    %3006 = vmatprep.subr.bf16.mxu0 0
    %3007 = vmatpush1.bf16.msra.mxu0 0
    %3008 = vmatprep.subr.bf16.mxu0 0
    %3009 = vmatpush1.bf16.msra.mxu0 0
    %3010 = vmatprep.subr.bf16.mxu0 0
    %3011 = vmatpush1.bf16.msra.mxu0 0
    %3012 = vmatprep.mubr.bf16.mxu0 0
    %3013 = vmatmul.mubr.bf16.gmra.mrb[0].mxu0 %v2978
    %v3014 = vpop.f32.mrb[0].mxu0
    %v3015 = vpop.f32.mrb[0].mxu0
    %v3016 = vadd.f32 %v2935, %v3015
    %v3017 = vpop.f32.mrb[0].mxu0
    %v3018 = vpop.f32.mrb[0].mxu0
    %3019 = vdwg.mxu0
    %v3020 = vmul.f32 %v3016, 0.5
    %v3021 = vtanh.pop %v3020
    %v3022 = vmul.f32 %v3021, 0.5
    %v3023 = vadd.f32 %v3022, 0.5
    %v3024 = vtanh.pop %v3016
    %v3025 = vmul.f32 %v3023, %v2920
    %3027 = vrot.lane.b32.xlu0 %v3024, 32
    %v3028 = vpop.permute.xlu0 %3027
    %v3030 = vmul.f32 %v3023, %v3028
    %3032 = vrot.lane.b32.xlu0 %v3030, 32
    %v3033 = vpop.permute.xlu0 %3032
    %v3035 = vadd.f32 %v3025, %v3033
    %v3036 = vtanh.pop %v3035
    %3038 = vrot.lane.b32.xlu0 %v3036, 32
    %v3039 = vpop.permute.xlu0 %3038
    %v3041 = vmul.f32 %v3023, %v3039
    %3043 = vrot.lane.b32.xlu0 %v3041, 64
    %v3044 = vpop.permute.xlu0 %3043
    %3046 = vst.msk [vmem:[#allocation3 + $0x1e] sm:$0x3] %vm484, %v3044
    %3047 = vrot.lane.b32.xlu0 %v3041, 96
    %v3048 = vpop.permute.xlu0 %3047
    %v3050 = vsel %vm378, %v2915, %v3048
    %v3051 = vsel %vm378, %v2920, %v3035
    %3052 = vst.msk [vmem:[#allocation8] sm:$0x3] %vm484, %v3050
    %3053 = vst.msk [vmem:[#allocation10] sm:$0x3] %vm484, %v3051
    %3055 = vrot.lane.b32.xlu0 %v3050, 96
    %v3056 = vpop.permute.xlu0 %3055
    %s3058 = scalar_lea.vmem [#allocation8], 2
    %3059 = vst.msk [vmem:[%s3058] sm:$0x3] %vm484, %v3056
    %3061 = vrot.lane.b32.xlu0 %v3051, 96
    %v3062 = vpop.permute.xlu0 %3061
    %s3064 = scalar_lea.vmem [#allocation10], 2
    %3065 = vst.msk [vmem:[%s3064] sm:$0x3] %vm484, %v3062
    %v3066 = vld [vmem:[#allocation3] sm:$0x3]
    %3067 = vst.msk [vmem:[#allocation7] sm:$0x3] %vm484, %v3066
    %v3068 = vld [vmem:[#allocation3 + $0x2] sm:$0x3]
    %v3071 = vunpack.c.l.s4 1983009808
    %v3072 = vunpack.c.0.s8 %v3071
    %v3073 = vlaneseq
    %v3074 = vshrl.u32 %v3073, 7
    %v3075 = vsub.s32 %v3072, %v3074
    %v3076 = vrot.slane %v3068, %v3075
    %3077 = vrot.lane.b32.xlu0 %v3076, 32
    %v3078 = vpop.permute.xlu0 %3077
    %vm3080 = vcmask 517376
    %3081 = vst.msk [vmem:[#allocation7] sm:$0x3] %vm3080, %v3078
    %v3082 = vld [vmem:[#allocation3 + $0x4] sm:$0x3]
    %v3085 = vunpack.c.l.s4 1983009808
    %v3086 = vunpack.c.0.s8 %v3085
    %v3087 = vlaneseq
    %v3088 = vshrl.u32 %v3087, 7
    %v3089 = vsub.s32 %v3086, %v3088
    %v3090 = vrot.slane %v3082, %v3089
    %3091 = vrot.lane.b32.xlu0 %v3090, 64
    %v3092 = vpop.permute.xlu0 %3091
    %vm3094 = vcmask 779776
    %3095 = vst.msk [vmem:[#allocation7] sm:$0x3] %vm3094, %v3092
    %v3096 = vld [vmem:[#allocation3 + $0x6] sm:$0x3]
    %v3099 = vunpack.c.l.s4 1983009808
    %v3100 = vunpack.c.0.s8 %v3099
    %v3101 = vlaneseq
    %v3102 = vshrl.u32 %v3101, 7
    %v3103 = vsub.s32 %v3100, %v3102
    %v3104 = vrot.slane %v3096, %v3103
    %3105 = vrot.lane.b32.xlu0 %v3104, 96
    %v3106 = vpop.permute.xlu0 %3105
    %vm3108 = vcmask 1042176
    %3109 = vst.msk [vmem:[#allocation7] sm:$0x3] %vm3108, %v3106
    %v3110 = vld [vmem:[#allocation3 + $0x8] sm:$0x3]
    %3111 = vst.msk [vmem:[#allocation7 + $0x2] sm:$0x3] %vm484, %v3110
    %v3112 = vld [vmem:[#allocation3 + $0xa] sm:$0x3]
    %v3115 = vunpack.c.l.s4 1983009808
    %v3116 = vunpack.c.0.s8 %v3115
    %v3117 = vlaneseq
    %v3118 = vshrl.u32 %v3117, 7
    %v3119 = vsub.s32 %v3116, %v3118
    %v3120 = vrot.slane %v3112, %v3119
    %3121 = vrot.lane.b32.xlu0 %v3120, 32
    %v3122 = vpop.permute.xlu0 %3121
    %3124 = vst.msk [vmem:[#allocation7 + $0x2] sm:$0x3] %vm3080, %v3122
    %v3125 = vld [vmem:[#allocation3 + $0xc] sm:$0x3]
    %v3128 = vunpack.c.l.s4 1983009808
    %v3129 = vunpack.c.0.s8 %v3128
    %v3130 = vlaneseq
    %v3131 = vshrl.u32 %v3130, 7
    %v3132 = vsub.s32 %v3129, %v3131
    %v3133 = vrot.slane %v3125, %v3132
    %3134 = vrot.lane.b32.xlu0 %v3133, 64
    %v3135 = vpop.permute.xlu0 %3134
    %3137 = vst.msk [vmem:[#allocation7 + $0x2] sm:$0x3] %vm3094, %v3135
    %v3138 = vld [vmem:[#allocation3 + $0xe] sm:$0x3]
    %v3141 = vunpack.c.l.s4 1983009808
    %v3142 = vunpack.c.0.s8 %v3141
    %v3143 = vlaneseq
    %v3144 = vshrl.u32 %v3143, 7
    %v3145 = vsub.s32 %v3142, %v3144
    %v3146 = vrot.slane %v3138, %v3145
    %3147 = vrot.lane.b32.xlu0 %v3146, 96
    %v3148 = vpop.permute.xlu0 %3147
    %3150 = vst.msk [vmem:[#allocation7 + $0x2] sm:$0x3] %vm3108, %v3148
    %v3151 = vld [vmem:[#allocation3 + $0x10] sm:$0x3]
    %3152 = vst.msk [vmem:[#allocation7 + $0x4] sm:$0x3] %vm484, %v3151
    %v3153 = vld [vmem:[#allocation3 + $0x12] sm:$0x3]
    %v3156 = vunpack.c.l.s4 1983009808
    %v3157 = vunpack.c.0.s8 %v3156
    %v3158 = vlaneseq
    %v3159 = vshrl.u32 %v3158, 7
    %v3160 = vsub.s32 %v3157, %v3159
    %v3161 = vrot.slane %v3153, %v3160
    %3162 = vrot.lane.b32.xlu0 %v3161, 32
    %v3163 = vpop.permute.xlu0 %3162
    %3165 = vst.msk [vmem:[#allocation7 + $0x4] sm:$0x3] %vm3080, %v3163
    %v3166 = vld [vmem:[#allocation3 + $0x14] sm:$0x3]
    %v3169 = vunpack.c.l.s4 1983009808
    %v3170 = vunpack.c.0.s8 %v3169
    %v3171 = vlaneseq
    %v3172 = vshrl.u32 %v3171, 7
    %v3173 = vsub.s32 %v3170, %v3172
    %v3174 = vrot.slane %v3166, %v3173
    %3175 = vrot.lane.b32.xlu0 %v3174, 64
    %v3176 = vpop.permute.xlu0 %3175
    %3178 = vst.msk [vmem:[#allocation7 + $0x4] sm:$0x3] %vm3094, %v3176
    %v3179 = vld [vmem:[#allocation3 + $0x16] sm:$0x3]
    %v3182 = vunpack.c.l.s4 1983009808
    %v3183 = vunpack.c.0.s8 %v3182
    %v3184 = vlaneseq
    %v3185 = vshrl.u32 %v3184, 7
    %v3186 = vsub.s32 %v3183, %v3185
    %v3187 = vrot.slane %v3179, %v3186
    %3188 = vrot.lane.b32.xlu0 %v3187, 96
    %v3189 = vpop.permute.xlu0 %3188
    %3191 = vst.msk [vmem:[#allocation7 + $0x4] sm:$0x3] %vm3108, %v3189
    %v3192 = vld [vmem:[#allocation3 + $0x18] sm:$0x3]
    %3193 = vst.msk [vmem:[#allocation7 + $0x6] sm:$0x3] %vm484, %v3192
    %v3194 = vld [vmem:[#allocation3 + $0x1a] sm:$0x3]
    %v3197 = vunpack.c.l.s4 1983009808
    %v3198 = vunpack.c.0.s8 %v3197
    %v3199 = vlaneseq
    %v3200 = vshrl.u32 %v3199, 7
    %v3201 = vsub.s32 %v3198, %v3200
    %v3202 = vrot.slane %v3194, %v3201
    %3203 = vrot.lane.b32.xlu0 %v3202, 32
    %v3204 = vpop.permute.xlu0 %3203
    %3206 = vst.msk [vmem:[#allocation7 + $0x6] sm:$0x3] %vm3080, %v3204
    %v3207 = vld [vmem:[#allocation3 + $0x1c] sm:$0x3]
    %v3210 = vunpack.c.l.s4 1983009808
    %v3211 = vunpack.c.0.s8 %v3210
    %v3212 = vlaneseq
    %v3213 = vshrl.u32 %v3212, 7
    %v3214 = vsub.s32 %v3211, %v3213
    %v3215 = vrot.slane %v3207, %v3214
    %3216 = vrot.lane.b32.xlu0 %v3215, 64
    %v3217 = vpop.permute.xlu0 %3216
    %3219 = vst.msk [vmem:[#allocation7 + $0x6] sm:$0x3] %vm3094, %v3217
    %v3220 = vld [vmem:[#allocation3 + $0x1e] sm:$0x3]
    %v3223 = vunpack.c.l.s4 1983009808
    %v3224 = vunpack.c.0.s8 %v3223
    %v3225 = vlaneseq
    %v3226 = vshrl.u32 %v3225, 7
    %v3227 = vsub.s32 %v3224, %v3226
    %v3228 = vrot.slane %v3220, %v3227
    %3229 = vrot.lane.b32.xlu0 %v3228, 96
    %v3230 = vpop.permute.xlu0 %3229
    %3232 = vst.msk [vmem:[#allocation7 + $0x6] sm:$0x3] %vm3108, %v3230
    // Predicated region
    $region22: #{tpu_custom_call.1} parent=1 // pred_check
      _
    $region23: #{tpu_custom_call.1} parent=1 // pred_check_branch
      %3234 = sbr.rel (0) target = $region25
    $region24: #{tpu_custom_call.1} parent=1 // pred_region
      %s3236 = ssub.s32 128, 128
      %3237 = vsyncadd [#allocation6], %s3236
      %s3239 = sshll.u32 [#allocation7], 4
      %s3240 = int_to_ptr.vmem [resolvable:$true] %s3239
      %3242 = dma.vmem_to_hbm [thread:$0]  %s3240, 128, %s4, [#allocation6]
    $region25: #{tpu_custom_call.1} parent=1 // pred_fallthru
      _
    // Predicated region
    $region26: #{tpu_custom_call.1} parent=1 // pred_check
      _
    $region27: #{tpu_custom_call.1} parent=1 // pred_check_branch
      %3244 = sbr.rel (0) target = $region29
    $region28: #{tpu_custom_call.1} parent=1 // pred_region
      %s3246 = ssub.s32 64, 64
      %3247 = vsyncadd [#allocation9], %s3246
      %s3248 = sshll.u32 [#allocation8], 4
      %s3249 = int_to_ptr.vmem [resolvable:$true] %s3248
      %3254 = dma.vmem_to_hbm [thread:$0]  %s3249, 64, %s5, [#allocation9], 32, 32, 2
    $region29: #{tpu_custom_call.1} parent=1 // pred_fallthru
      _
    // Predicated region
    $region30: #{tpu_custom_call.1} parent=1 // pred_check
      _
    $region31: #{tpu_custom_call.1} parent=1 // pred_check_branch
      %3256 = sbr.rel (0) target = $region33
    $region32: #{tpu_custom_call.1} parent=1 // pred_region
      %s3258 = ssub.s32 64, 64
      %3259 = vsyncadd [#allocation9], %s3258
      %s3260 = sshll.u32 [#allocation10], 4
      %s3261 = int_to_ptr.vmem [resolvable:$true] %s3260
      %3266 = dma.vmem_to_hbm [thread:$0]  %s3261, 64, %s6, [#allocation9], 32, 32, 2
    $region33: #{tpu_custom_call.1} parent=1 // pred_fallthru
      _
    // Predicated region
    $region34: #{tpu_custom_call.1} parent=1 // pred_check
      _
    $region35: #{tpu_custom_call.1} parent=1 // pred_check_branch
      %3268 = sbr.rel (0) target = $region37
    $region36: #{tpu_custom_call.1} parent=1 // pred_region
      %3269 = dma.done [#allocation6], 128
    $region37: #{tpu_custom_call.1} parent=1 // pred_fallthru
      _
    // Predicated region
    $region38: #{tpu_custom_call.1} parent=1 // pred_check
      _
    $region39: #{tpu_custom_call.1} parent=1 // pred_check_branch
      %3271 = sbr.rel (0) target = $region41
    $region40: #{tpu_custom_call.1} parent=1 // pred_region
      %3272 = dma.done [#allocation9], 64
    $region41: #{tpu_custom_call.1} parent=1 // pred_fallthru
      _
    // Predicated region
    $region42: #{tpu_custom_call.1} parent=1 // pred_check
      _
    $region43: #{tpu_custom_call.1} parent=1 // pred_check_branch
      %3274 = sbr.rel (0) target = $region45
    $region44: #{tpu_custom_call.1} parent=1 // pred_region
      %3275 = dma.done [#allocation9], 64
    $region45: #{tpu_custom_call.1} parent=1 // pred_fallthru
      _
    %3276 = vsyncpa [#allocation5], 1
    %3277 = vsyncpa [#allocation6], 1
    %3278 = vsyncpa [#allocation9], 1

</llo_original>
